<compile_context>
chip_gen: v7x
topology: tpu7x:2x2x1
jax: 0.10.0
libtpu: 0.0.40
codegen_flags: <defaults>
</compile_context>

<pallas_src>
import numpy as np
import jax
import jax.numpy as jnp
from jax.experimental import pallas as pl
from jax.experimental.pallas import tpu as pltpu

NET = [192, 100, 40, 10, 1]   # layer sizes from BPNet.__init__ (O and H identical)
LANES = 128


# ----------------------------------------------------------------------------
# Stage 1: per-species MLP (per-atom z4) + collapsed derivative-chain vector g.
# ----------------------------------------------------------------------------
def _mlp_g_kernel(x_ref, w1_ref, w2_ref, w3_ref,
                  w1t_ref, w2t_ref, w3t_ref, w4r_ref,
                  b1_ref, b2_ref, b3_ref, b4_ref,
                  g_ref, z4_ref):
    x = x_ref[...]                       # (TM, D)
    w4r = w4r_ref[...]                   # (1, H3)

    z1 = jnp.dot(x, w1_ref[...], preferred_element_type=jnp.float32) + b1_ref[...]
    t1 = jnp.tanh(z1)
    z2 = jnp.dot(t1, w2_ref[...], preferred_element_type=jnp.float32) + b2_ref[...]
    t2 = jnp.tanh(z2)
    z3 = jnp.dot(t2, w3_ref[...], preferred_element_type=jnp.float32) + b3_ref[...]
    t3 = jnp.tanh(z3)

    # Per-atom energy term; the per-batch sum happens in the wrapper.
    z4_ref[...] = jnp.sum(t3 * w4r, axis=-1, keepdims=True) + b4_ref[...]   # (TM, 1)

    # sech²(z) = 1 − tanh²(z): exact, no exp/divide, no overflow.
    s1 = 1.0 - t1 * t1
    s2 = 1.0 - t2 * t2
    s3 = 1.0 - t3 * t3

    # Collapse the derivative chain into one vector per atom:
    #   g_j = W1 diag(s1_j) W2 diag(s2_j) W3 diag(s3_j) w4
    v3 = s3 * w4r                                                             # (TM, H3)
    v2 = s2 * jnp.dot(v3, w3t_ref[...], preferred_element_type=jnp.float32)   # (TM, H2)
    v1 = s1 * jnp.dot(v2, w2t_ref[...], preferred_element_type=jnp.float32)   # (TM, H1)
    g_ref[...] = jnp.dot(v1, w1t_ref[...], preferred_element_type=jnp.float32)  # (TM, D)


def _species_mlp(x, w1, w2, w3, w4, b1, b2, b3, b4):
    """x: (B, N, D) -> (g: (B, 1, N*D) lane-dense, eng: (B,))."""
    B, N, D = x.shape
    M = B * N
    xf = x.reshape(M, D)                       # free contiguous reshape
    H1, H2, H3 = w1.shape[1], w2.shape[1], w3.shape[1]

    w1t, w2t, w3t = w1.T, w2.T, w3.T
    w4r = w4.reshape(1, H3)
    b1r = b1.reshape(1, H1)
    b2r = b2.reshape(1, H2)
    b3r = b3.reshape(1, H3)
    b4r = b4.reshape(1, 1)

    TM = M if M <= 256 else 256
    grid = (pl.cdiv(M, TM),)

    def wspec(shape):
        n = len(shape)
        return pl.BlockSpec(shape, lambda i, n=n: (0,) * n)

    g, z4 = pl.pallas_call(
        _mlp_g_kernel,
        grid=grid,
        in_specs=[
            pl.BlockSpec((TM, D), lambda i: (i, 0)),
            wspec((D, H1)), wspec((H1, H2)), wspec((H2, H3)),
            wspec((H1, D)), wspec((H2, H1)), wspec((H3, H2)),
            wspec((1, H3)),
            wspec((1, H1)), wspec((1, H2)), wspec((1, H3)), wspec((1, 1)),
        ],
        out_specs=(
            pl.BlockSpec((TM, D), lambda i: (i, 0)),
            pl.BlockSpec((TM, 1), lambda i: (i, 0)),
        ),
        out_shape=(
            jax.ShapeDtypeStruct((M, D), jnp.float32),
            jax.ShapeDtypeStruct((M, 1), jnp.float32),
        ),
        compiler_params=pltpu.CompilerParams(
            dimension_semantics=("parallel",)),
    )(xf, w1, w2, w3, w1t, w2t, w3t, w4r, b1r, b2r, b3r, b4r)

    eng = jnp.sum(z4.reshape(B, N), axis=1)      # per-batch energy (tiny)
    g_flat = g.reshape(B, 1, N * D)              # lane-dense g for stage 2
    return g_flat, eng


# ----------------------------------------------------------------------------
# Stage 2: merged force contraction
#   y[b, r] = sum_k dxA[b,r,k]*gA[b,0,k] + sum_k dxB[b,r,k]*gB[b,0,k]
# ----------------------------------------------------------------------------
def _pick_row_tile(R, B, max_tr=256):
    TR = R if R <= max_tr else max_tr
    # v7x megacore: make sure the parallel grid axes give >= 2 iterations so
    # both TensorCores get work on the dominant contraction.
    if B * (-(-R // TR)) < 2 and R > 8:
        TR = ((((R + 1) // 2) + 7) // 8) * 8
    return TR


def _pick_k_tile(K, TR, max_tile_bytes=8 * 1024 * 1024, max_tk_abs=8192):
    """Lane-group (128) granular K tile; tail handled by in-kernel masking."""
    budget_tk = max(LANES, (max_tile_bytes // (max(TR, 8) * 4)) // LANES * LANES)
    max_tk = min(max_tk_abs, budget_tk)
    if K % LANES == 0:
        cand = K
    else:
        cand = max(LANES, (K // LANES) * LANES)
    return min(cand, max_tk)


def _make_pair_contract_kernel(K_A, K_B, nk_A, TK_A, TK_B):
    G_A = TK_A // LANES
    G_B = TK_B // LANES

    def kernel(dxA_ref, dxB_ref, gA_ref, gB_ref, y_ref, acc_ref):
        k = pl.program_id(2)

        @pl.when(k == 0)
        def _init():
            acc_ref[...] = jnp.zeros_like(acc_ref)

        def accumulate(dx_ref, g_ref, k_local, K_total, TK, G):
            # Lane-dense VPU multiply-accumulate into the (TR, 128) scratch.
            need_mask = (K_total % TK) != 0          # static (trace-time)
            base = k_local * TK
            if need_mask:
                col = jax.lax.broadcasted_iota(jnp.int32, (1, LANES), 1)
            for gi in range(G):                      # static unrolled loop
                off = gi * LANES
                prod = dx_ref[:, pl.ds(off, LANES)] * g_ref[:, pl.ds(off, LANES)]
                if need_mask:
                    prod = jnp.where(base + off + col < K_total, prod, 0.0)
                acc_ref[...] += prod

        @pl.when(k < nk_A)
        def _phase_a():
            accumulate(dxA_ref, gA_ref, k, K_A, TK_A, G_A)

        @pl.when(k >= nk_A)
        def _phase_b():
            accumulate(dxB_ref, gB_ref, k - nk_A, K_B, TK_B, G_B)

        @pl.when(k == pl.num_programs(2) - 1)
        def _finalize():
            # Single cross-lane reduce + write, once per (b, r) block.
            y_ref[...] = jnp.sum(acc_ref[...], axis=-1, keepdims=True)

    return kernel


def _contract_pair(dxA, dxB, gA, gB):
    """dxA:(B,R,K_A), dxB:(B,R,K_B), gA:(B,1,K_A), gB:(B,1,K_B) -> (B,R)."""
    B, R, K_A = dxA.shape
    K_B = dxB.shape[2]
    TR = _pick_row_tile(R, B)
    TK_A = _pick_k_tile(K_A, TR)
    TK_B = _pick_k_tile(K_B, TR)
    nk_A = -(-K_A // TK_A)
    nk_B = -(-K_B // TK_B)
    grid = (B, -(-R // TR), nk_A + nk_B)

    kernel = _make_pair_contract_kernel(K_A, K_B, nk_A, TK_A, TK_B)

    # Clamping index_maps: during phase A, dxB/gB hold block 0 (no re-DMA,
    # block index unchanged); during phase B, dxA/gA hold their last block.
    # Every dx block is therefore fetched from HBM exactly once per row block.
    y = pl.pallas_call(
        kernel,
        grid=grid,
        in_specs=[
            pl.BlockSpec((None, TR, TK_A),
                         lambda b, r, k, n=nk_A: (b, r, jnp.minimum(k, n - 1))),
            pl.BlockSpec((None, TR, TK_B),
                         lambda b, r, k, n=nk_A: (b, r, jnp.maximum(k - n, 0))),
            pl.BlockSpec((None, 1, TK_A),
                         lambda b, r, k, n=nk_A: (b, 0, jnp.minimum(k, n - 1))),
            pl.BlockSpec((None, 1, TK_B),
                         lambda b, r, k, n=nk_A: (b, 0, jnp.maximum(k - n, 0))),
        ],
        out_specs=pl.BlockSpec((None, TR, 1), lambda b, r, k: (b, r, 0)),
        out_shape=jax.ShapeDtypeStruct((B, R, 1), jnp.float32),
        scratch_shapes=[pltpu.VMEM((TR, LANES), jnp.float32)],
        compiler_params=pltpu.CompilerParams(
            dimension_semantics=("parallel", "parallel", "arbitrary"),
            vmem_limit_bytes=48 * 1024 * 1024),
    )(dxA, dxB, gA, gB)
    return y[:, :, 0]


# ----------------------------------------------------------------------------
# Forward wrapper (matches BPNet.forward semantics).
# ----------------------------------------------------------------------------
def bpnet_forward(params, x_O, x_H, dx_OO, dx_HO, dx_OH, dx_HH):
    B, NO, D = x_O.shape
    NH = x_H.shape[1]
    P = params

    gO, eng_O = _species_mlp(x_O, P['Ow1'], P['Ow2'], P['Ow3'], P['Ow4'],
                             P['Ob1'], P['Ob2'], P['Ob3'], P['Ob4'])
    gH, eng_H = _species_mlp(x_H, P['Hw1'], P['Hw2'], P['Hw3'], P['Hw4'],
                             P['Hb1'], P['Hb2'], P['Hb3'], P['Hb4'])

    # (B, NA, 3, NB, D) -> (B, NA*3, NB*D) is a free contiguous reshape:
    # no extra HBM pass over the dominant dx data.
    y_O = _contract_pair(dx_OO.reshape(B, NO * 3, NO * D),
                         dx_OH.reshape(B, NO * 3, NH * D),
                         gO, gH).reshape(B, NO, 3)
    y_H = _contract_pair(dx_HO.reshape(B, NH * 3, NO * D),
                         dx_HH.reshape(B, NH * 3, NH * D),
                         gO, gH).reshape(B, NH, 3)
    return y_O, y_H, eng_O + eng_H


# ----------------------------------------------------------------------------
# Pure-JAX mirror of the PyTorch forward (correctness check).
# ----------------------------------------------------------------------------
def bpnet_reference(params, x_O, x_H, dx_OO, dx_HO, dx_OH, dx_HH):
    P = params
    hi = jax.lax.Precision.HIGHEST
    mm = lambda a, b: jnp.matmul(a, b, precision=hi)
    xO = x_O[:, None, None, :, :]
    xH = x_H[:, None, None, :, :]
    z1O = mm(xO, P['Ow1']) + P['Ob1']
    z2O = mm(jnp.tanh(z1O), P['Ow2']) + P['Ob2']
    z3O = mm(jnp.tanh(z2O), P['Ow3']) + P['Ob3']
    z4O = mm(jnp.tanh(z3O), P['Ow4']) + P['Ob4']
    z1H = mm(xH, P['Hw1']) + P['Hb1']
    z2H = mm(jnp.tanh(z1H), P['Hw2']) + P['Hb2']
    z3H = mm(jnp.tanh(z2H), P['Hw3']) + P['Hb3']
    z4H = mm(jnp.tanh(z3H), P['Hw4']) + P['Hb4']

    def chain(dx, w1, w2, w3, w4, z1, z2, z3):
        a1 = mm(dx, w1) / jnp.cosh(z1) ** 2
        a2 = mm(a1, w2) / jnp.cosh(z2) ** 2
        a3 = mm(a2, w3) / jnp.cosh(z3) ** 2
        return mm(a3, w4)

    yOO = chain(dx_OO, P['Ow1'], P['Ow2'], P['Ow3'], P['Ow4'], z1O, z2O, z3O)
    yHO = chain(dx_HO, P['Ow1'], P['Ow2'], P['Ow3'], P['Ow4'], z1O, z2O, z3O)
    yHH = chain(dx_HH, P['Hw1'], P['Hw2'], P['Hw3'], P['Hw4'], z1H, z2H, z3H)
    yOH = chain(dx_OH, P['Hw1'], P['Hw2'], P['Hw3'], P['Hw4'], z1H, z2H, z3H)
    y_O = yOO.sum((-1, -2)) + yOH.sum((-1, -2))
    y_H = yHH.sum((-1, -2)) + yHO.sum((-1, -2))
    eng = z4O.sum((1, 2, 3, 4)) + z4H.sum((1, 2, 3, 4))
    return y_O, y_H, eng


def make_params():
    # Deterministic init, exactly as BPNet.__init__(save_path=None): ones / 100.
    D, H1, H2, H3, H4 = NET
    p = {}
    for s in ('O', 'H'):
        p[f'{s}w1'] = jnp.ones((D, H1), jnp.float32) / 100.0
        p[f'{s}w2'] = jnp.ones((H1, H2), jnp.float32) / 100.0
        p[f'{s}w3'] = jnp.ones((H2, H3), jnp.float32) / 100.0
        p[f'{s}w4'] = jnp.ones((H3, H4), jnp.float32) / 100.0
        p[f'{s}b1'] = jnp.ones((H1,), jnp.float32) / 100.0
        p[f'{s}b2'] = jnp.ones((H2,), jnp.float32) / 100.0
        p[f'{s}b3'] = jnp.ones((H3,), jnp.float32) / 100.0
        p[f'{s}b4'] = jnp.ones((H4,), jnp.float32) / 100.0
    return p


if __name__ == "__main__":
    # NH=5 is deliberately odd so K_H = 5*192 = 960 exercises the masked-tail
    # (non-128-divisible) K path; K_O = 4*192 = 768 exercises the exact path.
    B, NO, NH = 2, 4, 5
    D = NET[0]

    params = make_params()

    ks = jax.random.split(jax.random.PRNGKey(0), 6)
    x_O = jax.random.normal(ks[0], (B, NO, D), jnp.float32)
    x_H = jax.random.normal(ks[1], (B, NH, D), jnp.float32)
    dx_OO = jax.random.normal(ks[2], (B, NO, 3, NO, D), jnp.float32)
    dx_HO = jax.random.normal(ks[3], (B, NH, 3, NO, D), jnp.float32)
    dx_OH = jax.random.normal(ks[4], (B, NO, 3, NH, D), jnp.float32)
    dx_HH = jax.random.normal(ks[5], (B, NH, 3, NH, D), jnp.float32)

    fwd = jax.jit(bpnet_forward)
    y_O, y_H, eng = fwd(params, x_O, x_H, dx_OO, dx_HO, dx_OH, dx_HH)
    jax.block_until_ready((y_O, y_H, eng))

    r_O, r_H, r_e = bpnet_reference(params, x_O, x_H, dx_OO, dx_HO, dx_OH, dx_HH)
    assert y_O.shape == (B, NO, 3) and y_H.shape == (B, NH, 3) and eng.shape == (B,)
    assert np.allclose(np.asarray(y_O), np.asarray(r_O), rtol=5e-2, atol=1e-3)
    assert np.allclose(np.asarray(y_H), np.asarray(r_H), rtol=5e-2, atol=1e-3)
    assert np.allclose(np.asarray(eng), np.asarray(r_e), rtol=5e-2, atol=1e-3)

    print("KERNEL_OK")
</pallas_src>

<mosaic_0001>
module attributes {stable_mosaic.version = 11 : i64} {
  func.func @_mlp_g_kernel(%arg0: i32, %arg1: memref<8x192xf32, #tpu.memory_space<vmem>>, %arg2: memref<192x100xf32, #tpu.memory_space<vmem>>, %arg3: memref<100x40xf32, #tpu.memory_space<vmem>>, %arg4: memref<40x10xf32, #tpu.memory_space<vmem>>, %arg5: memref<100x192xf32, #tpu.memory_space<vmem>>, %arg6: memref<40x100xf32, #tpu.memory_space<vmem>>, %arg7: memref<10x40xf32, #tpu.memory_space<vmem>>, %arg8: memref<1x10xf32, #tpu.memory_space<vmem>>, %arg9: memref<1x100xf32, #tpu.memory_space<vmem>>, %arg10: memref<1x40xf32, #tpu.memory_space<vmem>>, %arg11: memref<1x10xf32, #tpu.memory_space<vmem>>, %arg12: memref<1x1xf32, #tpu.memory_space<vmem>>, %arg13: memref<8x192xf32, #tpu.memory_space<vmem>>, %arg14: memref<8x1xf32, #tpu.memory_space<vmem>>) attributes {dimension_semantics = [#tpu.dimension_semantics<parallel>], iteration_bounds = array<i64: 1>, scalar_prefetch = 0 : i64, scratch_operands = 0 : i64, tpu.core_type = #tpu.core_type<tc>, window_params = [{transform_indices = @transform_0, window_bounds = array<i64: 8, 192>}, {pipeline_mode = #tpu.pipeline_mode<synchronous>, transform_indices = @transform_1, window_bounds = array<i64: 192, 100>}, {pipeline_mode = #tpu.pipeline_mode<synchronous>, transform_indices = @transform_2, window_bounds = array<i64: 100, 40>}, {pipeline_mode = #tpu.pipeline_mode<synchronous>, transform_indices = @transform_3, window_bounds = array<i64: 40, 10>}, {pipeline_mode = #tpu.pipeline_mode<synchronous>, transform_indices = @transform_4, window_bounds = array<i64: 100, 192>}, {pipeline_mode = #tpu.pipeline_mode<synchronous>, transform_indices = @transform_5, window_bounds = array<i64: 40, 100>}, {pipeline_mode = #tpu.pipeline_mode<synchronous>, transform_indices = @transform_6, window_bounds = array<i64: 10, 40>}, {pipeline_mode = #tpu.pipeline_mode<synchronous>, transform_indices = @transform_7, window_bounds = array<i64: 1, 10>}, {pipeline_mode = #tpu.pipeline_mode<synchronous>, transform_indices = @transform_8, window_bounds = array<i64: 1, 100>}, {pipeline_mode = #tpu.pipeline_mode<synchronous>, transform_indices = @transform_9, window_bounds = array<i64: 1, 40>}, {pipeline_mode = #tpu.pipeline_mode<synchronous>, transform_indices = @transform_10, window_bounds = array<i64: 1, 10>}, {pipeline_mode = #tpu.pipeline_mode<synchronous>, transform_indices = @transform_11, window_bounds = array<i64: 1, 1>}, {transform_indices = @transform_12, window_bounds = array<i64: 8, 192>}, {transform_indices = @transform_13, window_bounds = array<i64: 8, 1>}]} {
    %c0 = arith.constant 0 : index
    %c0_0 = arith.constant 0 : index
    %0 = vector.load %arg1[%c0, %c0_0] : memref<8x192xf32, #tpu.memory_space<vmem>>, vector<8x192xf32>
    %c0_1 = arith.constant 0 : index
    %c0_2 = arith.constant 0 : index
    %1 = vector.load %arg8[%c0_1, %c0_2] : memref<1x10xf32, #tpu.memory_space<vmem>>, vector<1x10xf32>
    %c0_3 = arith.constant 0 : index
    %c0_4 = arith.constant 0 : index
    %2 = vector.load %arg2[%c0_3, %c0_4] : memref<192x100xf32, #tpu.memory_space<vmem>>, vector<192x100xf32>
    %cst = arith.constant dense<0.000000e+00> : vector<8x100xf32>
    %3 = tpu.matmul %0, %2, %cst {dimension_numbers = #tpu.dot_dimension_numbers<[1], [0], [0], [1], [0, 0, 1, 1], [], []>} : vector<8x192xf32>, vector<192x100xf32>, vector<8x100xf32> -> vector<8x100xf32>
    %c0_5 = arith.constant 0 : index
    %c0_6 = arith.constant 0 : index
    %4 = vector.load %arg9[%c0_5, %c0_6] : memref<1x100xf32, #tpu.memory_space<vmem>>, vector<1x100xf32>
    %5 = vector.broadcast %4 : vector<1x100xf32> to vector<8x100xf32>
    %6 = arith.addf %3, %5 : vector<8x100xf32>
    %7 = math.tanh %6 : vector<8x100xf32>
    %c0_7 = arith.constant 0 : index
    %c0_8 = arith.constant 0 : index
    %8 = vector.load %arg3[%c0_7, %c0_8] : memref<100x40xf32, #tpu.memory_space<vmem>>, vector<100x40xf32>
    %cst_9 = arith.constant dense<0.000000e+00> : vector<8x40xf32>
    %9 = tpu.matmul %7, %8, %cst_9 {dimension_numbers = #tpu.dot_dimension_numbers<[1], [0], [0], [1], [0, 0, 1, 1], [], []>} : vector<8x100xf32>, vector<100x40xf32>, vector<8x40xf32> -> vector<8x40xf32>
    %c0_10 = arith.constant 0 : index
    %c0_11 = arith.constant 0 : index
    %10 = vector.load %arg10[%c0_10, %c0_11] : memref<1x40xf32, #tpu.memory_space<vmem>>, vector<1x40xf32>
    %11 = vector.broadcast %10 : vector<1x40xf32> to vector<8x40xf32>
    %12 = arith.addf %9, %11 : vector<8x40xf32>
    %13 = math.tanh %12 : vector<8x40xf32>
    %c0_12 = arith.constant 0 : index
    %c0_13 = arith.constant 0 : index
    %14 = vector.load %arg4[%c0_12, %c0_13] : memref<40x10xf32, #tpu.memory_space<vmem>>, vector<40x10xf32>
    %cst_14 = arith.constant dense<0.000000e+00> : vector<8x10xf32>
    %15 = tpu.matmul %13, %14, %cst_14 {dimension_numbers = #tpu.dot_dimension_numbers<[1], [0], [0], [1], [0, 0, 1, 1], [], []>} : vector<8x40xf32>, vector<40x10xf32>, vector<8x10xf32> -> vector<8x10xf32>
    %c0_15 = arith.constant 0 : index
    %c0_16 = arith.constant 0 : index
    %16 = vector.load %arg11[%c0_15, %c0_16] : memref<1x10xf32, #tpu.memory_space<vmem>>, vector<1x10xf32>
    %17 = vector.broadcast %16 : vector<1x10xf32> to vector<8x10xf32>
    %18 = arith.addf %15, %17 : vector<8x10xf32>
    %19 = math.tanh %18 : vector<8x10xf32>
    %20 = vector.broadcast %1 : vector<1x10xf32> to vector<8x10xf32>
    %21 = arith.mulf %19, %20 : vector<8x10xf32>
    %cst_17 = arith.constant dense<0.000000e+00> : vector<8xf32>
    %22 = vector.multi_reduction <add>, %21, %cst_17 [1] : vector<8x10xf32> to vector<8xf32>
    %23 = vector.shape_cast %22 : vector<8xf32> to vector<8x1xf32>
    %c0_18 = arith.constant 0 : index
    %c0_19 = arith.constant 0 : index
    %24 = vector.load %arg12[%c0_18, %c0_19] : memref<1x1xf32, #tpu.memory_space<vmem>>, vector<1x1xf32>
    %25 = vector.broadcast %24 : vector<1x1xf32> to vector<8x1xf32>
    %26 = arith.addf %23, %25 : vector<8x1xf32>
    %c0_20 = arith.constant 0 : index
    %c0_21 = arith.constant 0 : index
    %27 = vector.load %arg14[%c0_20, %c0_21] : memref<8x1xf32, #tpu.memory_space<vmem>>, vector<8x1xf32>
    tpu.vector_store %arg14[%c0_20, %c0_21], %26 {strides = array<i32>} : memref<8x1xf32, #tpu.memory_space<vmem>>, vector<8x1xf32>,
    %28 = arith.mulf %7, %7 : vector<8x100xf32>
    %cst_22 = arith.constant 1.000000e+00 : f32
    %29 = vector.broadcast %cst_22 : f32 to vector<8x100xf32>
    %30 = arith.subf %29, %28 : vector<8x100xf32>
    %31 = arith.mulf %13, %13 : vector<8x40xf32>
    %cst_23 = arith.constant 1.000000e+00 : f32
    %32 = vector.broadcast %cst_23 : f32 to vector<8x40xf32>
    %33 = arith.subf %32, %31 : vector<8x40xf32>
    %34 = arith.mulf %19, %19 : vector<8x10xf32>
    %cst_24 = arith.constant 1.000000e+00 : f32
    %35 = vector.broadcast %cst_24 : f32 to vector<8x10xf32>
    %36 = arith.subf %35, %34 : vector<8x10xf32>
    %37 = vector.broadcast %1 : vector<1x10xf32> to vector<8x10xf32>
    %38 = arith.mulf %36, %37 : vector<8x10xf32>
    %c0_25 = arith.constant 0 : index
    %c0_26 = arith.constant 0 : index
    %39 = vector.load %arg7[%c0_25, %c0_26] : memref<10x40xf32, #tpu.memory_space<vmem>>, vector<10x40xf32>
    %cst_27 = arith.constant dense<0.000000e+00> : vector<8x40xf32>
    %40 = tpu.matmul %38, %39, %cst_27 {dimension_numbers = #tpu.dot_dimension_numbers<[1], [0], [0], [1], [0, 0, 1, 1], [], []>} : vector<8x10xf32>, vector<10x40xf32>, vector<8x40xf32> -> vector<8x40xf32>
    %41 = arith.mulf %33, %40 : vector<8x40xf32>
    %c0_28 = arith.constant 0 : index
    %c0_29 = arith.constant 0 : index
    %42 = vector.load %arg6[%c0_28, %c0_29] : memref<40x100xf32, #tpu.memory_space<vmem>>, vector<40x100xf32>
    %cst_30 = arith.constant dense<0.000000e+00> : vector<8x100xf32>
    %43 = tpu.matmul %41, %42, %cst_30 {dimension_numbers = #tpu.dot_dimension_numbers<[1], [0], [0], [1], [0, 0, 1, 1], [], []>} : vector<8x40xf32>, vector<40x100xf32>, vector<8x100xf32> -> vector<8x100xf32>
    %44 = arith.mulf %30, %43 : vector<8x100xf32>
    %c0_31 = arith.constant 0 : index
    %c0_32 = arith.constant 0 : index
    %45 = vector.load %arg5[%c0_31, %c0_32] : memref<100x192xf32, #tpu.memory_space<vmem>>, vector<100x192xf32>
    %cst_33 = arith.constant dense<0.000000e+00> : vector<8x192xf32>
    %46 = tpu.matmul %44, %45, %cst_33 {dimension_numbers = #tpu.dot_dimension_numbers<[1], [0], [0], [1], [0, 0, 1, 1], [], []>} : vector<8x100xf32>, vector<100x192xf32>, vector<8x192xf32> -> vector<8x192xf32>
    %c0_34 = arith.constant 0 : index
    %c0_35 = arith.constant 0 : index
    %47 = vector.load %arg13[%c0_34, %c0_35] : memref<8x192xf32, #tpu.memory_space<vmem>>, vector<8x192xf32>
    tpu.vector_store %arg13[%c0_34, %c0_35], %46 {strides = array<i32>} : memref<8x192xf32, #tpu.memory_space<vmem>>, vector<8x192xf32>,
    return
  }
  func.func @transform_0(%arg0: i32) -> (i32, i32) {
    %c0_i32 = arith.constant 0 : i32
    %c0_i32_0 = arith.constant 0 : i32
    return %arg0, %c0_i32 : i32, i32
  }
  func.func @transform_1(%arg0: i32) -> (i32, i32) {
    %c0_i32 = arith.constant 0 : i32
    %c0_i32_0 = arith.constant 0 : i32
    %c0_i32_1 = arith.constant 0 : i32
    return %c0_i32, %c0_i32_0 : i32, i32
  }
  func.func @transform_2(%arg0: i32) -> (i32, i32) {
    %c0_i32 = arith.constant 0 : i32
    %c0_i32_0 = arith.constant 0 : i32
    %c0_i32_1 = arith.constant 0 : i32
    return %c0_i32, %c0_i32_0 : i32, i32
  }
  func.func @transform_3(%arg0: i32) -> (i32, i32) {
    %c0_i32 = arith.constant 0 : i32
    %c0_i32_0 = arith.constant 0 : i32
    %c0_i32_1 = arith.constant 0 : i32
    return %c0_i32, %c0_i32_0 : i32, i32
  }
  func.func @transform_4(%arg0: i32) -> (i32, i32) {
    %c0_i32 = arith.constant 0 : i32
    %c0_i32_0 = arith.constant 0 : i32
    %c0_i32_1 = arith.constant 0 : i32
    return %c0_i32, %c0_i32_0 : i32, i32
  }
  func.func @transform_5(%arg0: i32) -> (i32, i32) {
    %c0_i32 = arith.constant 0 : i32
    %c0_i32_0 = arith.constant 0 : i32
    %c0_i32_1 = arith.constant 0 : i32
    return %c0_i32, %c0_i32_0 : i32, i32
  }
  func.func @transform_6(%arg0: i32) -> (i32, i32) {
    %c0_i32 = arith.constant 0 : i32
    %c0_i32_0 = arith.constant 0 : i32
    %c0_i32_1 = arith.constant 0 : i32
    return %c0_i32, %c0_i32_0 : i32, i32
  }
  func.func @transform_7(%arg0: i32) -> (i32, i32) {
    %c0_i32 = arith.constant 0 : i32
    %c0_i32_0 = arith.constant 0 : i32
    %c0_i32_1 = arith.constant 0 : i32
    return %c0_i32, %c0_i32_0 : i32, i32
  }
  func.func @transform_8(%arg0: i32) -> (i32, i32) {
    %c0_i32 = arith.constant 0 : i32
    %c0_i32_0 = arith.constant 0 : i32
    %c0_i32_1 = arith.constant 0 : i32
    return %c0_i32, %c0_i32_0 : i32, i32
  }
  func.func @transform_9(%arg0: i32) -> (i32, i32) {
    %c0_i32 = arith.constant 0 : i32
    %c0_i32_0 = arith.constant 0 : i32
    %c0_i32_1 = arith.constant 0 : i32
    return %c0_i32, %c0_i32_0 : i32, i32
  }
  func.func @transform_10(%arg0: i32) -> (i32, i32) {
    %c0_i32 = arith.constant 0 : i32
    %c0_i32_0 = arith.constant 0 : i32
    %c0_i32_1 = arith.constant 0 : i32
    return %c0_i32, %c0_i32_0 : i32, i32
  }
  func.func @transform_11(%arg0: i32) -> (i32, i32) {
    %c0_i32 = arith.constant 0 : i32
    %c0_i32_0 = arith.constant 0 : i32
    %c0_i32_1 = arith.constant 0 : i32
    return %c0_i32, %c0_i32_0 : i32, i32
  }
  func.func @transform_12(%arg0: i32) -> (i32, i32) {
    %c0_i32 = arith.constant 0 : i32
    %c0_i32_0 = arith.constant 0 : i32
    return %arg0, %c0_i32 : i32, i32
  }
  func.func @transform_13(%arg0: i32) -> (i32, i32) {
    %c0_i32 = arith.constant 0 : i32
    %c0_i32_0 = arith.constant 0 : i32
    return %arg0, %c0_i32 : i32, i32
  }
}

module attributes {stable_mosaic.version = 11 : i64} {
  func.func @_mlp_g_kernel(%arg0: i32, %arg1: memref<10x192xf32, #tpu.memory_space<vmem>>, %arg2: memref<192x100xf32, #tpu.memory_space<vmem>>, %arg3: memref<100x40xf32, #tpu.memory_space<vmem>>, %arg4: memref<40x10xf32, #tpu.memory_space<vmem>>, %arg5: memref<100x192xf32, #tpu.memory_space<vmem>>, %arg6: memref<40x100xf32, #tpu.memory_space<vmem>>, %arg7: memref<10x40xf32, #tpu.memory_space<vmem>>, %arg8: memref<1x10xf32, #tpu.memory_space<vmem>>, %arg9: memref<1x100xf32, #tpu.memory_space<vmem>>, %arg10: memref<1x40xf32, #tpu.memory_space<vmem>>, %arg11: memref<1x10xf32, #tpu.memory_space<vmem>>, %arg12: memref<1x1xf32, #tpu.memory_space<vmem>>, %arg13: memref<10x192xf32, #tpu.memory_space<vmem>>, %arg14: memref<10x1xf32, #tpu.memory_space<vmem>>) attributes {dimension_semantics = [#tpu.dimension_semantics<parallel>], iteration_bounds = array<i64: 1>, scalar_prefetch = 0 : i64, scratch_operands = 0 : i64, tpu.core_type = #tpu.core_type<tc>, window_params = [{transform_indices = @transform_0, window_bounds = array<i64: 10, 192>}, {pipeline_mode = #tpu.pipeline_mode<synchronous>, transform_indices = @transform_1, window_bounds = array<i64: 192, 100>}, {pipeline_mode = #tpu.pipeline_mode<synchronous>, transform_indices = @transform_2, window_bounds = array<i64: 100, 40>}, {pipeline_mode = #tpu.pipeline_mode<synchronous>, transform_indices = @transform_3, window_bounds = array<i64: 40, 10>}, {pipeline_mode = #tpu.pipeline_mode<synchronous>, transform_indices = @transform_4, window_bounds = array<i64: 100, 192>}, {pipeline_mode = #tpu.pipeline_mode<synchronous>, transform_indices = @transform_5, window_bounds = array<i64: 40, 100>}, {pipeline_mode = #tpu.pipeline_mode<synchronous>, transform_indices = @transform_6, window_bounds = array<i64: 10, 40>}, {pipeline_mode = #tpu.pipeline_mode<synchronous>, transform_indices = @transform_7, window_bounds = array<i64: 1, 10>}, {pipeline_mode = #tpu.pipeline_mode<synchronous>, transform_indices = @transform_8, window_bounds = array<i64: 1, 100>}, {pipeline_mode = #tpu.pipeline_mode<synchronous>, transform_indices = @transform_9, window_bounds = array<i64: 1, 40>}, {pipeline_mode = #tpu.pipeline_mode<synchronous>, transform_indices = @transform_10, window_bounds = array<i64: 1, 10>}, {pipeline_mode = #tpu.pipeline_mode<synchronous>, transform_indices = @transform_11, window_bounds = array<i64: 1, 1>}, {transform_indices = @transform_12, window_bounds = array<i64: 10, 192>}, {transform_indices = @transform_13, window_bounds = array<i64: 10, 1>}]} {
    %c0 = arith.constant 0 : index
    %c0_0 = arith.constant 0 : index
    %0 = vector.load %arg1[%c0, %c0_0] : memref<10x192xf32, #tpu.memory_space<vmem>>, vector<10x192xf32>
    %c0_1 = arith.constant 0 : index
    %c0_2 = arith.constant 0 : index
    %1 = vector.load %arg8[%c0_1, %c0_2] : memref<1x10xf32, #tpu.memory_space<vmem>>, vector<1x10xf32>
    %c0_3 = arith.constant 0 : index
    %c0_4 = arith.constant 0 : index
    %2 = vector.load %arg2[%c0_3, %c0_4] : memref<192x100xf32, #tpu.memory_space<vmem>>, vector<192x100xf32>
    %cst = arith.constant dense<0.000000e+00> : vector<10x100xf32>
    %3 = tpu.matmul %0, %2, %cst {dimension_numbers = #tpu.dot_dimension_numbers<[1], [0], [0], [1], [0, 0, 1, 1], [], []>} : vector<10x192xf32>, vector<192x100xf32>, vector<10x100xf32> -> vector<10x100xf32>
    %c0_5 = arith.constant 0 : index
    %c0_6 = arith.constant 0 : index
    %4 = vector.load %arg9[%c0_5, %c0_6] : memref<1x100xf32, #tpu.memory_space<vmem>>, vector<1x100xf32>
    %5 = vector.broadcast %4 : vector<1x100xf32> to vector<10x100xf32>
    %6 = arith.addf %3, %5 : vector<10x100xf32>
    %7 = math.tanh %6 : vector<10x100xf32>
    %c0_7 = arith.constant 0 : index
    %c0_8 = arith.constant 0 : index
    %8 = vector.load %arg3[%c0_7, %c0_8] : memref<100x40xf32, #tpu.memory_space<vmem>>, vector<100x40xf32>
    %cst_9 = arith.constant dense<0.000000e+00> : vector<10x40xf32>
    %9 = tpu.matmul %7, %8, %cst_9 {dimension_numbers = #tpu.dot_dimension_numbers<[1], [0], [0], [1], [0, 0, 1, 1], [], []>} : vector<10x100xf32>, vector<100x40xf32>, vector<10x40xf32> -> vector<10x40xf32>
    %c0_10 = arith.constant 0 : index
    %c0_11 = arith.constant 0 : index
    %10 = vector.load %arg10[%c0_10, %c0_11] : memref<1x40xf32, #tpu.memory_space<vmem>>, vector<1x40xf32>
    %11 = vector.broadcast %10 : vector<1x40xf32> to vector<10x40xf32>
    %12 = arith.addf %9, %11 : vector<10x40xf32>
    %13 = math.tanh %12 : vector<10x40xf32>
    %c0_12 = arith.constant 0 : index
    %c0_13 = arith.constant 0 : index
    %14 = vector.load %arg4[%c0_12, %c0_13] : memref<40x10xf32, #tpu.memory_space<vmem>>, vector<40x10xf32>
    %cst_14 = arith.constant dense<0.000000e+00> : vector<10x10xf32>
    %15 = tpu.matmul %13, %14, %cst_14 {dimension_numbers = #tpu.dot_dimension_numbers<[1], [0], [0], [1], [0, 0, 1, 1], [], []>} : vector<10x40xf32>, vector<40x10xf32>, vector<10x10xf32> -> vector<10x10xf32>
    %c0_15 = arith.constant 0 : index
    %c0_16 = arith.constant 0 : index
    %16 = vector.load %arg11[%c0_15, %c0_16] : memref<1x10xf32, #tpu.memory_space<vmem>>, vector<1x10xf32>
    %17 = vector.broadcast %16 : vector<1x10xf32> to vector<10x10xf32>
    %18 = arith.addf %15, %17 : vector<10x10xf32>
    %19 = math.tanh %18 : vector<10x10xf32>
    %20 = vector.broadcast %1 : vector<1x10xf32> to vector<10x10xf32>
    %21 = arith.mulf %19, %20 : vector<10x10xf32>
    %cst_17 = arith.constant dense<0.000000e+00> : vector<10xf32>
    %22 = vector.multi_reduction <add>, %21, %cst_17 [1] : vector<10x10xf32> to vector<10xf32>
    %23 = vector.shape_cast %22 : vector<10xf32> to vector<10x1xf32>
    %c0_18 = arith.constant 0 : index
    %c0_19 = arith.constant 0 : index
    %24 = vector.load %arg12[%c0_18, %c0_19] : memref<1x1xf32, #tpu.memory_space<vmem>>, vector<1x1xf32>
    %25 = vector.broadcast %24 : vector<1x1xf32> to vector<10x1xf32>
    %26 = arith.addf %23, %25 : vector<10x1xf32>
    %c0_20 = arith.constant 0 : index
    %c0_21 = arith.constant 0 : index
    %27 = vector.load %arg14[%c0_20, %c0_21] : memref<10x1xf32, #tpu.memory_space<vmem>>, vector<10x1xf32>
    tpu.vector_store %arg14[%c0_20, %c0_21], %26 {strides = array<i32>} : memref<10x1xf32, #tpu.memory_space<vmem>>, vector<10x1xf32>,
    %28 = arith.mulf %7, %7 : vector<10x100xf32>
    %cst_22 = arith.constant 1.000000e+00 : f32
    %29 = vector.broadcast %cst_22 : f32 to vector<10x100xf32>
    %30 = arith.subf %29, %28 : vector<10x100xf32>
    %31 = arith.mulf %13, %13 : vector<10x40xf32>
    %cst_23 = arith.constant 1.000000e+00 : f32
    %32 = vector.broadcast %cst_23 : f32 to vector<10x40xf32>
    %33 = arith.subf %32, %31 : vector<10x40xf32>
    %34 = arith.mulf %19, %19 : vector<10x10xf32>
    %cst_24 = arith.constant 1.000000e+00 : f32
    %35 = vector.broadcast %cst_24 : f32 to vector<10x10xf32>
    %36 = arith.subf %35, %34 : vector<10x10xf32>
    %37 = vector.broadcast %1 : vector<1x10xf32> to vector<10x10xf32>
    %38 = arith.mulf %36, %37 : vector<10x10xf32>
    %c0_25 = arith.constant 0 : index
    %c0_26 = arith.constant 0 : index
    %39 = vector.load %arg7[%c0_25, %c0_26] : memref<10x40xf32, #tpu.memory_space<vmem>>, vector<10x40xf32>
    %cst_27 = arith.constant dense<0.000000e+00> : vector<10x40xf32>
    %40 = tpu.matmul %38, %39, %cst_27 {dimension_numbers = #tpu.dot_dimension_numbers<[1], [0], [0], [1], [0, 0, 1, 1], [], []>} : vector<10x10xf32>, vector<10x40xf32>, vector<10x40xf32> -> vector<10x40xf32>
    %41 = arith.mulf %33, %40 : vector<10x40xf32>
    %c0_28 = arith.constant 0 : index
    %c0_29 = arith.constant 0 : index
    %42 = vector.load %arg6[%c0_28, %c0_29] : memref<40x100xf32, #tpu.memory_space<vmem>>, vector<40x100xf32>
    %cst_30 = arith.constant dense<0.000000e+00> : vector<10x100xf32>
    %43 = tpu.matmul %41, %42, %cst_30 {dimension_numbers = #tpu.dot_dimension_numbers<[1], [0], [0], [1], [0, 0, 1, 1], [], []>} : vector<10x40xf32>, vector<40x100xf32>, vector<10x100xf32> -> vector<10x100xf32>
    %44 = arith.mulf %30, %43 : vector<10x100xf32>
    %c0_31 = arith.constant 0 : index
    %c0_32 = arith.constant 0 : index
    %45 = vector.load %arg5[%c0_31, %c0_32] : memref<100x192xf32, #tpu.memory_space<vmem>>, vector<100x192xf32>
    %cst_33 = arith.constant dense<0.000000e+00> : vector<10x192xf32>
    %46 = tpu.matmul %44, %45, %cst_33 {dimension_numbers = #tpu.dot_dimension_numbers<[1], [0], [0], [1], [0, 0, 1, 1], [], []>} : vector<10x100xf32>, vector<100x192xf32>, vector<10x192xf32> -> vector<10x192xf32>
    %c0_34 = arith.constant 0 : index
    %c0_35 = arith.constant 0 : index
    %47 = vector.load %arg13[%c0_34, %c0_35] : memref<10x192xf32, #tpu.memory_space<vmem>>, vector<10x192xf32>
    tpu.vector_store %arg13[%c0_34, %c0_35], %46 {strides = array<i32>} : memref<10x192xf32, #tpu.memory_space<vmem>>, vector<10x192xf32>,
    return
  }
  func.func @transform_0(%arg0: i32) -> (i32, i32) {
    %c0_i32 = arith.constant 0 : i32
    %c0_i32_0 = arith.constant 0 : i32
    return %arg0, %c0_i32 : i32, i32
  }
  func.func @transform_1(%arg0: i32) -> (i32, i32) {
    %c0_i32 = arith.constant 0 : i32
    %c0_i32_0 = arith.constant 0 : i32
    %c0_i32_1 = arith.constant 0 : i32
    return %c0_i32, %c0_i32_0 : i32, i32
  }
  func.func @transform_2(%arg0: i32) -> (i32, i32) {
    %c0_i32 = arith.constant 0 : i32
    %c0_i32_0 = arith.constant 0 : i32
    %c0_i32_1 = arith.constant 0 : i32
    return %c0_i32, %c0_i32_0 : i32, i32
  }
  func.func @transform_3(%arg0: i32) -> (i32, i32) {
    %c0_i32 = arith.constant 0 : i32
    %c0_i32_0 = arith.constant 0 : i32
    %c0_i32_1 = arith.constant 0 : i32
    return %c0_i32, %c0_i32_0 : i32, i32
  }
  func.func @transform_4(%arg0: i32) -> (i32, i32) {
    %c0_i32 = arith.constant 0 : i32
    %c0_i32_0 = arith.constant 0 : i32
    %c0_i32_1 = arith.constant 0 : i32
    return %c0_i32, %c0_i32_0 : i32, i32
  }
  func.func @transform_5(%arg0: i32) -> (i32, i32) {
    %c0_i32 = arith.constant 0 : i32
    %c0_i32_0 = arith.constant 0 : i32
    %c0_i32_1 = arith.constant 0 : i32
    return %c0_i32, %c0_i32_0 : i32, i32
  }
  func.func @transform_6(%arg0: i32) -> (i32, i32) {
    %c0_i32 = arith.constant 0 : i32
    %c0_i32_0 = arith.constant 0 : i32
    %c0_i32_1 = arith.constant 0 : i32
    return %c0_i32, %c0_i32_0 : i32, i32
  }
  func.func @transform_7(%arg0: i32) -> (i32, i32) {
    %c0_i32 = arith.constant 0 : i32
    %c0_i32_0 = arith.constant 0 : i32
    %c0_i32_1 = arith.constant 0 : i32
    return %c0_i32, %c0_i32_0 : i32, i32
  }
  func.func @transform_8(%arg0: i32) -> (i32, i32) {
    %c0_i32 = arith.constant 0 : i32
    %c0_i32_0 = arith.constant 0 : i32
    %c0_i32_1 = arith.constant 0 : i32
    return %c0_i32, %c0_i32_0 : i32, i32
  }
  func.func @transform_9(%arg0: i32) -> (i32, i32) {
    %c0_i32 = arith.constant 0 : i32
    %c0_i32_0 = arith.constant 0 : i32
    %c0_i32_1 = arith.constant 0 : i32
    return %c0_i32, %c0_i32_0 : i32, i32
  }
  func.func @transform_10(%arg0: i32) -> (i32, i32) {
    %c0_i32 = arith.constant 0 : i32
    %c0_i32_0 = arith.constant 0 : i32
    %c0_i32_1 = arith.constant 0 : i32
    return %c0_i32, %c0_i32_0 : i32, i32
  }
  func.func @transform_11(%arg0: i32) -> (i32, i32) {
    %c0_i32 = arith.constant 0 : i32
    %c0_i32_0 = arith.constant 0 : i32
    %c0_i32_1 = arith.constant 0 : i32
    return %c0_i32, %c0_i32_0 : i32, i32
  }
  func.func @transform_12(%arg0: i32) -> (i32, i32) {
    %c0_i32 = arith.constant 0 : i32
    %c0_i32_0 = arith.constant 0 : i32
    return %arg0, %c0_i32 : i32, i32
  }
  func.func @transform_13(%arg0: i32) -> (i32, i32) {
    %c0_i32 = arith.constant 0 : i32
    %c0_i32_0 = arith.constant 0 : i32
    return %arg0, %c0_i32 : i32, i32
  }
}

module attributes {stable_mosaic.version = 11 : i64} {
  func.func @kernel(%arg0: i32, %arg1: i32, %arg2: i32, %arg3: memref<1x15x768xf32, #tpu.memory_space<vmem>>, %arg4: memref<1x15x896xf32, #tpu.memory_space<vmem>>, %arg5: memref<1x1x768xf32, #tpu.memory_space<vmem>>, %arg6: memref<1x1x896xf32, #tpu.memory_space<vmem>>, %arg7: memref<1x15x1xf32, #tpu.memory_space<vmem>>, %arg8: memref<15x128xf32, #tpu.memory_space<vmem>>) attributes {dimension_semantics = [#tpu.dimension_semantics<parallel>, #tpu.dimension_semantics<parallel>, #tpu.dimension_semantics<arbitrary>], iteration_bounds = array<i64: 2, 1, 3>, scalar_prefetch = 0 : i64, scratch_operands = 1 : i64, tpu.core_type = #tpu.core_type<tc>, window_params = [{transform_indices = @transform_0, window_bounds = array<i64: 1, 15, 768>}, {transform_indices = @transform_1, window_bounds = array<i64: 1, 15, 896>}, {transform_indices = @transform_2, window_bounds = array<i64: 1, 1, 768>}, {transform_indices = @transform_3, window_bounds = array<i64: 1, 1, 896>}, {transform_indices = @transform_4, window_bounds = array<i64: 1, 15, 1>}]} {
    %c0_i32 = arith.constant 0 : i32
    %0 = arith.cmpi eq, %arg2, %c0_i32 : i32
    %1 = arith.extui %0 : i1 to i32
    %c0_i32_0 = arith.constant 0 : i32
    %2 = arith.cmpi ne, %1, %c0_i32_0 : i32
    scf.if %2 {
      %cst = arith.constant 0.000000e+00 : f32
      %12 = vector.broadcast %cst : f32 to vector<15x128xf32>
      %c0 = arith.constant 0 : index
      %c0_5 = arith.constant 0 : index
      %13 = vector.load %arg8[%c0, %c0_5] : memref<15x128xf32, #tpu.memory_space<vmem>>, vector<15x128xf32>
      tpu.vector_store %arg8[%c0, %c0_5], %12 {strides = array<i32>} : memref<15x128xf32, #tpu.memory_space<vmem>>, vector<15x128xf32>,
    } else {
    }
    %c1_i32 = arith.constant 1 : i32
    %3 = arith.cmpi slt, %arg2, %c1_i32 : i32
    %4 = arith.extui %3 : i1 to i32
    %c0_i32_1 = arith.constant 0 : i32
    %5 = arith.cmpi ne, %4, %c0_i32_1 : i32
    scf.if %5 {
      %c0 = arith.constant 0 : index
      %c0_5 = arith.constant 0 : index
      %c0_6 = arith.constant 0 : index
      %12 = vector.load %arg3[%c0, %c0_5, %c0_6] : memref<1x15x768xf32, #tpu.memory_space<vmem>>, vector<1x15x128xf32>
      %13 = vector.shape_cast %12 : vector<1x15x128xf32> to vector<15x128xf32>
      %c0_7 = arith.constant 0 : index
      %c0_8 = arith.constant 0 : index
      %c0_9 = arith.constant 0 : index
      %14 = vector.load %arg5[%c0_7, %c0_8, %c0_9] : memref<1x1x768xf32, #tpu.memory_space<vmem>>, vector<1x1x128xf32>
      %15 = vector.shape_cast %14 : vector<1x1x128xf32> to vector<1x128xf32>
      %16 = vector.broadcast %15 : vector<1x128xf32> to vector<15x128xf32>
      %17 = arith.mulf %13, %16 : vector<15x128xf32>
      %c0_10 = arith.constant 0 : index
      %c0_11 = arith.constant 0 : index
      %18 = vector.load %arg8[%c0_10, %c0_11] : memref<15x128xf32, #tpu.memory_space<vmem>>, vector<15x128xf32>
      %19 = arith.addf %18, %17 : vector<15x128xf32>
      %c0_12 = arith.constant 0 : index
      %c0_13 = arith.constant 0 : index
      %20 = vector.load %arg8[%c0_12, %c0_13] : memref<15x128xf32, #tpu.memory_space<vmem>>, vector<15x128xf32>
      tpu.vector_store %arg8[%c0_12, %c0_13], %19 {strides = array<i32>} : memref<15x128xf32, #tpu.memory_space<vmem>>, vector<15x128xf32>,
      %c0_14 = arith.constant 0 : index
      %c0_15 = arith.constant 0 : index
      %c128 = arith.constant 128 : index
      %21 = vector.load %arg3[%c0_14, %c0_15, %c128] : memref<1x15x768xf32, #tpu.memory_space<vmem>>, vector<1x15x128xf32>
      %22 = vector.shape_cast %21 : vector<1x15x128xf32> to vector<15x128xf32>
      %c0_16 = arith.constant 0 : index
      %c0_17 = arith.constant 0 : index
      %c128_18 = arith.constant 128 : index
      %23 = vector.load %arg5[%c0_16, %c0_17, %c128_18] : memref<1x1x768xf32, #tpu.memory_space<vmem>>, vector<1x1x128xf32>
      %24 = vector.shape_cast %23 : vector<1x1x128xf32> to vector<1x128xf32>
      %25 = vector.broadcast %24 : vector<1x128xf32> to vector<15x128xf32>
      %26 = arith.mulf %22, %25 : vector<15x128xf32>
      %c0_19 = arith.constant 0 : index
      %c0_20 = arith.constant 0 : index
      %27 = vector.load %arg8[%c0_19, %c0_20] : memref<15x128xf32, #tpu.memory_space<vmem>>, vector<15x128xf32>
      %28 = arith.addf %27, %26 : vector<15x128xf32>
      %c0_21 = arith.constant 0 : index
      %c0_22 = arith.constant 0 : index
      %29 = vector.load %arg8[%c0_21, %c0_22] : memref<15x128xf32, #tpu.memory_space<vmem>>, vector<15x128xf32>
      tpu.vector_store %arg8[%c0_21, %c0_22], %28 {strides = array<i32>} : memref<15x128xf32, #tpu.memory_space<vmem>>, vector<15x128xf32>,
      %c0_23 = arith.constant 0 : index
      %c0_24 = arith.constant 0 : index
      %c256 = arith.constant 256 : index
      %30 = vector.load %arg3[%c0_23, %c0_24, %c256] : memref<1x15x768xf32, #tpu.memory_space<vmem>>, vector<1x15x128xf32>
      %31 = vector.shape_cast %30 : vector<1x15x128xf32> to vector<15x128xf32>
      %c0_25 = arith.constant 0 : index
      %c0_26 = arith.constant 0 : index
      %c256_27 = arith.constant 256 : index
      %32 = vector.load %arg5[%c0_25, %c0_26, %c256_27] : memref<1x1x768xf32, #tpu.memory_space<vmem>>, vector<1x1x128xf32>
      %33 = vector.shape_cast %32 : vector<1x1x128xf32> to vector<1x128xf32>
      %34 = vector.broadcast %33 : vector<1x128xf32> to vector<15x128xf32>
      %35 = arith.mulf %31, %34 : vector<15x128xf32>
      %c0_28 = arith.constant 0 : index
      %c0_29 = arith.constant 0 : index
      %36 = vector.load %arg8[%c0_28, %c0_29] : memref<15x128xf32, #tpu.memory_space<vmem>>, vector<15x128xf32>
      %37 = arith.addf %36, %35 : vector<15x128xf32>
      %c0_30 = arith.constant 0 : index
      %c0_31 = arith.constant 0 : index
      %38 = vector.load %arg8[%c0_30, %c0_31] : memref<15x128xf32, #tpu.memory_space<vmem>>, vector<15x128xf32>
      tpu.vector_store %arg8[%c0_30, %c0_31], %37 {strides = array<i32>} : memref<15x128xf32, #tpu.memory_space<vmem>>, vector<15x128xf32>,
      %c0_32 = arith.constant 0 : index
      %c0_33 = arith.constant 0 : index
      %c384 = arith.constant 384 : index
      %39 = vector.load %arg3[%c0_32, %c0_33, %c384] : memref<1x15x768xf32, #tpu.memory_space<vmem>>, vector<1x15x128xf32>
      %40 = vector.shape_cast %39 : vector<1x15x128xf32> to vector<15x128xf32>
      %c0_34 = arith.constant 0 : index
      %c0_35 = arith.constant 0 : index
      %c384_36 = arith.constant 384 : index
      %41 = vector.load %arg5[%c0_34, %c0_35, %c384_36] : memref<1x1x768xf32, #tpu.memory_space<vmem>>, vector<1x1x128xf32>
      %42 = vector.shape_cast %41 : vector<1x1x128xf32> to vector<1x128xf32>
      %43 = vector.broadcast %42 : vector<1x128xf32> to vector<15x128xf32>
      %44 = arith.mulf %40, %43 : vector<15x128xf32>
      %c0_37 = arith.constant 0 : index
      %c0_38 = arith.constant 0 : index
      %45 = vector.load %arg8[%c0_37, %c0_38] : memref<15x128xf32, #tpu.memory_space<vmem>>, vector<15x128xf32>
      %46 = arith.addf %45, %44 : vector<15x128xf32>
      %c0_39 = arith.constant 0 : index
      %c0_40 = arith.constant 0 : index
      %47 = vector.load %arg8[%c0_39, %c0_40] : memref<15x128xf32, #tpu.memory_space<vmem>>, vector<15x128xf32>
      tpu.vector_store %arg8[%c0_39, %c0_40], %46 {strides = array<i32>} : memref<15x128xf32, #tpu.memory_space<vmem>>, vector<15x128xf32>,
      %c0_41 = arith.constant 0 : index
      %c0_42 = arith.constant 0 : index
      %c512 = arith.constant 512 : index
      %48 = vector.load %arg3[%c0_41, %c0_42, %c512] : memref<1x15x768xf32, #tpu.memory_space<vmem>>, vector<1x15x128xf32>
      %49 = vector.shape_cast %48 : vector<1x15x128xf32> to vector<15x128xf32>
      %c0_43 = arith.constant 0 : index
      %c0_44 = arith.constant 0 : index
      %c512_45 = arith.constant 512 : index
      %50 = vector.load %arg5[%c0_43, %c0_44, %c512_45] : memref<1x1x768xf32, #tpu.memory_space<vmem>>, vector<1x1x128xf32>
      %51 = vector.shape_cast %50 : vector<1x1x128xf32> to vector<1x128xf32>
      %52 = vector.broadcast %51 : vector<1x128xf32> to vector<15x128xf32>
      %53 = arith.mulf %49, %52 : vector<15x128xf32>
      %c0_46 = arith.constant 0 : index
      %c0_47 = arith.constant 0 : index
      %54 = vector.load %arg8[%c0_46, %c0_47] : memref<15x128xf32, #tpu.memory_space<vmem>>, vector<15x128xf32>
      %55 = arith.addf %54, %53 : vector<15x128xf32>
      %c0_48 = arith.constant 0 : index
      %c0_49 = arith.constant 0 : index
      %56 = vector.load %arg8[%c0_48, %c0_49] : memref<15x128xf32, #tpu.memory_space<vmem>>, vector<15x128xf32>
      tpu.vector_store %arg8[%c0_48, %c0_49], %55 {strides = array<i32>} : memref<15x128xf32, #tpu.memory_space<vmem>>, vector<15x128xf32>,
      %c0_50 = arith.constant 0 : index
      %c0_51 = arith.constant 0 : index
      %c640 = arith.constant 640 : index
      %57 = vector.load %arg3[%c0_50, %c0_51, %c640] : memref<1x15x768xf32, #tpu.memory_space<vmem>>, vector<1x15x128xf32>
      %58 = vector.shape_cast %57 : vector<1x15x128xf32> to vector<15x128xf32>
      %c0_52 = arith.constant 0 : index
      %c0_53 = arith.constant 0 : index
      %c640_54 = arith.constant 640 : index
      %59 = vector.load %arg5[%c0_52, %c0_53, %c640_54] : memref<1x1x768xf32, #tpu.memory_space<vmem>>, vector<1x1x128xf32>
      %60 = vector.shape_cast %59 : vector<1x1x128xf32> to vector<1x128xf32>
      %61 = vector.broadcast %60 : vector<1x128xf32> to vector<15x128xf32>
      %62 = arith.mulf %58, %61 : vector<15x128xf32>
      %c0_55 = arith.constant 0 : index
      %c0_56 = arith.constant 0 : index
      %63 = vector.load %arg8[%c0_55, %c0_56] : memref<15x128xf32, #tpu.memory_space<vmem>>, vector<15x128xf32>
      %64 = arith.addf %63, %62 : vector<15x128xf32>
      %c0_57 = arith.constant 0 : index
      %c0_58 = arith.constant 0 : index
      %65 = vector.load %arg8[%c0_57, %c0_58] : memref<15x128xf32, #tpu.memory_space<vmem>>, vector<15x128xf32>
      tpu.vector_store %arg8[%c0_57, %c0_58], %64 {strides = array<i32>} : memref<15x128xf32, #tpu.memory_space<vmem>>, vector<15x128xf32>,
    } else {
    }
    %c1_i32_2 = arith.constant 1 : i32
    %6 = arith.cmpi sge, %arg2, %c1_i32_2 : i32
    %7 = arith.extui %6 : i1 to i32
    %c0_i32_3 = arith.constant 0 : i32
    %8 = arith.cmpi ne, %7, %c0_i32_3 : i32
    scf.if %8 {
      %c1_i32_5 = arith.constant 1 : i32
      %12 = arith.subi %arg2, %c1_i32_5 : i32
      %c896_i32 = arith.constant 896 : i32
      %13 = arith.muli %12, %c896_i32 : i32
      %14 = tpu.iota {dimensions = array<i32: 1>} : vector<1x128xi32>
      %c0 = arith.constant 0 : index
      %c0_6 = arith.constant 0 : index
      %c0_7 = arith.constant 0 : index
      %15 = vector.load %arg4[%c0, %c0_6, %c0_7] : memref<1x15x896xf32, #tpu.memory_space<vmem>>, vector<1x15x128xf32>
      %16 = vector.shape_cast %15 : vector<1x15x128xf32> to vector<15x128xf32>
      %c0_8 = arith.constant 0 : index
      %c0_9 = arith.constant 0 : index
      %c0_10 = arith.constant 0 : index
      %17 = vector.load %arg6[%c0_8, %c0_9, %c0_10] : memref<1x1x896xf32, #tpu.memory_space<vmem>>, vector<1x1x128xf32>
      %18 = vector.shape_cast %17 : vector<1x1x128xf32> to vector<1x128xf32>
      %19 = vector.broadcast %18 : vector<1x128xf32> to vector<15x128xf32>
      %20 = arith.mulf %16, %19 : vector<15x128xf32>
      %c0_i32_11 = arith.constant 0 : i32
      %21 = arith.addi %13, %c0_i32_11 : i32
      %22 = vector.broadcast %21 : i32 to vector<1x128xi32>
      %23 = arith.addi %22, %14 : vector<1x128xi32>
      %c960_i32 = arith.constant 960 : i32
      %24 = vector.broadcast %c960_i32 : i32 to vector<1x128xi32>
      %25 = arith.cmpi slt, %23, %24 : vector<1x128xi32>
      %cst = arith.constant 0.000000e+00 : f32
      %26 = vector.shape_cast %25 : vector<1x128xi1> to vector<1x128xi1>
      %27 = vector.broadcast %26 : vector<1x128xi1> to vector<15x128xi1>
      %28 = vector.broadcast %cst : f32 to vector<15x128xf32>
      %29 = arith.select %27, %20, %28 : vector<15x128xi1>, vector<15x128xf32>
      %c0_12 = arith.constant 0 : index
      %c0_13 = arith.constant 0 : index
      %30 = vector.load %arg8[%c0_12, %c0_13] : memref<15x128xf32, #tpu.memory_space<vmem>>, vector<15x128xf32>
      %31 = arith.addf %30, %29 : vector<15x128xf32>
      %c0_14 = arith.constant 0 : index
      %c0_15 = arith.constant 0 : index
      %32 = vector.load %arg8[%c0_14, %c0_15] : memref<15x128xf32, #tpu.memory_space<vmem>>, vector<15x128xf32>
      tpu.vector_store %arg8[%c0_14, %c0_15], %31 {strides = array<i32>} : memref<15x128xf32, #tpu.memory_space<vmem>>, vector<15x128xf32>,
      %c0_16 = arith.constant 0 : index
      %c0_17 = arith.constant 0 : index
      %c128 = arith.constant 128 : index
      %33 = vector.load %arg4[%c0_16, %c0_17, %c128] : memref<1x15x896xf32, #tpu.memory_space<vmem>>, vector<1x15x128xf32>
      %34 = vector.shape_cast %33 : vector<1x15x128xf32> to vector<15x128xf32>
      %c0_18 = arith.constant 0 : index
      %c0_19 = arith.constant 0 : index
      %c128_20 = arith.constant 128 : index
      %35 = vector.load %arg6[%c0_18, %c0_19, %c128_20] : memref<1x1x896xf32, #tpu.memory_space<vmem>>, vector<1x1x128xf32>
      %36 = vector.shape_cast %35 : vector<1x1x128xf32> to vector<1x128xf32>
      %37 = vector.broadcast %36 : vector<1x128xf32> to vector<15x128xf32>
      %38 = arith.mulf %34, %37 : vector<15x128xf32>
      %c128_i32 = arith.constant 128 : i32
      %39 = arith.addi %13, %c128_i32 : i32
      %40 = vector.broadcast %39 : i32 to vector<1x128xi32>
      %41 = arith.addi %40, %14 : vector<1x128xi32>
      %c960_i32_21 = arith.constant 960 : i32
      %42 = vector.broadcast %c960_i32_21 : i32 to vector<1x128xi32>
      %43 = arith.cmpi slt, %41, %42 : vector<1x128xi32>
      %cst_22 = arith.constant 0.000000e+00 : f32
      %44 = vector.shape_cast %43 : vector<1x128xi1> to vector<1x128xi1>
      %45 = vector.broadcast %44 : vector<1x128xi1> to vector<15x128xi1>
      %46 = vector.broadcast %cst_22 : f32 to vector<15x128xf32>
      %47 = arith.select %45, %38, %46 : vector<15x128xi1>, vector<15x128xf32>
      %c0_23 = arith.constant 0 : index
      %c0_24 = arith.constant 0 : index
      %48 = vector.load %arg8[%c0_23, %c0_24] : memref<15x128xf32, #tpu.memory_space<vmem>>, vector<15x128xf32>
      %49 = arith.addf %48, %47 : vector<15x128xf32>
      %c0_25 = arith.constant 0 : index
      %c0_26 = arith.constant 0 : index
      %50 = vector.load %arg8[%c0_25, %c0_26] : memref<15x128xf32, #tpu.memory_space<vmem>>, vector<15x128xf32>
      tpu.vector_store %arg8[%c0_25, %c0_26], %49 {strides = array<i32>} : memref<15x128xf32, #tpu.memory_space<vmem>>, vector<15x128xf32>,
      %c0_27 = arith.constant 0 : index
      %c0_28 = arith.constant 0 : index
      %c256 = arith.constant 256 : index
      %51 = vector.load %arg4[%c0_27, %c0_28, %c256] : memref<1x15x896xf32, #tpu.memory_space<vmem>>, vector<1x15x128xf32>
      %52 = vector.shape_cast %51 : vector<1x15x128xf32> to vector<15x128xf32>
      %c0_29 = arith.constant 0 : index
      %c0_30 = arith.constant 0 : index
      %c256_31 = arith.constant 256 : index
      %53 = vector.load %arg6[%c0_29, %c0_30, %c256_31] : memref<1x1x896xf32, #tpu.memory_space<vmem>>, vector<1x1x128xf32>
      %54 = vector.shape_cast %53 : vector<1x1x128xf32> to vector<1x128xf32>
      %55 = vector.broadcast %54 : vector<1x128xf32> to vector<15x128xf32>
      %56 = arith.mulf %52, %55 : vector<15x128xf32>
      %c256_i32 = arith.constant 256 : i32
      %57 = arith.addi %13, %c256_i32 : i32
      %58 = vector.broadcast %57 : i32 to vector<1x128xi32>
      %59 = arith.addi %58, %14 : vector<1x128xi32>
      %c960_i32_32 = arith.constant 960 : i32
      %60 = vector.broadcast %c960_i32_32 : i32 to vector<1x128xi32>
      %61 = arith.cmpi slt, %59, %60 : vector<1x128xi32>
      %cst_33 = arith.constant 0.000000e+00 : f32
      %62 = vector.shape_cast %61 : vector<1x128xi1> to vector<1x128xi1>
      %63 = vector.broadcast %62 : vector<1x128xi1> to vector<15x128xi1>
      %64 = vector.broadcast %cst_33 : f32 to vector<15x128xf32>
      %65 = arith.select %63, %56, %64 : vector<15x128xi1>, vector<15x128xf32>
      %c0_34 = arith.constant 0 : index
      %c0_35 = arith.constant 0 : index
      %66 = vector.load %arg8[%c0_34, %c0_35] : memref<15x128xf32, #tpu.memory_space<vmem>>, vector<15x128xf32>
      %67 = arith.addf %66, %65 : vector<15x128xf32>
      %c0_36 = arith.constant 0 : index
      %c0_37 = arith.constant 0 : index
      %68 = vector.load %arg8[%c0_36, %c0_37] : memref<15x128xf32, #tpu.memory_space<vmem>>, vector<15x128xf32>
      tpu.vector_store %arg8[%c0_36, %c0_37], %67 {strides = array<i32>} : memref<15x128xf32, #tpu.memory_space<vmem>>, vector<15x128xf32>,
      %c0_38 = arith.constant 0 : index
      %c0_39 = arith.constant 0 : index
      %c384 = arith.constant 384 : index
      %69 = vector.load %arg4[%c0_38, %c0_39, %c384] : memref<1x15x896xf32, #tpu.memory_space<vmem>>, vector<1x15x128xf32>
      %70 = vector.shape_cast %69 : vector<1x15x128xf32> to vector<15x128xf32>
      %c0_40 = arith.constant 0 : index
      %c0_41 = arith.constant 0 : index
      %c384_42 = arith.constant 384 : index
      %71 = vector.load %arg6[%c0_40, %c0_41, %c384_42] : memref<1x1x896xf32, #tpu.memory_space<vmem>>, vector<1x1x128xf32>
      %72 = vector.shape_cast %71 : vector<1x1x128xf32> to vector<1x128xf32>
      %73 = vector.broadcast %72 : vector<1x128xf32> to vector<15x128xf32>
      %74 = arith.mulf %70, %73 : vector<15x128xf32>
      %c384_i32 = arith.constant 384 : i32
      %75 = arith.addi %13, %c384_i32 : i32
      %76 = vector.broadcast %75 : i32 to vector<1x128xi32>
      %77 = arith.addi %76, %14 : vector<1x128xi32>
      %c960_i32_43 = arith.constant 960 : i32
      %78 = vector.broadcast %c960_i32_43 : i32 to vector<1x128xi32>
      %79 = arith.cmpi slt, %77, %78 : vector<1x128xi32>
      %cst_44 = arith.constant 0.000000e+00 : f32
      %80 = vector.shape_cast %79 : vector<1x128xi1> to vector<1x128xi1>
      %81 = vector.broadcast %80 : vector<1x128xi1> to vector<15x128xi1>
      %82 = vector.broadcast %cst_44 : f32 to vector<15x128xf32>
      %83 = arith.select %81, %74, %82 : vector<15x128xi1>, vector<15x128xf32>
      %c0_45 = arith.constant 0 : index
      %c0_46 = arith.constant 0 : index
      %84 = vector.load %arg8[%c0_45, %c0_46] : memref<15x128xf32, #tpu.memory_space<vmem>>, vector<15x128xf32>
      %85 = arith.addf %84, %83 : vector<15x128xf32>
      %c0_47 = arith.constant 0 : index
      %c0_48 = arith.constant 0 : index
      %86 = vector.load %arg8[%c0_47, %c0_48] : memref<15x128xf32, #tpu.memory_space<vmem>>, vector<15x128xf32>
      tpu.vector_store %arg8[%c0_47, %c0_48], %85 {strides = array<i32>} : memref<15x128xf32, #tpu.memory_space<vmem>>, vector<15x128xf32>,
      %c0_49 = arith.constant 0 : index
      %c0_50 = arith.constant 0 : index
      %c512 = arith.constant 512 : index
      %87 = vector.load %arg4[%c0_49, %c0_50, %c512] : memref<1x15x896xf32, #tpu.memory_space<vmem>>, vector<1x15x128xf32>
      %88 = vector.shape_cast %87 : vector<1x15x128xf32> to vector<15x128xf32>
      %c0_51 = arith.constant 0 : index
      %c0_52 = arith.constant 0 : index
      %c512_53 = arith.constant 512 : index
      %89 = vector.load %arg6[%c0_51, %c0_52, %c512_53] : memref<1x1x896xf32, #tpu.memory_space<vmem>>, vector<1x1x128xf32>
      %90 = vector.shape_cast %89 : vector<1x1x128xf32> to vector<1x128xf32>
      %91 = vector.broadcast %90 : vector<1x128xf32> to vector<15x128xf32>
      %92 = arith.mulf %88, %91 : vector<15x128xf32>
      %c512_i32 = arith.constant 512 : i32
      %93 = arith.addi %13, %c512_i32 : i32
      %94 = vector.broadcast %93 : i32 to vector<1x128xi32>
      %95 = arith.addi %94, %14 : vector<1x128xi32>
      %c960_i32_54 = arith.constant 960 : i32
      %96 = vector.broadcast %c960_i32_54 : i32 to vector<1x128xi32>
      %97 = arith.cmpi slt, %95, %96 : vector<1x128xi32>
      %cst_55 = arith.constant 0.000000e+00 : f32
      %98 = vector.shape_cast %97 : vector<1x128xi1> to vector<1x128xi1>
      %99 = vector.broadcast %98 : vector<1x128xi1> to vector<15x128xi1>
      %100 = vector.broadcast %cst_55 : f32 to vector<15x128xf32>
      %101 = arith.select %99, %92, %100 : vector<15x128xi1>, vector<15x128xf32>
      %c0_56 = arith.constant 0 : index
      %c0_57 = arith.constant 0 : index
      %102 = vector.load %arg8[%c0_56, %c0_57] : memref<15x128xf32, #tpu.memory_space<vmem>>, vector<15x128xf32>
      %103 = arith.addf %102, %101 : vector<15x128xf32>
      %c0_58 = arith.constant 0 : index
      %c0_59 = arith.constant 0 : index
      %104 = vector.load %arg8[%c0_58, %c0_59] : memref<15x128xf32, #tpu.memory_space<vmem>>, vector<15x128xf32>
      tpu.vector_store %arg8[%c0_58, %c0_59], %103 {strides = array<i32>} : memref<15x128xf32, #tpu.memory_space<vmem>>, vector<15x128xf32>,
      %c0_60 = arith.constant 0 : index
      %c0_61 = arith.constant 0 : index
      %c640 = arith.constant 640 : index
      %105 = vector.load %arg4[%c0_60, %c0_61, %c640] : memref<1x15x896xf32, #tpu.memory_space<vmem>>, vector<1x15x128xf32>
      %106 = vector.shape_cast %105 : vector<1x15x128xf32> to vector<15x128xf32>
      %c0_62 = arith.constant 0 : index
      %c0_63 = arith.constant 0 : index
      %c640_64 = arith.constant 640 : index
      %107 = vector.load %arg6[%c0_62, %c0_63, %c640_64] : memref<1x1x896xf32, #tpu.memory_space<vmem>>, vector<1x1x128xf32>
      %108 = vector.shape_cast %107 : vector<1x1x128xf32> to vector<1x128xf32>
      %109 = vector.broadcast %108 : vector<1x128xf32> to vector<15x128xf32>
      %110 = arith.mulf %106, %109 : vector<15x128xf32>
      %c640_i32 = arith.constant 640 : i32
      %111 = arith.addi %13, %c640_i32 : i32
      %112 = vector.broadcast %111 : i32 to vector<1x128xi32>
      %113 = arith.addi %112, %14 : vector<1x128xi32>
      %c960_i32_65 = arith.constant 960 : i32
      %114 = vector.broadcast %c960_i32_65 : i32 to vector<1x128xi32>
      %115 = arith.cmpi slt, %113, %114 : vector<1x128xi32>
      %cst_66 = arith.constant 0.000000e+00 : f32
      %116 = vector.shape_cast %115 : vector<1x128xi1> to vector<1x128xi1>
      %117 = vector.broadcast %116 : vector<1x128xi1> to vector<15x128xi1>
      %118 = vector.broadcast %cst_66 : f32 to vector<15x128xf32>
      %119 = arith.select %117, %110, %118 : vector<15x128xi1>, vector<15x128xf32>
      %c0_67 = arith.constant 0 : index
      %c0_68 = arith.constant 0 : index
      %120 = vector.load %arg8[%c0_67, %c0_68] : memref<15x128xf32, #tpu.memory_space<vmem>>, vector<15x128xf32>
      %121 = arith.addf %120, %119 : vector<15x128xf32>
      %c0_69 = arith.constant 0 : index
      %c0_70 = arith.constant 0 : index
      %122 = vector.load %arg8[%c0_69, %c0_70] : memref<15x128xf32, #tpu.memory_space<vmem>>, vector<15x128xf32>
      tpu.vector_store %arg8[%c0_69, %c0_70], %121 {strides = array<i32>} : memref<15x128xf32, #tpu.memory_space<vmem>>, vector<15x128xf32>,
      %c0_71 = arith.constant 0 : index
      %c0_72 = arith.constant 0 : index
      %c768 = arith.constant 768 : index
      %123 = vector.load %arg4[%c0_71, %c0_72, %c768] : memref<1x15x896xf32, #tpu.memory_space<vmem>>, vector<1x15x128xf32>
      %124 = vector.shape_cast %123 : vector<1x15x128xf32> to vector<15x128xf32>
      %c0_73 = arith.constant 0 : index
      %c0_74 = arith.constant 0 : index
      %c768_75 = arith.constant 768 : index
      %125 = vector.load %arg6[%c0_73, %c0_74, %c768_75] : memref<1x1x896xf32, #tpu.memory_space<vmem>>, vector<1x1x128xf32>
      %126 = vector.shape_cast %125 : vector<1x1x128xf32> to vector<1x128xf32>
      %127 = vector.broadcast %126 : vector<1x128xf32> to vector<15x128xf32>
      %128 = arith.mulf %124, %127 : vector<15x128xf32>
      %c768_i32 = arith.constant 768 : i32
      %129 = arith.addi %13, %c768_i32 : i32
      %130 = vector.broadcast %129 : i32 to vector<1x128xi32>
      %131 = arith.addi %130, %14 : vector<1x128xi32>
      %c960_i32_76 = arith.constant 960 : i32
      %132 = vector.broadcast %c960_i32_76 : i32 to vector<1x128xi32>
      %133 = arith.cmpi slt, %131, %132 : vector<1x128xi32>
      %cst_77 = arith.constant 0.000000e+00 : f32
      %134 = vector.shape_cast %133 : vector<1x128xi1> to vector<1x128xi1>
      %135 = vector.broadcast %134 : vector<1x128xi1> to vector<15x128xi1>
      %136 = vector.broadcast %cst_77 : f32 to vector<15x128xf32>
      %137 = arith.select %135, %128, %136 : vector<15x128xi1>, vector<15x128xf32>
      %c0_78 = arith.constant 0 : index
      %c0_79 = arith.constant 0 : index
      %138 = vector.load %arg8[%c0_78, %c0_79] : memref<15x128xf32, #tpu.memory_space<vmem>>, vector<15x128xf32>
      %139 = arith.addf %138, %137 : vector<15x128xf32>
      %c0_80 = arith.constant 0 : index
      %c0_81 = arith.constant 0 : index
      %140 = vector.load %arg8[%c0_80, %c0_81] : memref<15x128xf32, #tpu.memory_space<vmem>>, vector<15x128xf32>
      tpu.vector_store %arg8[%c0_80, %c0_81], %139 {strides = array<i32>} : memref<15x128xf32, #tpu.memory_space<vmem>>, vector<15x128xf32>,
    } else {
    }
    %c2_i32 = arith.constant 2 : i32
    %9 = arith.cmpi eq, %arg2, %c2_i32 : i32
    %10 = arith.extui %9 : i1 to i32
    %c0_i32_4 = arith.constant 0 : i32
    %11 = arith.cmpi ne, %10, %c0_i32_4 : i32
    scf.if %11 {
      %c0 = arith.constant 0 : index
      %c0_5 = arith.constant 0 : index
      %12 = vector.load %arg8[%c0, %c0_5] : memref<15x128xf32, #tpu.memory_space<vmem>>, vector<15x128xf32>
      %cst = arith.constant dense<0.000000e+00> : vector<15xf32>
      %13 = vector.multi_reduction <add>, %12, %cst [1] : vector<15x128xf32> to vector<15xf32>
      %14 = vector.shape_cast %13 : vector<15xf32> to vector<15x1xf32>
      %c0_6 = arith.constant 0 : index
      %c0_7 = arith.constant 0 : index
      %c0_8 = arith.constant 0 : index
      %15 = vector.load %arg7[%c0_6, %c0_7, %c0_8] : memref<1x15x1xf32, #tpu.memory_space<vmem>>, vector<1x15x1xf32>
      %16 = vector.shape_cast %15 : vector<1x15x1xf32> to vector<15x1xf32>
      %17 = vector.shape_cast %14 : vector<15x1xf32> to vector<1x15x1xf32>
      tpu.vector_store %arg7[%c0_6, %c0_7, %c0_8], %17 {strides = array<i32>} : memref<1x15x1xf32, #tpu.memory_space<vmem>>, vector<1x15x1xf32>,
    } else {
    }
    return
  }
  func.func @transform_0(%arg0: i32, %arg1: i32, %arg2: i32) -> (i32, i32, i32) {
    %c0_i32 = arith.constant 0 : i32
    %0 = arith.minsi %arg2, %c0_i32 : i32
    %c0_i32_0 = arith.constant 0 : i32
    return %arg0, %arg1, %0 : i32, i32, i32
  }
  func.func @transform_1(%arg0: i32, %arg1: i32, %arg2: i32) -> (i32, i32, i32) {
    %c1_i32 = arith.constant 1 : i32
    %0 = arith.subi %arg2, %c1_i32 : i32
    %c0_i32 = arith.constant 0 : i32
    %1 = arith.maxsi %0, %c0_i32 : i32
    %c0_i32_0 = arith.constant 0 : i32
    return %arg0, %arg1, %1 : i32, i32, i32
  }
  func.func @transform_2(%arg0: i32, %arg1: i32, %arg2: i32) -> (i32, i32, i32) {
    %c0_i32 = arith.constant 0 : i32
    %0 = arith.minsi %arg2, %c0_i32 : i32
    %c0_i32_0 = arith.constant 0 : i32
    %c0_i32_1 = arith.constant 0 : i32
    return %arg0, %c0_i32_0, %0 : i32, i32, i32
  }
  func.func @transform_3(%arg0: i32, %arg1: i32, %arg2: i32) -> (i32, i32, i32) {
    %c1_i32 = arith.constant 1 : i32
    %0 = arith.subi %arg2, %c1_i32 : i32
    %c0_i32 = arith.constant 0 : i32
    %1 = arith.maxsi %0, %c0_i32 : i32
    %c0_i32_0 = arith.constant 0 : i32
    %c0_i32_1 = arith.constant 0 : i32
    return %arg0, %c0_i32_0, %1 : i32, i32, i32
  }
  func.func @transform_4(%arg0: i32, %arg1: i32, %arg2: i32) -> (i32, i32, i32) {
    %c0_i32 = arith.constant 0 : i32
    %c0_i32_0 = arith.constant 0 : i32
    return %arg0, %arg1, %c0_i32 : i32, i32, i32
  }
}

module attributes {stable_mosaic.version = 11 : i64} {
  func.func @kernel(%arg0: i32, %arg1: i32, %arg2: i32, %arg3: memref<1x12x768xf32, #tpu.memory_space<vmem>>, %arg4: memref<1x12x896xf32, #tpu.memory_space<vmem>>, %arg5: memref<1x1x768xf32, #tpu.memory_space<vmem>>, %arg6: memref<1x1x896xf32, #tpu.memory_space<vmem>>, %arg7: memref<1x12x1xf32, #tpu.memory_space<vmem>>, %arg8: memref<12x128xf32, #tpu.memory_space<vmem>>) attributes {dimension_semantics = [#tpu.dimension_semantics<parallel>, #tpu.dimension_semantics<parallel>, #tpu.dimension_semantics<arbitrary>], iteration_bounds = array<i64: 2, 1, 3>, scalar_prefetch = 0 : i64, scratch_operands = 1 : i64, tpu.core_type = #tpu.core_type<tc>, window_params = [{transform_indices = @transform_0, window_bounds = array<i64: 1, 12, 768>}, {transform_indices = @transform_1, window_bounds = array<i64: 1, 12, 896>}, {transform_indices = @transform_2, window_bounds = array<i64: 1, 1, 768>}, {transform_indices = @transform_3, window_bounds = array<i64: 1, 1, 896>}, {transform_indices = @transform_4, window_bounds = array<i64: 1, 12, 1>}]} {
    %c0_i32 = arith.constant 0 : i32
    %0 = arith.cmpi eq, %arg2, %c0_i32 : i32
    %1 = arith.extui %0 : i1 to i32
    %c0_i32_0 = arith.constant 0 : i32
    %2 = arith.cmpi ne, %1, %c0_i32_0 : i32
    scf.if %2 {
      %cst = arith.constant 0.000000e+00 : f32
      %12 = vector.broadcast %cst : f32 to vector<12x128xf32>
      %c0 = arith.constant 0 : index
      %c0_5 = arith.constant 0 : index
      %13 = vector.load %arg8[%c0, %c0_5] : memref<12x128xf32, #tpu.memory_space<vmem>>, vector<12x128xf32>
      tpu.vector_store %arg8[%c0, %c0_5], %12 {strides = array<i32>} : memref<12x128xf32, #tpu.memory_space<vmem>>, vector<12x128xf32>,
    } else {
    }
    %c1_i32 = arith.constant 1 : i32
    %3 = arith.cmpi slt, %arg2, %c1_i32 : i32
    %4 = arith.extui %3 : i1 to i32
    %c0_i32_1 = arith.constant 0 : i32
    %5 = arith.cmpi ne, %4, %c0_i32_1 : i32
    scf.if %5 {
      %c0 = arith.constant 0 : index
      %c0_5 = arith.constant 0 : index
      %c0_6 = arith.constant 0 : index
      %12 = vector.load %arg3[%c0, %c0_5, %c0_6] : memref<1x12x768xf32, #tpu.memory_space<vmem>>, vector<1x12x128xf32>
      %13 = vector.shape_cast %12 : vector<1x12x128xf32> to vector<12x128xf32>
      %c0_7 = arith.constant 0 : index
      %c0_8 = arith.constant 0 : index
      %c0_9 = arith.constant 0 : index
      %14 = vector.load %arg5[%c0_7, %c0_8, %c0_9] : memref<1x1x768xf32, #tpu.memory_space<vmem>>, vector<1x1x128xf32>
      %15 = vector.shape_cast %14 : vector<1x1x128xf32> to vector<1x128xf32>
      %16 = vector.broadcast %15 : vector<1x128xf32> to vector<12x128xf32>
      %17 = arith.mulf %13, %16 : vector<12x128xf32>
      %c0_10 = arith.constant 0 : index
      %c0_11 = arith.constant 0 : index
      %18 = vector.load %arg8[%c0_10, %c0_11] : memref<12x128xf32, #tpu.memory_space<vmem>>, vector<12x128xf32>
      %19 = arith.addf %18, %17 : vector<12x128xf32>
      %c0_12 = arith.constant 0 : index
      %c0_13 = arith.constant 0 : index
      %20 = vector.load %arg8[%c0_12, %c0_13] : memref<12x128xf32, #tpu.memory_space<vmem>>, vector<12x128xf32>
      tpu.vector_store %arg8[%c0_12, %c0_13], %19 {strides = array<i32>} : memref<12x128xf32, #tpu.memory_space<vmem>>, vector<12x128xf32>,
      %c0_14 = arith.constant 0 : index
      %c0_15 = arith.constant 0 : index
      %c128 = arith.constant 128 : index
      %21 = vector.load %arg3[%c0_14, %c0_15, %c128] : memref<1x12x768xf32, #tpu.memory_space<vmem>>, vector<1x12x128xf32>
      %22 = vector.shape_cast %21 : vector<1x12x128xf32> to vector<12x128xf32>
      %c0_16 = arith.constant 0 : index
      %c0_17 = arith.constant 0 : index
      %c128_18 = arith.constant 128 : index
      %23 = vector.load %arg5[%c0_16, %c0_17, %c128_18] : memref<1x1x768xf32, #tpu.memory_space<vmem>>, vector<1x1x128xf32>
      %24 = vector.shape_cast %23 : vector<1x1x128xf32> to vector<1x128xf32>
      %25 = vector.broadcast %24 : vector<1x128xf32> to vector<12x128xf32>
      %26 = arith.mulf %22, %25 : vector<12x128xf32>
      %c0_19 = arith.constant 0 : index
      %c0_20 = arith.constant 0 : index
      %27 = vector.load %arg8[%c0_19, %c0_20] : memref<12x128xf32, #tpu.memory_space<vmem>>, vector<12x128xf32>
      %28 = arith.addf %27, %26 : vector<12x128xf32>
      %c0_21 = arith.constant 0 : index
      %c0_22 = arith.constant 0 : index
      %29 = vector.load %arg8[%c0_21, %c0_22] : memref<12x128xf32, #tpu.memory_space<vmem>>, vector<12x128xf32>
      tpu.vector_store %arg8[%c0_21, %c0_22], %28 {strides = array<i32>} : memref<12x128xf32, #tpu.memory_space<vmem>>, vector<12x128xf32>,
      %c0_23 = arith.constant 0 : index
      %c0_24 = arith.constant 0 : index
      %c256 = arith.constant 256 : index
      %30 = vector.load %arg3[%c0_23, %c0_24, %c256] : memref<1x12x768xf32, #tpu.memory_space<vmem>>, vector<1x12x128xf32>
      %31 = vector.shape_cast %30 : vector<1x12x128xf32> to vector<12x128xf32>
      %c0_25 = arith.constant 0 : index
      %c0_26 = arith.constant 0 : index
      %c256_27 = arith.constant 256 : index
      %32 = vector.load %arg5[%c0_25, %c0_26, %c256_27] : memref<1x1x768xf32, #tpu.memory_space<vmem>>, vector<1x1x128xf32>
      %33 = vector.shape_cast %32 : vector<1x1x128xf32> to vector<1x128xf32>
      %34 = vector.broadcast %33 : vector<1x128xf32> to vector<12x128xf32>
      %35 = arith.mulf %31, %34 : vector<12x128xf32>
      %c0_28 = arith.constant 0 : index
      %c0_29 = arith.constant 0 : index
      %36 = vector.load %arg8[%c0_28, %c0_29] : memref<12x128xf32, #tpu.memory_space<vmem>>, vector<12x128xf32>
      %37 = arith.addf %36, %35 : vector<12x128xf32>
      %c0_30 = arith.constant 0 : index
      %c0_31 = arith.constant 0 : index
      %38 = vector.load %arg8[%c0_30, %c0_31] : memref<12x128xf32, #tpu.memory_space<vmem>>, vector<12x128xf32>
      tpu.vector_store %arg8[%c0_30, %c0_31], %37 {strides = array<i32>} : memref<12x128xf32, #tpu.memory_space<vmem>>, vector<12x128xf32>,
      %c0_32 = arith.constant 0 : index
      %c0_33 = arith.constant 0 : index
      %c384 = arith.constant 384 : index
      %39 = vector.load %arg3[%c0_32, %c0_33, %c384] : memref<1x12x768xf32, #tpu.memory_space<vmem>>, vector<1x12x128xf32>
      %40 = vector.shape_cast %39 : vector<1x12x128xf32> to vector<12x128xf32>
      %c0_34 = arith.constant 0 : index
      %c0_35 = arith.constant 0 : index
      %c384_36 = arith.constant 384 : index
      %41 = vector.load %arg5[%c0_34, %c0_35, %c384_36] : memref<1x1x768xf32, #tpu.memory_space<vmem>>, vector<1x1x128xf32>
      %42 = vector.shape_cast %41 : vector<1x1x128xf32> to vector<1x128xf32>
      %43 = vector.broadcast %42 : vector<1x128xf32> to vector<12x128xf32>
      %44 = arith.mulf %40, %43 : vector<12x128xf32>
      %c0_37 = arith.constant 0 : index
      %c0_38 = arith.constant 0 : index
      %45 = vector.load %arg8[%c0_37, %c0_38] : memref<12x128xf32, #tpu.memory_space<vmem>>, vector<12x128xf32>
      %46 = arith.addf %45, %44 : vector<12x128xf32>
      %c0_39 = arith.constant 0 : index
      %c0_40 = arith.constant 0 : index
      %47 = vector.load %arg8[%c0_39, %c0_40] : memref<12x128xf32, #tpu.memory_space<vmem>>, vector<12x128xf32>
      tpu.vector_store %arg8[%c0_39, %c0_40], %46 {strides = array<i32>} : memref<12x128xf32, #tpu.memory_space<vmem>>, vector<12x128xf32>,
      %c0_41 = arith.constant 0 : index
      %c0_42 = arith.constant 0 : index
      %c512 = arith.constant 512 : index
      %48 = vector.load %arg3[%c0_41, %c0_42, %c512] : memref<1x12x768xf32, #tpu.memory_space<vmem>>, vector<1x12x128xf32>
      %49 = vector.shape_cast %48 : vector<1x12x128xf32> to vector<12x128xf32>
      %c0_43 = arith.constant 0 : index
      %c0_44 = arith.constant 0 : index
      %c512_45 = arith.constant 512 : index
      %50 = vector.load %arg5[%c0_43, %c0_44, %c512_45] : memref<1x1x768xf32, #tpu.memory_space<vmem>>, vector<1x1x128xf32>
      %51 = vector.shape_cast %50 : vector<1x1x128xf32> to vector<1x128xf32>
      %52 = vector.broadcast %51 : vector<1x128xf32> to vector<12x128xf32>
      %53 = arith.mulf %49, %52 : vector<12x128xf32>
      %c0_46 = arith.constant 0 : index
      %c0_47 = arith.constant 0 : index
      %54 = vector.load %arg8[%c0_46, %c0_47] : memref<12x128xf32, #tpu.memory_space<vmem>>, vector<12x128xf32>
      %55 = arith.addf %54, %53 : vector<12x128xf32>
      %c0_48 = arith.constant 0 : index
      %c0_49 = arith.constant 0 : index
      %56 = vector.load %arg8[%c0_48, %c0_49] : memref<12x128xf32, #tpu.memory_space<vmem>>, vector<12x128xf32>
      tpu.vector_store %arg8[%c0_48, %c0_49], %55 {strides = array<i32>} : memref<12x128xf32, #tpu.memory_space<vmem>>, vector<12x128xf32>,
      %c0_50 = arith.constant 0 : index
      %c0_51 = arith.constant 0 : index
      %c640 = arith.constant 640 : index
      %57 = vector.load %arg3[%c0_50, %c0_51, %c640] : memref<1x12x768xf32, #tpu.memory_space<vmem>>, vector<1x12x128xf32>
      %58 = vector.shape_cast %57 : vector<1x12x128xf32> to vector<12x128xf32>
      %c0_52 = arith.constant 0 : index
      %c0_53 = arith.constant 0 : index
      %c640_54 = arith.constant 640 : index
      %59 = vector.load %arg5[%c0_52, %c0_53, %c640_54] : memref<1x1x768xf32, #tpu.memory_space<vmem>>, vector<1x1x128xf32>
      %60 = vector.shape_cast %59 : vector<1x1x128xf32> to vector<1x128xf32>
      %61 = vector.broadcast %60 : vector<1x128xf32> to vector<12x128xf32>
      %62 = arith.mulf %58, %61 : vector<12x128xf32>
      %c0_55 = arith.constant 0 : index
      %c0_56 = arith.constant 0 : index
      %63 = vector.load %arg8[%c0_55, %c0_56] : memref<12x128xf32, #tpu.memory_space<vmem>>, vector<12x128xf32>
      %64 = arith.addf %63, %62 : vector<12x128xf32>
      %c0_57 = arith.constant 0 : index
      %c0_58 = arith.constant 0 : index
      %65 = vector.load %arg8[%c0_57, %c0_58] : memref<12x128xf32, #tpu.memory_space<vmem>>, vector<12x128xf32>
      tpu.vector_store %arg8[%c0_57, %c0_58], %64 {strides = array<i32>} : memref<12x128xf32, #tpu.memory_space<vmem>>, vector<12x128xf32>,
    } else {
    }
    %c1_i32_2 = arith.constant 1 : i32
    %6 = arith.cmpi sge, %arg2, %c1_i32_2 : i32
    %7 = arith.extui %6 : i1 to i32
    %c0_i32_3 = arith.constant 0 : i32
    %8 = arith.cmpi ne, %7, %c0_i32_3 : i32
    scf.if %8 {
      %c1_i32_5 = arith.constant 1 : i32
      %12 = arith.subi %arg2, %c1_i32_5 : i32
      %c896_i32 = arith.constant 896 : i32
      %13 = arith.muli %12, %c896_i32 : i32
      %14 = tpu.iota {dimensions = array<i32: 1>} : vector<1x128xi32>
      %c0 = arith.constant 0 : index
      %c0_6 = arith.constant 0 : index
      %c0_7 = arith.constant 0 : index
      %15 = vector.load %arg4[%c0, %c0_6, %c0_7] : memref<1x12x896xf32, #tpu.memory_space<vmem>>, vector<1x12x128xf32>
      %16 = vector.shape_cast %15 : vector<1x12x128xf32> to vector<12x128xf32>
      %c0_8 = arith.constant 0 : index
      %c0_9 = arith.constant 0 : index
      %c0_10 = arith.constant 0 : index
      %17 = vector.load %arg6[%c0_8, %c0_9, %c0_10] : memref<1x1x896xf32, #tpu.memory_space<vmem>>, vector<1x1x128xf32>
      %18 = vector.shape_cast %17 : vector<1x1x128xf32> to vector<1x128xf32>
      %19 = vector.broadcast %18 : vector<1x128xf32> to vector<12x128xf32>
      %20 = arith.mulf %16, %19 : vector<12x128xf32>
      %c0_i32_11 = arith.constant 0 : i32
      %21 = arith.addi %13, %c0_i32_11 : i32
      %22 = vector.broadcast %21 : i32 to vector<1x128xi32>
      %23 = arith.addi %22, %14 : vector<1x128xi32>
      %c960_i32 = arith.constant 960 : i32
      %24 = vector.broadcast %c960_i32 : i32 to vector<1x128xi32>
      %25 = arith.cmpi slt, %23, %24 : vector<1x128xi32>
      %cst = arith.constant 0.000000e+00 : f32
      %26 = vector.shape_cast %25 : vector<1x128xi1> to vector<1x128xi1>
      %27 = vector.broadcast %26 : vector<1x128xi1> to vector<12x128xi1>
      %28 = vector.broadcast %cst : f32 to vector<12x128xf32>
      %29 = arith.select %27, %20, %28 : vector<12x128xi1>, vector<12x128xf32>
      %c0_12 = arith.constant 0 : index
      %c0_13 = arith.constant 0 : index
      %30 = vector.load %arg8[%c0_12, %c0_13] : memref<12x128xf32, #tpu.memory_space<vmem>>, vector<12x128xf32>
      %31 = arith.addf %30, %29 : vector<12x128xf32>
      %c0_14 = arith.constant 0 : index
      %c0_15 = arith.constant 0 : index
      %32 = vector.load %arg8[%c0_14, %c0_15] : memref<12x128xf32, #tpu.memory_space<vmem>>, vector<12x128xf32>
      tpu.vector_store %arg8[%c0_14, %c0_15], %31 {strides = array<i32>} : memref<12x128xf32, #tpu.memory_space<vmem>>, vector<12x128xf32>,
      %c0_16 = arith.constant 0 : index
      %c0_17 = arith.constant 0 : index
      %c128 = arith.constant 128 : index
      %33 = vector.load %arg4[%c0_16, %c0_17, %c128] : memref<1x12x896xf32, #tpu.memory_space<vmem>>, vector<1x12x128xf32>
      %34 = vector.shape_cast %33 : vector<1x12x128xf32> to vector<12x128xf32>
      %c0_18 = arith.constant 0 : index
      %c0_19 = arith.constant 0 : index
      %c128_20 = arith.constant 128 : index
      %35 = vector.load %arg6[%c0_18, %c0_19, %c128_20] : memref<1x1x896xf32, #tpu.memory_space<vmem>>, vector<1x1x128xf32>
      %36 = vector.shape_cast %35 : vector<1x1x128xf32> to vector<1x128xf32>
      %37 = vector.broadcast %36 : vector<1x128xf32> to vector<12x128xf32>
      %38 = arith.mulf %34, %37 : vector<12x128xf32>
      %c128_i32 = arith.constant 128 : i32
      %39 = arith.addi %13, %c128_i32 : i32
      %40 = vector.broadcast %39 : i32 to vector<1x128xi32>
      %41 = arith.addi %40, %14 : vector<1x128xi32>
      %c960_i32_21 = arith.constant 960 : i32
      %42 = vector.broadcast %c960_i32_21 : i32 to vector<1x128xi32>
      %43 = arith.cmpi slt, %41, %42 : vector<1x128xi32>
      %cst_22 = arith.constant 0.000000e+00 : f32
      %44 = vector.shape_cast %43 : vector<1x128xi1> to vector<1x128xi1>
      %45 = vector.broadcast %44 : vector<1x128xi1> to vector<12x128xi1>
      %46 = vector.broadcast %cst_22 : f32 to vector<12x128xf32>
      %47 = arith.select %45, %38, %46 : vector<12x128xi1>, vector<12x128xf32>
      %c0_23 = arith.constant 0 : index
      %c0_24 = arith.constant 0 : index
      %48 = vector.load %arg8[%c0_23, %c0_24] : memref<12x128xf32, #tpu.memory_space<vmem>>, vector<12x128xf32>
      %49 = arith.addf %48, %47 : vector<12x128xf32>
      %c0_25 = arith.constant 0 : index
      %c0_26 = arith.constant 0 : index
      %50 = vector.load %arg8[%c0_25, %c0_26] : memref<12x128xf32, #tpu.memory_space<vmem>>, vector<12x128xf32>
      tpu.vector_store %arg8[%c0_25, %c0_26], %49 {strides = array<i32>} : memref<12x128xf32, #tpu.memory_space<vmem>>, vector<12x128xf32>,
      %c0_27 = arith.constant 0 : index
      %c0_28 = arith.constant 0 : index
      %c256 = arith.constant 256 : index
      %51 = vector.load %arg4[%c0_27, %c0_28, %c256] : memref<1x12x896xf32, #tpu.memory_space<vmem>>, vector<1x12x128xf32>
      %52 = vector.shape_cast %51 : vector<1x12x128xf32> to vector<12x128xf32>
      %c0_29 = arith.constant 0 : index
      %c0_30 = arith.constant 0 : index
      %c256_31 = arith.constant 256 : index
      %53 = vector.load %arg6[%c0_29, %c0_30, %c256_31] : memref<1x1x896xf32, #tpu.memory_space<vmem>>, vector<1x1x128xf32>
      %54 = vector.shape_cast %53 : vector<1x1x128xf32> to vector<1x128xf32>
      %55 = vector.broadcast %54 : vector<1x128xf32> to vector<12x128xf32>
      %56 = arith.mulf %52, %55 : vector<12x128xf32>
      %c256_i32 = arith.constant 256 : i32
      %57 = arith.addi %13, %c256_i32 : i32
      %58 = vector.broadcast %57 : i32 to vector<1x128xi32>
      %59 = arith.addi %58, %14 : vector<1x128xi32>
      %c960_i32_32 = arith.constant 960 : i32
      %60 = vector.broadcast %c960_i32_32 : i32 to vector<1x128xi32>
      %61 = arith.cmpi slt, %59, %60 : vector<1x128xi32>
      %cst_33 = arith.constant 0.000000e+00 : f32
      %62 = vector.shape_cast %61 : vector<1x128xi1> to vector<1x128xi1>
      %63 = vector.broadcast %62 : vector<1x128xi1> to vector<12x128xi1>
      %64 = vector.broadcast %cst_33 : f32 to vector<12x128xf32>
      %65 = arith.select %63, %56, %64 : vector<12x128xi1>, vector<12x128xf32>
      %c0_34 = arith.constant 0 : index
      %c0_35 = arith.constant 0 : index
      %66 = vector.load %arg8[%c0_34, %c0_35] : memref<12x128xf32, #tpu.memory_space<vmem>>, vector<12x128xf32>
      %67 = arith.addf %66, %65 : vector<12x128xf32>
      %c0_36 = arith.constant 0 : index
      %c0_37 = arith.constant 0 : index
      %68 = vector.load %arg8[%c0_36, %c0_37] : memref<12x128xf32, #tpu.memory_space<vmem>>, vector<12x128xf32>
      tpu.vector_store %arg8[%c0_36, %c0_37], %67 {strides = array<i32>} : memref<12x128xf32, #tpu.memory_space<vmem>>, vector<12x128xf32>,
      %c0_38 = arith.constant 0 : index
      %c0_39 = arith.constant 0 : index
      %c384 = arith.constant 384 : index
      %69 = vector.load %arg4[%c0_38, %c0_39, %c384] : memref<1x12x896xf32, #tpu.memory_space<vmem>>, vector<1x12x128xf32>
      %70 = vector.shape_cast %69 : vector<1x12x128xf32> to vector<12x128xf32>
      %c0_40 = arith.constant 0 : index
      %c0_41 = arith.constant 0 : index
      %c384_42 = arith.constant 384 : index
      %71 = vector.load %arg6[%c0_40, %c0_41, %c384_42] : memref<1x1x896xf32, #tpu.memory_space<vmem>>, vector<1x1x128xf32>
      %72 = vector.shape_cast %71 : vector<1x1x128xf32> to vector<1x128xf32>
      %73 = vector.broadcast %72 : vector<1x128xf32> to vector<12x128xf32>
      %74 = arith.mulf %70, %73 : vector<12x128xf32>
      %c384_i32 = arith.constant 384 : i32
      %75 = arith.addi %13, %c384_i32 : i32
      %76 = vector.broadcast %75 : i32 to vector<1x128xi32>
      %77 = arith.addi %76, %14 : vector<1x128xi32>
      %c960_i32_43 = arith.constant 960 : i32
      %78 = vector.broadcast %c960_i32_43 : i32 to vector<1x128xi32>
      %79 = arith.cmpi slt, %77, %78 : vector<1x128xi32>
      %cst_44 = arith.constant 0.000000e+00 : f32
      %80 = vector.shape_cast %79 : vector<1x128xi1> to vector<1x128xi1>
      %81 = vector.broadcast %80 : vector<1x128xi1> to vector<12x128xi1>
      %82 = vector.broadcast %cst_44 : f32 to vector<12x128xf32>
      %83 = arith.select %81, %74, %82 : vector<12x128xi1>, vector<12x128xf32>
      %c0_45 = arith.constant 0 : index
      %c0_46 = arith.constant 0 : index
      %84 = vector.load %arg8[%c0_45, %c0_46] : memref<12x128xf32, #tpu.memory_space<vmem>>, vector<12x128xf32>
      %85 = arith.addf %84, %83 : vector<12x128xf32>
      %c0_47 = arith.constant 0 : index
      %c0_48 = arith.constant 0 : index
      %86 = vector.load %arg8[%c0_47, %c0_48] : memref<12x128xf32, #tpu.memory_space<vmem>>, vector<12x128xf32>
      tpu.vector_store %arg8[%c0_47, %c0_48], %85 {strides = array<i32>} : memref<12x128xf32, #tpu.memory_space<vmem>>, vector<12x128xf32>,
      %c0_49 = arith.constant 0 : index
      %c0_50 = arith.constant 0 : index
      %c512 = arith.constant 512 : index
      %87 = vector.load %arg4[%c0_49, %c0_50, %c512] : memref<1x12x896xf32, #tpu.memory_space<vmem>>, vector<1x12x128xf32>
      %88 = vector.shape_cast %87 : vector<1x12x128xf32> to vector<12x128xf32>
      %c0_51 = arith.constant 0 : index
      %c0_52 = arith.constant 0 : index
      %c512_53 = arith.constant 512 : index
      %89 = vector.load %arg6[%c0_51, %c0_52, %c512_53] : memref<1x1x896xf32, #tpu.memory_space<vmem>>, vector<1x1x128xf32>
      %90 = vector.shape_cast %89 : vector<1x1x128xf32> to vector<1x128xf32>
      %91 = vector.broadcast %90 : vector<1x128xf32> to vector<12x128xf32>
      %92 = arith.mulf %88, %91 : vector<12x128xf32>
      %c512_i32 = arith.constant 512 : i32
      %93 = arith.addi %13, %c512_i32 : i32
      %94 = vector.broadcast %93 : i32 to vector<1x128xi32>
      %95 = arith.addi %94, %14 : vector<1x128xi32>
      %c960_i32_54 = arith.constant 960 : i32
      %96 = vector.broadcast %c960_i32_54 : i32 to vector<1x128xi32>
      %97 = arith.cmpi slt, %95, %96 : vector<1x128xi32>
      %cst_55 = arith.constant 0.000000e+00 : f32
      %98 = vector.shape_cast %97 : vector<1x128xi1> to vector<1x128xi1>
      %99 = vector.broadcast %98 : vector<1x128xi1> to vector<12x128xi1>
      %100 = vector.broadcast %cst_55 : f32 to vector<12x128xf32>
      %101 = arith.select %99, %92, %100 : vector<12x128xi1>, vector<12x128xf32>
      %c0_56 = arith.constant 0 : index
      %c0_57 = arith.constant 0 : index
      %102 = vector.load %arg8[%c0_56, %c0_57] : memref<12x128xf32, #tpu.memory_space<vmem>>, vector<12x128xf32>
      %103 = arith.addf %102, %101 : vector<12x128xf32>
      %c0_58 = arith.constant 0 : index
      %c0_59 = arith.constant 0 : index
      %104 = vector.load %arg8[%c0_58, %c0_59] : memref<12x128xf32, #tpu.memory_space<vmem>>, vector<12x128xf32>
      tpu.vector_store %arg8[%c0_58, %c0_59], %103 {strides = array<i32>} : memref<12x128xf32, #tpu.memory_space<vmem>>, vector<12x128xf32>,
      %c0_60 = arith.constant 0 : index
      %c0_61 = arith.constant 0 : index
      %c640 = arith.constant 640 : index
      %105 = vector.load %arg4[%c0_60, %c0_61, %c640] : memref<1x12x896xf32, #tpu.memory_space<vmem>>, vector<1x12x128xf32>
      %106 = vector.shape_cast %105 : vector<1x12x128xf32> to vector<12x128xf32>
      %c0_62 = arith.constant 0 : index
      %c0_63 = arith.constant 0 : index
      %c640_64 = arith.constant 640 : index
      %107 = vector.load %arg6[%c0_62, %c0_63, %c640_64] : memref<1x1x896xf32, #tpu.memory_space<vmem>>, vector<1x1x128xf32>
      %108 = vector.shape_cast %107 : vector<1x1x128xf32> to vector<1x128xf32>
      %109 = vector.broadcast %108 : vector<1x128xf32> to vector<12x128xf32>
      %110 = arith.mulf %106, %109 : vector<12x128xf32>
      %c640_i32 = arith.constant 640 : i32
      %111 = arith.addi %13, %c640_i32 : i32
      %112 = vector.broadcast %111 : i32 to vector<1x128xi32>
      %113 = arith.addi %112, %14 : vector<1x128xi32>
      %c960_i32_65 = arith.constant 960 : i32
      %114 = vector.broadcast %c960_i32_65 : i32 to vector<1x128xi32>
      %115 = arith.cmpi slt, %113, %114 : vector<1x128xi32>
      %cst_66 = arith.constant 0.000000e+00 : f32
      %116 = vector.shape_cast %115 : vector<1x128xi1> to vector<1x128xi1>
      %117 = vector.broadcast %116 : vector<1x128xi1> to vector<12x128xi1>
      %118 = vector.broadcast %cst_66 : f32 to vector<12x128xf32>
      %119 = arith.select %117, %110, %118 : vector<12x128xi1>, vector<12x128xf32>
      %c0_67 = arith.constant 0 : index
      %c0_68 = arith.constant 0 : index
      %120 = vector.load %arg8[%c0_67, %c0_68] : memref<12x128xf32, #tpu.memory_space<vmem>>, vector<12x128xf32>
      %121 = arith.addf %120, %119 : vector<12x128xf32>
      %c0_69 = arith.constant 0 : index
      %c0_70 = arith.constant 0 : index
      %122 = vector.load %arg8[%c0_69, %c0_70] : memref<12x128xf32, #tpu.memory_space<vmem>>, vector<12x128xf32>
      tpu.vector_store %arg8[%c0_69, %c0_70], %121 {strides = array<i32>} : memref<12x128xf32, #tpu.memory_space<vmem>>, vector<12x128xf32>,
      %c0_71 = arith.constant 0 : index
      %c0_72 = arith.constant 0 : index
      %c768 = arith.constant 768 : index
      %123 = vector.load %arg4[%c0_71, %c0_72, %c768] : memref<1x12x896xf32, #tpu.memory_space<vmem>>, vector<1x12x128xf32>
      %124 = vector.shape_cast %123 : vector<1x12x128xf32> to vector<12x128xf32>
      %c0_73 = arith.constant 0 : index
      %c0_74 = arith.constant 0 : index
      %c768_75 = arith.constant 768 : index
      %125 = vector.load %arg6[%c0_73, %c0_74, %c768_75] : memref<1x1x896xf32, #tpu.memory_space<vmem>>, vector<1x1x128xf32>
      %126 = vector.shape_cast %125 : vector<1x1x128xf32> to vector<1x128xf32>
      %127 = vector.broadcast %126 : vector<1x128xf32> to vector<12x128xf32>
      %128 = arith.mulf %124, %127 : vector<12x128xf32>
      %c768_i32 = arith.constant 768 : i32
      %129 = arith.addi %13, %c768_i32 : i32
      %130 = vector.broadcast %129 : i32 to vector<1x128xi32>
      %131 = arith.addi %130, %14 : vector<1x128xi32>
      %c960_i32_76 = arith.constant 960 : i32
      %132 = vector.broadcast %c960_i32_76 : i32 to vector<1x128xi32>
      %133 = arith.cmpi slt, %131, %132 : vector<1x128xi32>
      %cst_77 = arith.constant 0.000000e+00 : f32
      %134 = vector.shape_cast %133 : vector<1x128xi1> to vector<1x128xi1>
      %135 = vector.broadcast %134 : vector<1x128xi1> to vector<12x128xi1>
      %136 = vector.broadcast %cst_77 : f32 to vector<12x128xf32>
      %137 = arith.select %135, %128, %136 : vector<12x128xi1>, vector<12x128xf32>
      %c0_78 = arith.constant 0 : index
      %c0_79 = arith.constant 0 : index
      %138 = vector.load %arg8[%c0_78, %c0_79] : memref<12x128xf32, #tpu.memory_space<vmem>>, vector<12x128xf32>
      %139 = arith.addf %138, %137 : vector<12x128xf32>
      %c0_80 = arith.constant 0 : index
      %c0_81 = arith.constant 0 : index
      %140 = vector.load %arg8[%c0_80, %c0_81] : memref<12x128xf32, #tpu.memory_space<vmem>>, vector<12x128xf32>
      tpu.vector_store %arg8[%c0_80, %c0_81], %139 {strides = array<i32>} : memref<12x128xf32, #tpu.memory_space<vmem>>, vector<12x128xf32>,
    } else {
    }
    %c2_i32 = arith.constant 2 : i32
    %9 = arith.cmpi eq, %arg2, %c2_i32 : i32
    %10 = arith.extui %9 : i1 to i32
    %c0_i32_4 = arith.constant 0 : i32
    %11 = arith.cmpi ne, %10, %c0_i32_4 : i32
    scf.if %11 {
      %c0 = arith.constant 0 : index
      %c0_5 = arith.constant 0 : index
      %12 = vector.load %arg8[%c0, %c0_5] : memref<12x128xf32, #tpu.memory_space<vmem>>, vector<12x128xf32>
      %cst = arith.constant dense<0.000000e+00> : vector<12xf32>
      %13 = vector.multi_reduction <add>, %12, %cst [1] : vector<12x128xf32> to vector<12xf32>
      %14 = vector.shape_cast %13 : vector<12xf32> to vector<12x1xf32>
      %c0_6 = arith.constant 0 : index
      %c0_7 = arith.constant 0 : index
      %c0_8 = arith.constant 0 : index
      %15 = vector.load %arg7[%c0_6, %c0_7, %c0_8] : memref<1x12x1xf32, #tpu.memory_space<vmem>>, vector<1x12x1xf32>
      %16 = vector.shape_cast %15 : vector<1x12x1xf32> to vector<12x1xf32>
      %17 = vector.shape_cast %14 : vector<12x1xf32> to vector<1x12x1xf32>
      tpu.vector_store %arg7[%c0_6, %c0_7, %c0_8], %17 {strides = array<i32>} : memref<1x12x1xf32, #tpu.memory_space<vmem>>, vector<1x12x1xf32>,
    } else {
    }
    return
  }
  func.func @transform_0(%arg0: i32, %arg1: i32, %arg2: i32) -> (i32, i32, i32) {
    %c0_i32 = arith.constant 0 : i32
    %0 = arith.minsi %arg2, %c0_i32 : i32
    %c0_i32_0 = arith.constant 0 : i32
    return %arg0, %arg1, %0 : i32, i32, i32
  }
  func.func @transform_1(%arg0: i32, %arg1: i32, %arg2: i32) -> (i32, i32, i32) {
    %c1_i32 = arith.constant 1 : i32
    %0 = arith.subi %arg2, %c1_i32 : i32
    %c0_i32 = arith.constant 0 : i32
    %1 = arith.maxsi %0, %c0_i32 : i32
    %c0_i32_0 = arith.constant 0 : i32
    return %arg0, %arg1, %1 : i32, i32, i32
  }
  func.func @transform_2(%arg0: i32, %arg1: i32, %arg2: i32) -> (i32, i32, i32) {
    %c0_i32 = arith.constant 0 : i32
    %0 = arith.minsi %arg2, %c0_i32 : i32
    %c0_i32_0 = arith.constant 0 : i32
    %c0_i32_1 = arith.constant 0 : i32
    return %arg0, %c0_i32_0, %0 : i32, i32, i32
  }
  func.func @transform_3(%arg0: i32, %arg1: i32, %arg2: i32) -> (i32, i32, i32) {
    %c1_i32 = arith.constant 1 : i32
    %0 = arith.subi %arg2, %c1_i32 : i32
    %c0_i32 = arith.constant 0 : i32
    %1 = arith.maxsi %0, %c0_i32 : i32
    %c0_i32_0 = arith.constant 0 : i32
    %c0_i32_1 = arith.constant 0 : i32
    return %arg0, %c0_i32_0, %1 : i32, i32, i32
  }
  func.func @transform_4(%arg0: i32, %arg1: i32, %arg2: i32) -> (i32, i32, i32) {
    %c0_i32 = arith.constant 0 : i32
    %c0_i32_0 = arith.constant 0 : i32
    return %arg0, %arg1, %c0_i32 : i32, i32, i32
  }
}

</mosaic_0001>

<llo_original>
// kernel: squeeze.3
$region0: #{squeeze.3}
  %s0 = inlined_call_operand.vmem [shape: f32[2,15], index: 0, kind: input, shape index: {}]
  %s1 = inlined_call_operand.vmem [shape: f32[2,5,3], index: 1, kind: output, shape index: {}]
  $region1: #{squeeze.3} parent=0
    #allocation0 [shape = 'u8[4096]{0}', space=vmem, size = 0x1000, scoped, tag = 'scoped mem for input reshape']
    %s3 = sshllo.u32 0, 2
    %v4 = vld [vmem:[%s0] sm:%s3]
    %5 = vst [vmem:[#allocation0] sm:%s3] %v4
    %v6 = vld [vmem:[#allocation0] sm:$0x3]
    %vm7 = vcmask 23552
    %8 = vst.msk [vmem:[%s1] ss:$8 sm:$0x3] %vm7, %v6
    %v9 = vld [vmem:[#allocation0] sm:$0x3]
    %10 = vrot.lane.b32.xlu0 %v9, 125
    %v11 = vpop.permute.xlu0 %10
    %vm12 = vcmask 23552
    %s13 = scalar_lea.vmem %s1, 1
    %14 = vst.msk [vmem:[%s13] ss:$8 sm:$0x3] %vm12, %v11
    %v15 = vld [vmem:[#allocation0] sm:$0x3]
    %16 = vrot.lane.b32.xlu0 %v15, 122
    %v17 = vpop.permute.xlu0 %16
    %vm18 = vcmask 23552
    %s19 = scalar_lea.vmem %s1, 2
    %20 = vst.msk [vmem:[%s19] ss:$8 sm:$0x3] %vm18, %v17
    %v21 = vld [vmem:[#allocation0] sm:$0x3]
    %22 = vrot.lane.b32.xlu0 %v21, 119
    %v23 = vpop.permute.xlu0 %22
    %vm24 = vcmask 23552
    %s25 = scalar_lea.vmem %s1, 3
    %26 = vst.msk [vmem:[%s25] ss:$8 sm:$0x3] %vm24, %v23
    %v27 = vld [vmem:[#allocation0] sm:$0x3]
    %28 = vrot.lane.b32.xlu0 %v27, 116
    %v29 = vpop.permute.xlu0 %28
    %vm30 = vcmask 23552
    %s31 = scalar_lea.vmem %s1, 4
    %32 = vst.msk [vmem:[%s31] ss:$8 sm:$0x3] %vm30, %v29

// kernel: bpnet_forward.4
$region0: #{bpnet_forward.4}
  #allocation0 [shape = 'u32[]', space=smem, size = 0x4, offset = 0x4, fixed_abs, tag = 'smem constant byte address 0x4 - core index']
  #allocation1 [shape = 'u32[144,128]{1,0:T(1,128)}', space=vmem, size = 0x12000, scoped, tag = 'internal scratch']
  #allocation2 [shape = 'f32[1,1]{1,0:T(1,128)S(1)}', space=vmem, size = 0x200, scoped, tag = 'scoped memory for bpnet_forward.4']
  %s0 = inlined_call_operand.vmem [shape: f32[8,192], index: 0, kind: input, shape index: {}]
  %s1 = inlined_call_operand.vmem [shape: f32[192,100], index: 1, kind: input, shape index: {}]
  %s2 = inlined_call_operand.vmem [shape: f32[100,40], index: 2, kind: input, shape index: {}]
  %s3 = inlined_call_operand.vmem [shape: f32[40,10], index: 3, kind: input, shape index: {}]
  %s4 = inlined_call_operand.vmem [shape: f32[100,192], index: 4, kind: input, shape index: {}]
  %s5 = inlined_call_operand.vmem [shape: f32[40,100], index: 5, kind: input, shape index: {}]
  %s6 = inlined_call_operand.vmem [shape: f32[10,40], index: 6, kind: input, shape index: {}]
  %s7 = inlined_call_operand.vmem [shape: f32[1,10], index: 7, kind: input, shape index: {}]
  %s8 = inlined_call_operand.vmem [shape: f32[1,100], index: 8, kind: input, shape index: {}]
  %s9 = inlined_call_operand.vmem [shape: f32[1,40], index: 9, kind: input, shape index: {}]
  %s10 = inlined_call_operand.vmem [shape: f32[1,10], index: 10, kind: input, shape index: {}]
  %s11 = inlined_call_operand.<no memory space> [shape: f32[1,1], index: 11, kind: input, shape index: {}]
  %s12 = inlined_call_operand.vmem [shape: f32[8,192], index: 12, kind: output, shape index: {0}]
  %s13 = inlined_call_operand.vmem [shape: f32[8,1], index: 13, kind: output, shape index: {1}]
  %14 = xla_tuple %s12, %s13
  %s15 = sld [smem:[#allocation0]]
  $region66: #{bpnet_forward.4} parent=0
    _
  %s17 = ssub.s32 1, %s15
  %s18 = scalar_select 0, %s17, %s15
  %v19 = vstv %s11
  %20 = vst [vmem:[#allocation2] sm:$0x1] %v19
  // Predicated region
  $region2: #{bpnet_forward.4} parent=0 // pred_check
    _
  $region3: #{bpnet_forward.4} parent=0 // pred_check_branch
    %22 = sbr.rel (0) target = $region5
  $region4: #{bpnet_forward.4} parent=0 // pred_region
    _
  $region5: #{bpnet_forward.4} parent=0 // pred_fallthru
    _
  // Predicated region
  $region6: #{bpnet_forward.4} parent=0 // pred_check
    _
  $region7: #{bpnet_forward.4} parent=0 // pred_check_branch
    %24 = sbr.rel (0) target = $region9
  $region8: #{bpnet_forward.4} parent=0 // pred_region
    _
  $region9: #{bpnet_forward.4} parent=0 // pred_fallthru
    _
  // Predicated region
  $region10: #{bpnet_forward.4} parent=0 // pred_check
    _
  $region11: #{bpnet_forward.4} parent=0 // pred_check_branch
    %26 = sbr.rel (0) target = $region13
  $region12: #{bpnet_forward.4} parent=0 // pred_region
    _
  $region13: #{bpnet_forward.4} parent=0 // pred_fallthru
    _
  // Predicated region
  $region14: #{bpnet_forward.4} parent=0 // pred_check
    _
  $region15: #{bpnet_forward.4} parent=0 // pred_check_branch
    %28 = sbr.rel (0) target = $region17
  $region16: #{bpnet_forward.4} parent=0 // pred_region
    _
  $region17: #{bpnet_forward.4} parent=0 // pred_fallthru
    _
  // Predicated region
  $region18: #{bpnet_forward.4} parent=0 // pred_check
    _
  $region19: #{bpnet_forward.4} parent=0 // pred_check_branch
    %30 = sbr.rel (0) target = $region21
  $region20: #{bpnet_forward.4} parent=0 // pred_region
    _
  $region21: #{bpnet_forward.4} parent=0 // pred_fallthru
    _
  // Predicated region
  $region22: #{bpnet_forward.4} parent=0 // pred_check
    _
  $region23: #{bpnet_forward.4} parent=0 // pred_check_branch
    %32 = sbr.rel (0) target = $region25
  $region24: #{bpnet_forward.4} parent=0 // pred_region
    _
  $region25: #{bpnet_forward.4} parent=0 // pred_fallthru
    _
  // Predicated region
  $region26: #{bpnet_forward.4} parent=0 // pred_check
    _
  $region27: #{bpnet_forward.4} parent=0 // pred_check_branch
    %34 = sbr.rel (0) target = $region29
  $region28: #{bpnet_forward.4} parent=0 // pred_region
    _
  $region29: #{bpnet_forward.4} parent=0 // pred_fallthru
    _
  // Predicated region
  $region30: #{bpnet_forward.4} parent=0 // pred_check
    _
  $region31: #{bpnet_forward.4} parent=0 // pred_check_branch
    %36 = sbr.rel (0) target = $region33
  $region32: #{bpnet_forward.4} parent=0 // pred_region
    _
  $region33: #{bpnet_forward.4} parent=0 // pred_fallthru
    _
  // Predicated region
  $region34: #{bpnet_forward.4} parent=0 // pred_check
    _
  $region35: #{bpnet_forward.4} parent=0 // pred_check_branch
    %38 = sbr.rel (0) target = $region37
  $region36: #{bpnet_forward.4} parent=0 // pred_region
    _
  $region37: #{bpnet_forward.4} parent=0 // pred_fallthru
    _
  // Predicated region
  $region38: #{bpnet_forward.4} parent=0 // pred_check
    _
  $region39: #{bpnet_forward.4} parent=0 // pred_check_branch
    %40 = sbr.rel (0) target = $region41
  $region40: #{bpnet_forward.4} parent=0 // pred_region
    _
  $region41: #{bpnet_forward.4} parent=0 // pred_fallthru
    _
  // Predicated region
  $region42: #{bpnet_forward.4} parent=0 // pred_check
    _
  $region43: #{bpnet_forward.4} parent=0 // pred_check_branch
    %42 = sbr.rel (0) target = $region45
  $region44: #{bpnet_forward.4} parent=0 // pred_region
    _
  $region45: #{bpnet_forward.4} parent=0 // pred_fallthru
    _
  // Predicated region
  $region46: #{bpnet_forward.4} parent=0 // pred_check
    _
  $region47: #{bpnet_forward.4} parent=0 // pred_check_branch
    %44 = sbr.rel (0) target = $region49
  $region48: #{bpnet_forward.4} parent=0 // pred_region
    _
  $region49: #{bpnet_forward.4} parent=0 // pred_fallthru
    _
  %v45 = vld [vmem:[%s0] sm:$0xff]
  %v46 = vld [vmem:[%s0 + $0x8] sm:$0xff]
  %v47 = vld [vmem:[%s7] sm:$0x1]
  %v48 = vld [vmem:[%s1] sm:$0xff]
  %v49 = vld [vmem:[%s1 + $0x8] sm:$0xff]
  %v50 = vld [vmem:[%s1 + $0x10] sm:$0xff]
  %v51 = vld [vmem:[%s1 + $0x18] sm:$0xff]
  %v52 = vld [vmem:[%s1 + $0x20] sm:$0xff]
  %v53 = vld [vmem:[%s1 + $0x28] sm:$0xff]
  %v54 = vld [vmem:[%s1 + $0x30] sm:$0xff]
  %v55 = vld [vmem:[%s1 + $0x38] sm:$0xff]
  %v56 = vld [vmem:[%s1 + $0x40] sm:$0xff]
  %v57 = vld [vmem:[%s1 + $0x48] sm:$0xff]
  %v58 = vld [vmem:[%s1 + $0x50] sm:$0xff]
  %v59 = vld [vmem:[%s1 + $0x58] sm:$0xff]
  %v60 = vld [vmem:[%s1 + $0x60] sm:$0xff]
  %v61 = vld [vmem:[%s1 + $0x68] sm:$0xff]
  %v62 = vld [vmem:[%s1 + $0x70] sm:$0xff]
  %v63 = vld [vmem:[%s1 + $0x78] sm:$0xff]
  %v64 = vld [vmem:[%s1 + $0x80] sm:$0xff]
  %v65 = vld [vmem:[%s1 + $0x88] sm:$0xff]
  %v66 = vld [vmem:[%s1 + $0x90] sm:$0xff]
  %v67 = vld [vmem:[%s1 + $0x98] sm:$0xff]
  %v68 = vld [vmem:[%s1 + $0xa0] sm:$0xff]
  %v69 = vld [vmem:[%s1 + $0xa8] sm:$0xff]
  %v70 = vld [vmem:[%s1 + $0xb0] sm:$0xff]
  %v71 = vld [vmem:[%s1 + $0xb8] sm:$0xff]
  %v72 = vld [vmem:[%s8] sm:$0x1]
  %v74 = vlaneseq
  %v75 = vshrl.u32 %v74, 7
  %v76 = vsub.s32 0, %v75
  %v77 = vrot.slane %v72, %v76
  %vm79 = vcmask 523264
  %v81 = vsel %vm79, %v46, 0
  %83 = vmatprep.subr.mxu0 0.0
  %84 = vmatpush1.msra.mxu0 %v48
  %85 = vmatprep.subr.mxu0 0.0
  %86 = vmatpush1.msra.mxu0 %v49
  %87 = vmatprep.subr.mxu0 0.0
  %88 = vmatpush1.msra.mxu0 %v50
  %89 = vmatprep.subr.mxu0 0.0
  %90 = vmatpush1.msra.mxu0 %v51
  %91 = vmatprep.subr.mxu0 0.0
  %92 = vmatpush1.msra.mxu0 %v52
  %93 = vmatprep.subr.mxu0 0.0
  %94 = vmatpush1.msra.mxu0 %v53
  %95 = vmatprep.subr.mxu0 0.0
  %96 = vmatpush1.msra.mxu0 %v54
  %97 = vmatprep.subr.mxu0 0.0
  %98 = vmatpush1.msra.mxu0 %v55
  %99 = vmatprep.subr.mxu0 0.0
  %100 = vmatpush1.msra.mxu0 %v56
  %101 = vmatprep.subr.mxu0 0.0
  %102 = vmatpush1.msra.mxu0 %v57
  %103 = vmatprep.subr.mxu0 0.0
  %104 = vmatpush1.msra.mxu0 %v58
  %105 = vmatprep.subr.mxu0 0.0
  %106 = vmatpush1.msra.mxu0 %v59
  %107 = vmatprep.subr.mxu0 0.0
  %108 = vmatpush1.msra.mxu0 %v60
  %109 = vmatprep.subr.mxu0 0.0
  %110 = vmatpush1.msra.mxu0 %v61
  %111 = vmatprep.subr.mxu0 0.0
  %112 = vmatpush1.msra.mxu0 %v62
  %113 = vmatprep.subr.mxu0 0.0
  %114 = vmatpush1.msra.mxu0 %v63
  %115 = vmatprep.subr.mxu0 0.0
  %116 = vmatpush1.msra.mxu0 %v64
  %117 = vmatprep.subr.mxu0 0.0
  %118 = vmatpush1.msra.mxu0 %v65
  %119 = vmatprep.subr.mxu0 0.0
  %120 = vmatpush1.msra.mxu0 %v66
  %121 = vmatprep.subr.mxu0 0.0
  %122 = vmatpush1.msra.mxu0 %v67
  %123 = vmatprep.subr.mxu0 0.0
  %124 = vmatpush1.msra.mxu0 %v68
  %125 = vmatprep.subr.mxu0 0.0
  %126 = vmatpush1.msra.mxu0 %v69
  %127 = vmatprep.subr.mxu0 0.0
  %128 = vmatpush1.msra.mxu0 %v70
  %129 = vmatprep.subr.mxu0 0.0
  %130 = vmatpush1.msra.mxu0 %v71
  %131 = vmatprep.subr.mxu0 0.0
  %132 = vmatpush1.msra.mxu0 0.0
  %133 = vmatprep.subr.mxu0 0.0
  %134 = vmatpush1.msra.mxu0 0.0
  %135 = vmatprep.subr.mxu0 0.0
  %136 = vmatpush1.msra.mxu0 0.0
  %137 = vmatprep.subr.mxu0 0.0
  %138 = vmatpush1.msra.mxu0 0.0
  %139 = vmatprep.subr.mxu0 0.0
  %140 = vmatpush1.msra.mxu0 0.0
  %141 = vmatprep.subr.mxu0 0.0
  %142 = vmatpush1.msra.mxu0 0.0
  %143 = vmatprep.subr.mxu0 0.0
  %144 = vmatpush1.msra.mxu0 0.0
  %145 = vmatprep.subr.mxu0 0.0
  %146 = vmatpush1.msra.mxu0 0.0
  %147 = vmatprep.mubr.f32.mxu0 %v81
  %148 = vmatmul.mubr.f32.gmra.mrb[0].mxu0 %v45
  %v149 = vpop.f32.mrb[0].mxu0
  %v150 = vadd.f32 %v77, %v149
  %v151 = vpop.f32.mrb[0].mxu0
  %152 = vdwg.mxu0
  %v153 = vtanh.pop %v150
  %v154 = vld [vmem:[%s2] sm:$0xff]
  %v155 = vld [vmem:[%s2 + $0x8] sm:$0xff]
  %v156 = vld [vmem:[%s2 + $0x10] sm:$0xff]
  %v157 = vld [vmem:[%s2 + $0x18] sm:$0xff]
  %v158 = vld [vmem:[%s2 + $0x20] sm:$0xff]
  %v159 = vld [vmem:[%s2 + $0x28] sm:$0xff]
  %v160 = vld [vmem:[%s2 + $0x30] sm:$0xff]
  %v161 = vld [vmem:[%s2 + $0x38] sm:$0xff]
  %v162 = vld [vmem:[%s2 + $0x40] sm:$0xff]
  %v163 = vld [vmem:[%s2 + $0x48] sm:$0xff]
  %v164 = vld [vmem:[%s2 + $0x50] sm:$0xff]
  %v165 = vld [vmem:[%s2 + $0x58] sm:$0xff]
  %v166 = vld [vmem:[%s2 + $0x60] sm:$0xf]
  %v167 = vld [vmem:[%s9] sm:$0x1]
  %v169 = vlaneseq
  %v170 = vshrl.u32 %v169, 7
  %v171 = vsub.s32 0, %v170
  %v172 = vrot.slane %v167, %v171
  %vm174 = vcmask 818176
  %v176 = vsel %vm174, %v153, 0
  %vm178 = vcmask 1043456
  %v180 = vsel %vm178, %v166, 0
  %182 = vmatprep.subr.mxu0 0.0
  %183 = vmatpush1.msra.mxu0 %v154
  %184 = vmatprep.subr.mxu0 0.0
  %185 = vmatpush1.msra.mxu0 %v155
  %186 = vmatprep.subr.mxu0 0.0
  %187 = vmatpush1.msra.mxu0 %v156
  %188 = vmatprep.subr.mxu0 0.0
  %189 = vmatpush1.msra.mxu0 %v157
  %190 = vmatprep.subr.mxu0 0.0
  %191 = vmatpush1.msra.mxu0 %v158
  %192 = vmatprep.subr.mxu0 0.0
  %193 = vmatpush1.msra.mxu0 %v159
  %194 = vmatprep.subr.mxu0 0.0
  %195 = vmatpush1.msra.mxu0 %v160
  %196 = vmatprep.subr.mxu0 0.0
  %197 = vmatpush1.msra.mxu0 %v161
  %198 = vmatprep.subr.mxu0 0.0
  %199 = vmatpush1.msra.mxu0 %v162
  %200 = vmatprep.subr.mxu0 0.0
  %201 = vmatpush1.msra.mxu0 %v163
  %202 = vmatprep.subr.mxu0 0.0
  %203 = vmatpush1.msra.mxu0 %v164
  %204 = vmatprep.subr.mxu0 0.0
  %205 = vmatpush1.msra.mxu0 %v165
  %206 = vmatprep.subr.mxu0 0.0
  %207 = vmatpush1.msra.mxu0 %v180
  %208 = vmatprep.subr.mxu0 0.0
  %209 = vmatpush1.msra.mxu0 0.0
  %210 = vmatprep.subr.mxu0 0.0
  %211 = vmatpush1.msra.mxu0 0.0
  %212 = vmatprep.subr.mxu0 0.0
  %213 = vmatpush1.msra.mxu0 0.0
  %214 = vmatprep.subr.mxu0 0.0
  %215 = vmatpush1.msra.mxu0 0.0
  %216 = vmatprep.subr.mxu0 0.0
  %217 = vmatpush1.msra.mxu0 0.0
  %218 = vmatprep.subr.mxu0 0.0
  %219 = vmatpush1.msra.mxu0 0.0
  %220 = vmatprep.subr.mxu0 0.0
  %221 = vmatpush1.msra.mxu0 0.0
  %222 = vmatprep.subr.mxu0 0.0
  %223 = vmatpush1.msra.mxu0 0.0
  %224 = vmatprep.subr.mxu0 0.0
  %225 = vmatpush1.msra.mxu0 0.0
  %226 = vmatprep.subr.mxu0 0.0
  %227 = vmatpush1.msra.mxu0 0.0
  %228 = vmatprep.subr.mxu0 0.0
  %229 = vmatpush1.msra.mxu0 0.0
  %230 = vmatprep.subr.mxu0 0.0
  %231 = vmatpush1.msra.mxu0 0.0
  %232 = vmatprep.subr.mxu0 0.0
  %233 = vmatpush1.msra.mxu0 0.0
  %234 = vmatprep.subr.mxu0 0.0
  %235 = vmatpush1.msra.mxu0 0.0
  %236 = vmatprep.subr.mxu0 0.0
  %237 = vmatpush1.msra.mxu0 0.0
  %238 = vmatprep.subr.mxu0 0.0
  %239 = vmatpush1.msra.mxu0 0.0
  %240 = vmatprep.subr.mxu0 0.0
  %241 = vmatpush1.msra.mxu0 0.0
  %242 = vmatprep.subr.mxu0 0.0
  %243 = vmatpush1.msra.mxu0 0.0
  %244 = vmatprep.subr.mxu0 0.0
  %245 = vmatpush1.msra.mxu0 0.0
  %246 = vmatprep.mubr.f32.mxu0 0.0
  %247 = vmatmul.mubr.f32.gmra.mrb[0].mxu0 %v176
  %v248 = vpop.f32.mrb[0].mxu0
  %v249 = vadd.f32 %v172, %v248
  %v250 = vpop.f32.mrb[0].mxu0
  %251 = vdwg.mxu0
  %v252 = vtanh.pop %v249
  %v253 = vld [vmem:[%s3] sm:$0xff]
  %v254 = vld [vmem:[%s3 + $0x8] sm:$0xff]
  %v255 = vld [vmem:[%s3 + $0x10] sm:$0xff]
  %v256 = vld [vmem:[%s3 + $0x18] sm:$0xff]
  %v257 = vld [vmem:[%s3 + $0x20] sm:$0xff]
  %v258 = vld [vmem:[%s10] sm:$0x1]
  %v260 = vlaneseq
  %v261 = vshrl.u32 %v260, 7
  %v262 = vsub.s32 0, %v261
  %v263 = vrot.slane %v258, %v262
  %vm265 = vcmask 326656
  %v267 = vsel %vm265, %v252, 0
  %269 = vmatprep.subr.mxu0 0.0
  %270 = vmatpush1.msra.mxu0 %v253
  %271 = vmatprep.subr.mxu0 0.0
  %272 = vmatpush1.msra.mxu0 %v254
  %273 = vmatprep.subr.mxu0 0.0
  %274 = vmatpush1.msra.mxu0 %v255
  %275 = vmatprep.subr.mxu0 0.0
  %276 = vmatpush1.msra.mxu0 %v256
  %277 = vmatprep.subr.mxu0 0.0
  %278 = vmatpush1.msra.mxu0 %v257
  %279 = vmatprep.subr.mxu0 0.0
  %280 = vmatpush1.msra.mxu0 0.0
  %281 = vmatprep.subr.mxu0 0.0
  %282 = vmatpush1.msra.mxu0 0.0
  %283 = vmatprep.subr.mxu0 0.0
  %284 = vmatpush1.msra.mxu0 0.0
  %285 = vmatprep.subr.mxu0 0.0
  %286 = vmatpush1.msra.mxu0 0.0
  %287 = vmatprep.subr.mxu0 0.0
  %288 = vmatpush1.msra.mxu0 0.0
  %289 = vmatprep.subr.mxu0 0.0
  %290 = vmatpush1.msra.mxu0 0.0
  %291 = vmatprep.subr.mxu0 0.0
  %292 = vmatpush1.msra.mxu0 0.0
  %293 = vmatprep.subr.mxu0 0.0
  %294 = vmatpush1.msra.mxu0 0.0
  %295 = vmatprep.subr.mxu0 0.0
  %296 = vmatpush1.msra.mxu0 0.0
  %297 = vmatprep.subr.mxu0 0.0
  %298 = vmatpush1.msra.mxu0 0.0
  %299 = vmatprep.subr.mxu0 0.0
  %300 = vmatpush1.msra.mxu0 0.0
  %301 = vmatprep.subr.mxu0 0.0
  %302 = vmatpush1.msra.mxu0 0.0
  %303 = vmatprep.subr.mxu0 0.0
  %304 = vmatpush1.msra.mxu0 0.0
  %305 = vmatprep.subr.mxu0 0.0
  %306 = vmatpush1.msra.mxu0 0.0
  %307 = vmatprep.subr.mxu0 0.0
  %308 = vmatpush1.msra.mxu0 0.0
  %309 = vmatprep.subr.mxu0 0.0
  %310 = vmatpush1.msra.mxu0 0.0
  %311 = vmatprep.subr.mxu0 0.0
  %312 = vmatpush1.msra.mxu0 0.0
  %313 = vmatprep.subr.mxu0 0.0
  %314 = vmatpush1.msra.mxu0 0.0
  %315 = vmatprep.subr.mxu0 0.0
  %316 = vmatpush1.msra.mxu0 0.0
  %317 = vmatprep.subr.mxu0 0.0
  %318 = vmatpush1.msra.mxu0 0.0
  %319 = vmatprep.subr.mxu0 0.0
  %320 = vmatpush1.msra.mxu0 0.0
  %321 = vmatprep.subr.mxu0 0.0
  %322 = vmatpush1.msra.mxu0 0.0
  %323 = vmatprep.subr.mxu0 0.0
  %324 = vmatpush1.msra.mxu0 0.0
  %325 = vmatprep.subr.mxu0 0.0
  %326 = vmatpush1.msra.mxu0 0.0
  %327 = vmatprep.subr.mxu0 0.0
  %328 = vmatpush1.msra.mxu0 0.0
  %329 = vmatprep.subr.mxu0 0.0
  %330 = vmatpush1.msra.mxu0 0.0
  %331 = vmatprep.subr.mxu0 0.0
  %332 = vmatpush1.msra.mxu0 0.0
  %333 = vmatprep.mubr.f32.mxu0 0.0
  %334 = vmatmul.mubr.f32.gmra.mrb[0].mxu0 %v267
  %v335 = vpop.f32.mrb[0].mxu0
  %v336 = vadd.f32 %v263, %v335
  %v337 = vpop.f32.mrb[0].mxu0
  %338 = vdwg.mxu0
  %v339 = vtanh.pop %v336
  %v341 = vlaneseq
  %v342 = vshrl.u32 %v341, 7
  %v343 = vsub.s32 0, %v342
  %v344 = vrot.slane %v47, %v343
  %v346 = vmul.f32 %v339, %v344
  %vm347 = vcmask 80896
  %v348 = vsel %vm347, %v346, 0.0
  %349 = vadd.xlane.f32.xlu0 %v348
  %v350 = vpop.xlane.xlu0 %349
  %v351 = vld [vmem:[#allocation2] sm:$0x1]
  %v353 = vlaneseq
  %v354 = vshrl.u32 %v353, 7
  %v355 = vsub.s32 0, %v354
  %v356 = vrot.slane %v351, %v355
  %v358 = vadd.f32 %v350, %v356
  %vm359 = vcmask 7168
  %360 = vst.msk [vmem:[%s13] sm:$0xff] %vm359, %v358
  %v361 = vmul.f32 %v153, %v153
  %v362 = vsub.f32 1.0, %v361
  %v363 = vmul.f32 %v252, %v252
  %v364 = vsub.f32 1.0, %v363
  %v365 = vmul.f32 %v339, %v339
  %v366 = vsub.f32 1.0, %v365
  %v367 = vmul.f32 %v366, %v344
  %v368 = vld [vmem:[%s6] sm:$0xff]
  %v369 = vld [vmem:[%s6 + $0x8] sm:$0x3]
  %v371 = vsel %vm347, %v367, 0
  %vm373 = vcmask 1041408
  %v375 = vsel %vm373, %v369, 0
  %377 = vmatprep.subr.mxu0 0.0
  %378 = vmatpush1.msra.mxu0 %v368
  %379 = vmatprep.subr.mxu0 0.0
  %380 = vmatpush1.msra.mxu0 %v375
  %381 = vmatprep.subr.mxu0 0.0
  %382 = vmatpush1.msra.mxu0 0.0
  %383 = vmatprep.subr.mxu0 0.0
  %384 = vmatpush1.msra.mxu0 0.0
  %385 = vmatprep.subr.mxu0 0.0
  %386 = vmatpush1.msra.mxu0 0.0
  %387 = vmatprep.subr.mxu0 0.0
  %388 = vmatpush1.msra.mxu0 0.0
  %389 = vmatprep.subr.mxu0 0.0
  %390 = vmatpush1.msra.mxu0 0.0
  %391 = vmatprep.subr.mxu0 0.0
  %392 = vmatpush1.msra.mxu0 0.0
  %393 = vmatprep.subr.mxu0 0.0
  %394 = vmatpush1.msra.mxu0 0.0
  %395 = vmatprep.subr.mxu0 0.0
  %396 = vmatpush1.msra.mxu0 0.0
  %397 = vmatprep.subr.mxu0 0.0
  %398 = vmatpush1.msra.mxu0 0.0
  %399 = vmatprep.subr.mxu0 0.0
  %400 = vmatpush1.msra.mxu0 0.0
  %401 = vmatprep.subr.mxu0 0.0
  %402 = vmatpush1.msra.mxu0 0.0
  %403 = vmatprep.subr.mxu0 0.0
  %404 = vmatpush1.msra.mxu0 0.0
  %405 = vmatprep.subr.mxu0 0.0
  %406 = vmatpush1.msra.mxu0 0.0
  %407 = vmatprep.subr.mxu0 0.0
  %408 = vmatpush1.msra.mxu0 0.0
  %409 = vmatprep.subr.mxu0 0.0
  %410 = vmatpush1.msra.mxu0 0.0
  %411 = vmatprep.subr.mxu0 0.0
  %412 = vmatpush1.msra.mxu0 0.0
  %413 = vmatprep.subr.mxu0 0.0
  %414 = vmatpush1.msra.mxu0 0.0
  %415 = vmatprep.subr.mxu0 0.0
  %416 = vmatpush1.msra.mxu0 0.0
  %417 = vmatprep.subr.mxu0 0.0
  %418 = vmatpush1.msra.mxu0 0.0
  %419 = vmatprep.subr.mxu0 0.0
  %420 = vmatpush1.msra.mxu0 0.0
  %421 = vmatprep.subr.mxu0 0.0
  %422 = vmatpush1.msra.mxu0 0.0
  %423 = vmatprep.subr.mxu0 0.0
  %424 = vmatpush1.msra.mxu0 0.0
  %425 = vmatprep.subr.mxu0 0.0
  %426 = vmatpush1.msra.mxu0 0.0
  %427 = vmatprep.subr.mxu0 0.0
  %428 = vmatpush1.msra.mxu0 0.0
  %429 = vmatprep.subr.mxu0 0.0
  %430 = vmatpush1.msra.mxu0 0.0
  %431 = vmatprep.subr.mxu0 0.0
  %432 = vmatpush1.msra.mxu0 0.0
  %433 = vmatprep.subr.mxu0 0.0
  %434 = vmatpush1.msra.mxu0 0.0
  %435 = vmatprep.subr.mxu0 0.0
  %436 = vmatpush1.msra.mxu0 0.0
  %437 = vmatprep.subr.mxu0 0.0
  %438 = vmatpush1.msra.mxu0 0.0
  %439 = vmatprep.subr.mxu0 0.0
  %440 = vmatpush1.msra.mxu0 0.0
  %441 = vmatprep.mubr.f32.mxu0 0.0
  %442 = vmatmul.mubr.f32.gmra.mrb[0].mxu0 %v371
  %v443 = vpop.f32.mrb[0].mxu0
  %v444 = vadd.f32 0.0, %v443
  %v445 = vpop.f32.mrb[0].mxu0
  %446 = vdwg.mxu0
  %v447 = vmul.f32 %v364, %v444
  %v448 = vld [vmem:[%s5] sm:$0xff]
  %v449 = vld [vmem:[%s5 + $0x8] sm:$0xff]
  %v450 = vld [vmem:[%s5 + $0x10] sm:$0xff]
  %v451 = vld [vmem:[%s5 + $0x18] sm:$0xff]
  %v452 = vld [vmem:[%s5 + $0x20] sm:$0xff]
  %v454 = vsel %vm265, %v447, 0
  %456 = vmatprep.subr.mxu0 0.0
  %457 = vmatpush1.msra.mxu0 %v448
  %458 = vmatprep.subr.mxu0 0.0
  %459 = vmatpush1.msra.mxu0 %v449
  %460 = vmatprep.subr.mxu0 0.0
  %461 = vmatpush1.msra.mxu0 %v450
  %462 = vmatprep.subr.mxu0 0.0
  %463 = vmatpush1.msra.mxu0 %v451
  %464 = vmatprep.subr.mxu0 0.0
  %465 = vmatpush1.msra.mxu0 %v452
  %466 = vmatprep.subr.mxu0 0.0
  %467 = vmatpush1.msra.mxu0 0.0
  %468 = vmatprep.subr.mxu0 0.0
  %469 = vmatpush1.msra.mxu0 0.0
  %470 = vmatprep.subr.mxu0 0.0
  %471 = vmatpush1.msra.mxu0 0.0
  %472 = vmatprep.subr.mxu0 0.0
  %473 = vmatpush1.msra.mxu0 0.0
  %474 = vmatprep.subr.mxu0 0.0
  %475 = vmatpush1.msra.mxu0 0.0
  %476 = vmatprep.subr.mxu0 0.0
  %477 = vmatpush1.msra.mxu0 0.0
  %478 = vmatprep.subr.mxu0 0.0
  %479 = vmatpush1.msra.mxu0 0.0
  %480 = vmatprep.subr.mxu0 0.0
  %481 = vmatpush1.msra.mxu0 0.0
  %482 = vmatprep.subr.mxu0 0.0
  %483 = vmatpush1.msra.mxu0 0.0
  %484 = vmatprep.subr.mxu0 0.0
  %485 = vmatpush1.msra.mxu0 0.0
  %486 = vmatprep.subr.mxu0 0.0
  %487 = vmatpush1.msra.mxu0 0.0
  %488 = vmatprep.subr.mxu0 0.0
  %489 = vmatpush1.msra.mxu0 0.0
  %490 = vmatprep.subr.mxu0 0.0
  %491 = vmatpush1.msra.mxu0 0.0
  %492 = vmatprep.subr.mxu0 0.0
  %493 = vmatpush1.msra.mxu0 0.0
  %494 = vmatprep.subr.mxu0 0.0
  %495 = vmatpush1.msra.mxu0 0.0
  %496 = vmatprep.subr.mxu0 0.0
  %497 = vmatpush1.msra.mxu0 0.0
  %498 = vmatprep.subr.mxu0 0.0
  %499 = vmatpush1.msra.mxu0 0.0
  %500 = vmatprep.subr.mxu0 0.0
  %501 = vmatpush1.msra.mxu0 0.0
  %502 = vmatprep.subr.mxu0 0.0
  %503 = vmatpush1.msra.mxu0 0.0
  %504 = vmatprep.subr.mxu0 0.0
  %505 = vmatpush1.msra.mxu0 0.0
  %506 = vmatprep.subr.mxu0 0.0
  %507 = vmatpush1.msra.mxu0 0.0
  %508 = vmatprep.subr.mxu0 0.0
  %509 = vmatpush1.msra.mxu0 0.0
  %510 = vmatprep.subr.mxu0 0.0
  %511 = vmatpush1.msra.mxu0 0.0
  %512 = vmatprep.subr.mxu0 0.0
  %513 = vmatpush1.msra.mxu0 0.0
  %514 = vmatprep.subr.mxu0 0.0
  %515 = vmatpush1.msra.mxu0 0.0
  %516 = vmatprep.subr.mxu0 0.0
  %517 = vmatpush1.msra.mxu0 0.0
  %518 = vmatprep.subr.mxu0 0.0
  %519 = vmatpush1.msra.mxu0 0.0
  %520 = vmatprep.mubr.f32.mxu0 0.0
  %521 = vmatmul.mubr.f32.gmra.mrb[0].mxu0 %v454
  %v522 = vpop.f32.mrb[0].mxu0
  %v523 = vadd.f32 0.0, %v522
  %v524 = vpop.f32.mrb[0].mxu0
  %525 = vdwg.mxu0
  %v526 = vmul.f32 %v362, %v523
  %v527 = vld [vmem:[%s4] sm:$0xff]
  %v528 = vld [vmem:[%s4 + $0x8] sm:$0xff]
  %v529 = vld [vmem:[%s4 + $0x10] sm:$0xff]
  %v530 = vld [vmem:[%s4 + $0x18] sm:$0xff]
  %v531 = vld [vmem:[%s4 + $0x20] sm:$0xff]
  %v532 = vld [vmem:[%s4 + $0x28] sm:$0xff]
  %v533 = vld [vmem:[%s4 + $0x30] sm:$0xff]
  %v534 = vld [vmem:[%s4 + $0x38] sm:$0xff]
  %v535 = vld [vmem:[%s4 + $0x40] sm:$0xff]
  %v536 = vld [vmem:[%s4 + $0x48] sm:$0xff]
  %v537 = vld [vmem:[%s4 + $0x50] sm:$0xff]
  %v538 = vld [vmem:[%s4 + $0x58] sm:$0xff]
  %v539 = vld [vmem:[%s4 + $0x60] sm:$0xff]
  %v540 = vld [vmem:[%s4 + $0x68] sm:$0xff]
  %v541 = vld [vmem:[%s4 + $0x70] sm:$0xff]
  %v542 = vld [vmem:[%s4 + $0x78] sm:$0xff]
  %v543 = vld [vmem:[%s4 + $0x80] sm:$0xff]
  %v544 = vld [vmem:[%s4 + $0x88] sm:$0xff]
  %v545 = vld [vmem:[%s4 + $0x90] sm:$0xff]
  %v546 = vld [vmem:[%s4 + $0x98] sm:$0xff]
  %v547 = vld [vmem:[%s4 + $0xa0] sm:$0xff]
  %v548 = vld [vmem:[%s4 + $0xa8] sm:$0xff]
  %v549 = vld [vmem:[%s4 + $0xb0] sm:$0xff]
  %v550 = vld [vmem:[%s4 + $0xb8] sm:$0xff]
  %v551 = vld [vmem:[%s4 + $0xc0] sm:$0xf]
  %v552 = vld [vmem:[%s4 + $0xc8] sm:$0xf]
  %v554 = vsel %vm174, %v526, 0
  %v557 = vsel %vm178, %v551, 0
  %v560 = vsel %vm178, %v552, 0
  %562 = vmatprep.subr.mxu0 %v528
  %563 = vmatpush1.msra.mxu0 %v527
  %564 = vmatprep.subr.mxu0 %v530
  %565 = vmatpush1.msra.mxu0 %v529
  %566 = vmatprep.subr.mxu0 %v532
  %567 = vmatpush1.msra.mxu0 %v531
  %568 = vmatprep.subr.mxu0 %v534
  %569 = vmatpush1.msra.mxu0 %v533
  %570 = vmatprep.subr.mxu0 %v536
  %571 = vmatpush1.msra.mxu0 %v535
  %572 = vmatprep.subr.mxu0 %v538
  %573 = vmatpush1.msra.mxu0 %v537
  %574 = vmatprep.subr.mxu0 %v540
  %575 = vmatpush1.msra.mxu0 %v539
  %576 = vmatprep.subr.mxu0 %v542
  %577 = vmatpush1.msra.mxu0 %v541
  %578 = vmatprep.subr.mxu0 %v544
  %579 = vmatpush1.msra.mxu0 %v543
  %580 = vmatprep.subr.mxu0 %v546
  %581 = vmatpush1.msra.mxu0 %v545
  %582 = vmatprep.subr.mxu0 %v548
  %583 = vmatpush1.msra.mxu0 %v547
  %584 = vmatprep.subr.mxu0 %v550
  %585 = vmatpush1.msra.mxu0 %v549
  %586 = vmatprep.subr.mxu0 %v560
  %587 = vmatpush1.msra.mxu0 %v557
  %588 = vmatprep.subr.mxu0 0.0
  %589 = vmatpush1.msra.mxu0 0.0
  %590 = vmatprep.subr.mxu0 0.0
  %591 = vmatpush1.msra.mxu0 0.0
  %592 = vmatprep.subr.mxu0 0.0
  %593 = vmatpush1.msra.mxu0 0.0
  %594 = vmatprep.subr.mxu0 0.0
  %595 = vmatpush1.msra.mxu0 0.0
  %596 = vmatprep.subr.mxu0 0.0
  %597 = vmatpush1.msra.mxu0 0.0
  %598 = vmatprep.subr.mxu0 0.0
  %599 = vmatpush1.msra.mxu0 0.0
  %600 = vmatprep.subr.mxu0 0.0
  %601 = vmatpush1.msra.mxu0 0.0
  %602 = vmatprep.subr.mxu0 0.0
  %603 = vmatpush1.msra.mxu0 0.0
  %604 = vmatprep.subr.mxu0 0.0
  %605 = vmatpush1.msra.mxu0 0.0
  %606 = vmatprep.subr.mxu0 0.0
  %607 = vmatpush1.msra.mxu0 0.0
  %608 = vmatprep.subr.mxu0 0.0
  %609 = vmatpush1.msra.mxu0 0.0
  %610 = vmatprep.subr.mxu0 0.0
  %611 = vmatpush1.msra.mxu0 0.0
  %612 = vmatprep.subr.mxu0 0.0
  %613 = vmatpush1.msra.mxu0 0.0
  %614 = vmatprep.subr.mxu0 0.0
  %615 = vmatpush1.msra.mxu0 0.0
  %616 = vmatprep.subr.mxu0 0.0
  %617 = vmatpush1.msra.mxu0 0.0
  %618 = vmatprep.subr.mxu0 0.0
  %619 = vmatpush1.msra.mxu0 0.0
  %620 = vmatprep.subr.mxu0 0.0
  %621 = vmatpush1.msra.mxu0 0.0
  %622 = vmatprep.subr.mxu0 0.0
  %623 = vmatpush1.msra.mxu0 0.0
  %624 = vmatprep.subr.mxu0 0.0
  %625 = vmatpush1.msra.mxu0 0.0
  %626 = vmatprep.mubr.f32.mxu0 0.0
  %627 = vmatmul.mubr.f32.gmra.mrb[0].mxu0 %v554
  %v628 = vpop.f32.mrb[0].mxu0
  %v629 = vadd.f32 0.0, %v628
  %v630 = vpop.f32.mrb[0].mxu0
  %v631 = vadd.f32 0.0, %v630
  %632 = vdwg.mxu0
  %633 = vst [vmem:[%s12] sm:$0xff] %v629
  %634 = vst.msk [vmem:[%s12 + $0x8] sm:$0xff] %vm79, %v631
  // Predicated region
  $region50: #{bpnet_forward.4} parent=0 // pred_check
    _
  $region51: #{bpnet_forward.4} parent=0 // pred_check_branch
    %636 = sbr.rel (0) target = $region53
  $region52: #{bpnet_forward.4} parent=0 // pred_region
    _
  $region53: #{bpnet_forward.4} parent=0 // pred_fallthru
    _
  // Predicated region
  $region54: #{bpnet_forward.4} parent=0 // pred_check
    _
  $region55: #{bpnet_forward.4} parent=0 // pred_check_branch
    %638 = sbr.rel (0) target = $region57
  $region56: #{bpnet_forward.4} parent=0 // pred_region
    _
  $region57: #{bpnet_forward.4} parent=0 // pred_fallthru
    _
  // Predicated region
  $region58: #{bpnet_forward.4} parent=0 // pred_check
    _
  $region59: #{bpnet_forward.4} parent=0 // pred_check_branch
    %640 = sbr.rel (0) target = $region61
  $region60: #{bpnet_forward.4} parent=0 // pred_region
    _
  $region61: #{bpnet_forward.4} parent=0 // pred_fallthru
    _
  // Predicated region
  $region62: #{bpnet_forward.4} parent=0 // pred_check
    _
  $region63: #{bpnet_forward.4} parent=0 // pred_check_branch
    %642 = sbr.rel (0) target = $region65
  $region64: #{bpnet_forward.4} parent=0 // pred_region
    _
  $region65: #{bpnet_forward.4} parent=0 // pred_fallthru
    _

// kernel: bpnet_forward.5
$region0: #{bpnet_forward.5}
  #allocation0 [shape = 'u32[]', space=smem, size = 0x4, offset = 0x4, fixed_abs, tag = 'smem constant byte address 0x4 - core index']
  #allocation1 [shape = 'u32[144,128]{1,0:T(1,128)}', space=vmem, size = 0x12000, scoped, tag = 'internal scratch']
  #allocation2 [shape = 'f32[1,1]{1,0:T(1,128)S(1)}', space=vmem, size = 0x200, scoped, tag = 'scoped memory for bpnet_forward.5']
  %s0 = inlined_call_operand.vmem [shape: f32[10,192], index: 0, kind: input, shape index: {}]
  %s1 = inlined_call_operand.vmem [shape: f32[192,100], index: 1, kind: input, shape index: {}]
  %s2 = inlined_call_operand.vmem [shape: f32[100,40], index: 2, kind: input, shape index: {}]
  %s3 = inlined_call_operand.vmem [shape: f32[40,10], index: 3, kind: input, shape index: {}]
  %s4 = inlined_call_operand.vmem [shape: f32[100,192], index: 4, kind: input, shape index: {}]
  %s5 = inlined_call_operand.vmem [shape: f32[40,100], index: 5, kind: input, shape index: {}]
  %s6 = inlined_call_operand.vmem [shape: f32[10,40], index: 6, kind: input, shape index: {}]
  %s7 = inlined_call_operand.vmem [shape: f32[1,10], index: 7, kind: input, shape index: {}]
  %s8 = inlined_call_operand.vmem [shape: f32[1,100], index: 8, kind: input, shape index: {}]
  %s9 = inlined_call_operand.vmem [shape: f32[1,40], index: 9, kind: input, shape index: {}]
  %s10 = inlined_call_operand.vmem [shape: f32[1,10], index: 10, kind: input, shape index: {}]
  %s11 = inlined_call_operand.<no memory space> [shape: f32[1,1], index: 11, kind: input, shape index: {}]
  %s12 = inlined_call_operand.vmem [shape: f32[10,192], index: 12, kind: output, shape index: {0}]
  %s13 = inlined_call_operand.vmem [shape: f32[10,1], index: 13, kind: output, shape index: {1}]
  %14 = xla_tuple %s12, %s13
  %s15 = sld [smem:[#allocation0]]
  $region66: #{bpnet_forward.5} parent=0
    _
  %s17 = ssub.s32 1, %s15
  %s18 = scalar_select 0, %s17, %s15
  %v19 = vstv %s11
  %20 = vst [vmem:[#allocation2] sm:$0x1] %v19
  // Predicated region
  $region2: #{bpnet_forward.5} parent=0 // pred_check
    _
  $region3: #{bpnet_forward.5} parent=0 // pred_check_branch
    %22 = sbr.rel (0) target = $region5
  $region4: #{bpnet_forward.5} parent=0 // pred_region
    _
  $region5: #{bpnet_forward.5} parent=0 // pred_fallthru
    _
  // Predicated region
  $region6: #{bpnet_forward.5} parent=0 // pred_check
    _
  $region7: #{bpnet_forward.5} parent=0 // pred_check_branch
    %24 = sbr.rel (0) target = $region9
  $region8: #{bpnet_forward.5} parent=0 // pred_region
    _
  $region9: #{bpnet_forward.5} parent=0 // pred_fallthru
    _
  // Predicated region
  $region10: #{bpnet_forward.5} parent=0 // pred_check
    _
  $region11: #{bpnet_forward.5} parent=0 // pred_check_branch
    %26 = sbr.rel (0) target = $region13
  $region12: #{bpnet_forward.5} parent=0 // pred_region
    _
  $region13: #{bpnet_forward.5} parent=0 // pred_fallthru
    _
  // Predicated region
  $region14: #{bpnet_forward.5} parent=0 // pred_check
    _
  $region15: #{bpnet_forward.5} parent=0 // pred_check_branch
    %28 = sbr.rel (0) target = $region17
  $region16: #{bpnet_forward.5} parent=0 // pred_region
    _
  $region17: #{bpnet_forward.5} parent=0 // pred_fallthru
    _
  // Predicated region
  $region18: #{bpnet_forward.5} parent=0 // pred_check
    _
  $region19: #{bpnet_forward.5} parent=0 // pred_check_branch
    %30 = sbr.rel (0) target = $region21
  $region20: #{bpnet_forward.5} parent=0 // pred_region
    _
  $region21: #{bpnet_forward.5} parent=0 // pred_fallthru
    _
  // Predicated region
  $region22: #{bpnet_forward.5} parent=0 // pred_check
    _
  $region23: #{bpnet_forward.5} parent=0 // pred_check_branch
    %32 = sbr.rel (0) target = $region25
  $region24: #{bpnet_forward.5} parent=0 // pred_region
    _
  $region25: #{bpnet_forward.5} parent=0 // pred_fallthru
    _
  // Predicated region
  $region26: #{bpnet_forward.5} parent=0 // pred_check
    _
  $region27: #{bpnet_forward.5} parent=0 // pred_check_branch
    %34 = sbr.rel (0) target = $region29
  $region28: #{bpnet_forward.5} parent=0 // pred_region
    _
  $region29: #{bpnet_forward.5} parent=0 // pred_fallthru
    _
  // Predicated region
  $region30: #{bpnet_forward.5} parent=0 // pred_check
    _
  $region31: #{bpnet_forward.5} parent=0 // pred_check_branch
    %36 = sbr.rel (0) target = $region33
  $region32: #{bpnet_forward.5} parent=0 // pred_region
    _
  $region33: #{bpnet_forward.5} parent=0 // pred_fallthru
    _
  // Predicated region
  $region34: #{bpnet_forward.5} parent=0 // pred_check
    _
  $region35: #{bpnet_forward.5} parent=0 // pred_check_branch
    %38 = sbr.rel (0) target = $region37
  $region36: #{bpnet_forward.5} parent=0 // pred_region
    _
  $region37: #{bpnet_forward.5} parent=0 // pred_fallthru
    _
  // Predicated region
  $region38: #{bpnet_forward.5} parent=0 // pred_check
    _
  $region39: #{bpnet_forward.5} parent=0 // pred_check_branch
    %40 = sbr.rel (0) target = $region41
  $region40: #{bpnet_forward.5} parent=0 // pred_region
    _
  $region41: #{bpnet_forward.5} parent=0 // pred_fallthru
    _
  // Predicated region
  $region42: #{bpnet_forward.5} parent=0 // pred_check
    _
  $region43: #{bpnet_forward.5} parent=0 // pred_check_branch
    %42 = sbr.rel (0) target = $region45
  $region44: #{bpnet_forward.5} parent=0 // pred_region
    _
  $region45: #{bpnet_forward.5} parent=0 // pred_fallthru
    _
  // Predicated region
  $region46: #{bpnet_forward.5} parent=0 // pred_check
    _
  $region47: #{bpnet_forward.5} parent=0 // pred_check_branch
    %44 = sbr.rel (0) target = $region49
  $region48: #{bpnet_forward.5} parent=0 // pred_region
    _
  $region49: #{bpnet_forward.5} parent=0 // pred_fallthru
    _
  %v45 = vld [vmem:[%s0] sm:$0xff]
  %v46 = vld [vmem:[%s0 + $0x8] sm:$0xff]
  %v47 = vld [vmem:[%s0 + $0x10] sm:$0x3]
  %v48 = vld [vmem:[%s0 + $0x18] sm:$0x3]
  %v49 = vld [vmem:[%s7] sm:$0x1]
  %v50 = vld [vmem:[%s1] sm:$0xff]
  %v51 = vld [vmem:[%s1 + $0x8] sm:$0xff]
  %v52 = vld [vmem:[%s1 + $0x10] sm:$0xff]
  %v53 = vld [vmem:[%s1 + $0x18] sm:$0xff]
  %v54 = vld [vmem:[%s1 + $0x20] sm:$0xff]
  %v55 = vld [vmem:[%s1 + $0x28] sm:$0xff]
  %v56 = vld [vmem:[%s1 + $0x30] sm:$0xff]
  %v57 = vld [vmem:[%s1 + $0x38] sm:$0xff]
  %v58 = vld [vmem:[%s1 + $0x40] sm:$0xff]
  %v59 = vld [vmem:[%s1 + $0x48] sm:$0xff]
  %v60 = vld [vmem:[%s1 + $0x50] sm:$0xff]
  %v61 = vld [vmem:[%s1 + $0x58] sm:$0xff]
  %v62 = vld [vmem:[%s1 + $0x60] sm:$0xff]
  %v63 = vld [vmem:[%s1 + $0x68] sm:$0xff]
  %v64 = vld [vmem:[%s1 + $0x70] sm:$0xff]
  %v65 = vld [vmem:[%s1 + $0x78] sm:$0xff]
  %v66 = vld [vmem:[%s1 + $0x80] sm:$0xff]
  %v67 = vld [vmem:[%s1 + $0x88] sm:$0xff]
  %v68 = vld [vmem:[%s1 + $0x90] sm:$0xff]
  %v69 = vld [vmem:[%s1 + $0x98] sm:$0xff]
  %v70 = vld [vmem:[%s1 + $0xa0] sm:$0xff]
  %v71 = vld [vmem:[%s1 + $0xa8] sm:$0xff]
  %v72 = vld [vmem:[%s1 + $0xb0] sm:$0xff]
  %v73 = vld [vmem:[%s1 + $0xb8] sm:$0xff]
  %v74 = vld [vmem:[%s8] sm:$0x1]
  %v76 = vlaneseq
  %v77 = vshrl.u32 %v76, 7
  %v78 = vsub.s32 0, %v77
  %v79 = vrot.slane %v74, %v78
  %vm81 = vcmask 523264
  %v83 = vsel %vm81, %v46, 0
  %v86 = vsel %vm81, %v48, 0
  %88 = vmatprep.subr.mxu0 0.0
  %89 = vmatpush1.msra.mxu0 %v50
  %90 = vmatprep.subr.mxu0 0.0
  %91 = vmatpush1.msra.mxu0 %v51
  %92 = vmatprep.subr.mxu0 0.0
  %93 = vmatpush1.msra.mxu0 %v52
  %94 = vmatprep.subr.mxu0 0.0
  %95 = vmatpush1.msra.mxu0 %v53
  %96 = vmatprep.subr.mxu0 0.0
  %97 = vmatpush1.msra.mxu0 %v54
  %98 = vmatprep.subr.mxu0 0.0
  %99 = vmatpush1.msra.mxu0 %v55
  %100 = vmatprep.subr.mxu0 0.0
  %101 = vmatpush1.msra.mxu0 %v56
  %102 = vmatprep.subr.mxu0 0.0
  %103 = vmatpush1.msra.mxu0 %v57
  %104 = vmatprep.subr.mxu0 0.0
  %105 = vmatpush1.msra.mxu0 %v58
  %106 = vmatprep.subr.mxu0 0.0
  %107 = vmatpush1.msra.mxu0 %v59
  %108 = vmatprep.subr.mxu0 0.0
  %109 = vmatpush1.msra.mxu0 %v60
  %110 = vmatprep.subr.mxu0 0.0
  %111 = vmatpush1.msra.mxu0 %v61
  %112 = vmatprep.subr.mxu0 0.0
  %113 = vmatpush1.msra.mxu0 %v62
  %114 = vmatprep.subr.mxu0 0.0
  %115 = vmatpush1.msra.mxu0 %v63
  %116 = vmatprep.subr.mxu0 0.0
  %117 = vmatpush1.msra.mxu0 %v64
  %118 = vmatprep.subr.mxu0 0.0
  %119 = vmatpush1.msra.mxu0 %v65
  %120 = vmatprep.subr.mxu0 0.0
  %121 = vmatpush1.msra.mxu0 %v66
  %122 = vmatprep.subr.mxu0 0.0
  %123 = vmatpush1.msra.mxu0 %v67
  %124 = vmatprep.subr.mxu0 0.0
  %125 = vmatpush1.msra.mxu0 %v68
  %126 = vmatprep.subr.mxu0 0.0
  %127 = vmatpush1.msra.mxu0 %v69
  %128 = vmatprep.subr.mxu0 0.0
  %129 = vmatpush1.msra.mxu0 %v70
  %130 = vmatprep.subr.mxu0 0.0
  %131 = vmatpush1.msra.mxu0 %v71
  %132 = vmatprep.subr.mxu0 0.0
  %133 = vmatpush1.msra.mxu0 %v72
  %134 = vmatprep.subr.mxu0 0.0
  %135 = vmatpush1.msra.mxu0 %v73
  %136 = vmatprep.subr.mxu0 0.0
  %137 = vmatpush1.msra.mxu0 0.0
  %138 = vmatprep.subr.mxu0 0.0
  %139 = vmatpush1.msra.mxu0 0.0
  %140 = vmatprep.subr.mxu0 0.0
  %141 = vmatpush1.msra.mxu0 0.0
  %142 = vmatprep.subr.mxu0 0.0
  %143 = vmatpush1.msra.mxu0 0.0
  %144 = vmatprep.subr.mxu0 0.0
  %145 = vmatpush1.msra.mxu0 0.0
  %146 = vmatprep.subr.mxu0 0.0
  %147 = vmatpush1.msra.mxu0 0.0
  %148 = vmatprep.subr.mxu0 0.0
  %149 = vmatpush1.msra.mxu0 0.0
  %150 = vmatprep.subr.mxu0 0.0
  %151 = vmatpush1.msra.mxu0 0.0
  %152 = vmatprep.mubr.f32.mxu0 %v83
  %153 = vmatmul.mubr.f32.gmra.mrb[0].mxu0 %v45
  %v154 = vpop.f32.mrb[0].mxu0
  %v155 = vadd.f32 %v79, %v154
  %v156 = vpop.f32.mrb[0].mxu0
  %157 = vmatprep.mubr.f32.mxu0 %v86
  %158 = vmatmul.mubr.f32.gmra.mrb[0].mxu0 %v47
  %v159 = vpop.f32.mrb[0].mxu0
  %v160 = vadd.f32 %v79, %v159
  %v161 = vpop.f32.mrb[0].mxu0
  %162 = vdwg.mxu0
  %v163 = vtanh.pop %v155
  %v164 = vtanh.pop %v160
  %v165 = vld [vmem:[%s2] sm:$0xff]
  %v166 = vld [vmem:[%s2 + $0x8] sm:$0xff]
  %v167 = vld [vmem:[%s2 + $0x10] sm:$0xff]
  %v168 = vld [vmem:[%s2 + $0x18] sm:$0xff]
  %v169 = vld [vmem:[%s2 + $0x20] sm:$0xff]
  %v170 = vld [vmem:[%s2 + $0x28] sm:$0xff]
  %v171 = vld [vmem:[%s2 + $0x30] sm:$0xff]
  %v172 = vld [vmem:[%s2 + $0x38] sm:$0xff]
  %v173 = vld [vmem:[%s2 + $0x40] sm:$0xff]
  %v174 = vld [vmem:[%s2 + $0x48] sm:$0xff]
  %v175 = vld [vmem:[%s2 + $0x50] sm:$0xff]
  %v176 = vld [vmem:[%s2 + $0x58] sm:$0xff]
  %v177 = vld [vmem:[%s2 + $0x60] sm:$0xf]
  %v178 = vld [vmem:[%s9] sm:$0x1]
  %v180 = vlaneseq
  %v181 = vshrl.u32 %v180, 7
  %v182 = vsub.s32 0, %v181
  %v183 = vrot.slane %v178, %v182
  %vm185 = vcmask 818176
  %v187 = vsel %vm185, %v163, 0
  %v190 = vsel %vm185, %v164, 0
  %vm192 = vcmask 1043456
  %v194 = vsel %vm192, %v177, 0
  %196 = vmatprep.subr.mxu0 0.0
  %197 = vmatpush1.msra.mxu0 %v165
  %198 = vmatprep.subr.mxu0 0.0
  %199 = vmatpush1.msra.mxu0 %v166
  %200 = vmatprep.subr.mxu0 0.0
  %201 = vmatpush1.msra.mxu0 %v167
  %202 = vmatprep.subr.mxu0 0.0
  %203 = vmatpush1.msra.mxu0 %v168
  %204 = vmatprep.subr.mxu0 0.0
  %205 = vmatpush1.msra.mxu0 %v169
  %206 = vmatprep.subr.mxu0 0.0
  %207 = vmatpush1.msra.mxu0 %v170
  %208 = vmatprep.subr.mxu0 0.0
  %209 = vmatpush1.msra.mxu0 %v171
  %210 = vmatprep.subr.mxu0 0.0
  %211 = vmatpush1.msra.mxu0 %v172
  %212 = vmatprep.subr.mxu0 0.0
  %213 = vmatpush1.msra.mxu0 %v173
  %214 = vmatprep.subr.mxu0 0.0
  %215 = vmatpush1.msra.mxu0 %v174
  %216 = vmatprep.subr.mxu0 0.0
  %217 = vmatpush1.msra.mxu0 %v175
  %218 = vmatprep.subr.mxu0 0.0
  %219 = vmatpush1.msra.mxu0 %v176
  %220 = vmatprep.subr.mxu0 0.0
  %221 = vmatpush1.msra.mxu0 %v194
  %222 = vmatprep.subr.mxu0 0.0
  %223 = vmatpush1.msra.mxu0 0.0
  %224 = vmatprep.subr.mxu0 0.0
  %225 = vmatpush1.msra.mxu0 0.0
  %226 = vmatprep.subr.mxu0 0.0
  %227 = vmatpush1.msra.mxu0 0.0
  %228 = vmatprep.subr.mxu0 0.0
  %229 = vmatpush1.msra.mxu0 0.0
  %230 = vmatprep.subr.mxu0 0.0
  %231 = vmatpush1.msra.mxu0 0.0
  %232 = vmatprep.subr.mxu0 0.0
  %233 = vmatpush1.msra.mxu0 0.0
  %234 = vmatprep.subr.mxu0 0.0
  %235 = vmatpush1.msra.mxu0 0.0
  %236 = vmatprep.subr.mxu0 0.0
  %237 = vmatpush1.msra.mxu0 0.0
  %238 = vmatprep.subr.mxu0 0.0
  %239 = vmatpush1.msra.mxu0 0.0
  %240 = vmatprep.subr.mxu0 0.0
  %241 = vmatpush1.msra.mxu0 0.0
  %242 = vmatprep.subr.mxu0 0.0
  %243 = vmatpush1.msra.mxu0 0.0
  %244 = vmatprep.subr.mxu0 0.0
  %245 = vmatpush1.msra.mxu0 0.0
  %246 = vmatprep.subr.mxu0 0.0
  %247 = vmatpush1.msra.mxu0 0.0
  %248 = vmatprep.subr.mxu0 0.0
  %249 = vmatpush1.msra.mxu0 0.0
  %250 = vmatprep.subr.mxu0 0.0
  %251 = vmatpush1.msra.mxu0 0.0
  %252 = vmatprep.subr.mxu0 0.0
  %253 = vmatpush1.msra.mxu0 0.0
  %254 = vmatprep.subr.mxu0 0.0
  %255 = vmatpush1.msra.mxu0 0.0
  %256 = vmatprep.subr.mxu0 0.0
  %257 = vmatpush1.msra.mxu0 0.0
  %258 = vmatprep.subr.mxu0 0.0
  %259 = vmatpush1.msra.mxu0 0.0
  %260 = vmatprep.mubr.f32.mxu0 0.0
  %261 = vmatmul.mubr.f32.gmra.mrb[0].mxu0 %v187
  %v262 = vpop.f32.mrb[0].mxu0
  %v263 = vadd.f32 %v183, %v262
  %v264 = vpop.f32.mrb[0].mxu0
  %265 = vmatprep.mubr.f32.mxu0 0.0
  %266 = vmatmul.mubr.f32.gmra.mrb[0].mxu0 %v190
  %v267 = vpop.f32.mrb[0].mxu0
  %v268 = vadd.f32 %v183, %v267
  %v269 = vpop.f32.mrb[0].mxu0
  %270 = vdwg.mxu0
  %v271 = vtanh.pop %v263
  %v272 = vtanh.pop %v268
  %v273 = vld [vmem:[%s3] sm:$0xff]
  %v274 = vld [vmem:[%s3 + $0x8] sm:$0xff]
  %v275 = vld [vmem:[%s3 + $0x10] sm:$0xff]
  %v276 = vld [vmem:[%s3 + $0x18] sm:$0xff]
  %v277 = vld [vmem:[%s3 + $0x20] sm:$0xff]
  %v278 = vld [vmem:[%s10] sm:$0x1]
  %v280 = vlaneseq
  %v281 = vshrl.u32 %v280, 7
  %v282 = vsub.s32 0, %v281
  %v283 = vrot.slane %v278, %v282
  %vm285 = vcmask 326656
  %v287 = vsel %vm285, %v271, 0
  %v290 = vsel %vm285, %v272, 0
  %292 = vmatprep.subr.mxu0 0.0
  %293 = vmatpush1.msra.mxu0 %v273
  %294 = vmatprep.subr.mxu0 0.0
  %295 = vmatpush1.msra.mxu0 %v274
  %296 = vmatprep.subr.mxu0 0.0
  %297 = vmatpush1.msra.mxu0 %v275
  %298 = vmatprep.subr.mxu0 0.0
  %299 = vmatpush1.msra.mxu0 %v276
  %300 = vmatprep.subr.mxu0 0.0
  %301 = vmatpush1.msra.mxu0 %v277
  %302 = vmatprep.subr.mxu0 0.0
  %303 = vmatpush1.msra.mxu0 0.0
  %304 = vmatprep.subr.mxu0 0.0
  %305 = vmatpush1.msra.mxu0 0.0
  %306 = vmatprep.subr.mxu0 0.0
  %307 = vmatpush1.msra.mxu0 0.0
  %308 = vmatprep.subr.mxu0 0.0
  %309 = vmatpush1.msra.mxu0 0.0
  %310 = vmatprep.subr.mxu0 0.0
  %311 = vmatpush1.msra.mxu0 0.0
  %312 = vmatprep.subr.mxu0 0.0
  %313 = vmatpush1.msra.mxu0 0.0
  %314 = vmatprep.subr.mxu0 0.0
  %315 = vmatpush1.msra.mxu0 0.0
  %316 = vmatprep.subr.mxu0 0.0
  %317 = vmatpush1.msra.mxu0 0.0
  %318 = vmatprep.subr.mxu0 0.0
  %319 = vmatpush1.msra.mxu0 0.0
  %320 = vmatprep.subr.mxu0 0.0
  %321 = vmatpush1.msra.mxu0 0.0
  %322 = vmatprep.subr.mxu0 0.0
  %323 = vmatpush1.msra.mxu0 0.0
  %324 = vmatprep.subr.mxu0 0.0
  %325 = vmatpush1.msra.mxu0 0.0
  %326 = vmatprep.subr.mxu0 0.0
  %327 = vmatpush1.msra.mxu0 0.0
  %328 = vmatprep.subr.mxu0 0.0
  %329 = vmatpush1.msra.mxu0 0.0
  %330 = vmatprep.subr.mxu0 0.0
  %331 = vmatpush1.msra.mxu0 0.0
  %332 = vmatprep.subr.mxu0 0.0
  %333 = vmatpush1.msra.mxu0 0.0
  %334 = vmatprep.subr.mxu0 0.0
  %335 = vmatpush1.msra.mxu0 0.0
  %336 = vmatprep.subr.mxu0 0.0
  %337 = vmatpush1.msra.mxu0 0.0
  %338 = vmatprep.subr.mxu0 0.0
  %339 = vmatpush1.msra.mxu0 0.0
  %340 = vmatprep.subr.mxu0 0.0
  %341 = vmatpush1.msra.mxu0 0.0
  %342 = vmatprep.subr.mxu0 0.0
  %343 = vmatpush1.msra.mxu0 0.0
  %344 = vmatprep.subr.mxu0 0.0
  %345 = vmatpush1.msra.mxu0 0.0
  %346 = vmatprep.subr.mxu0 0.0
  %347 = vmatpush1.msra.mxu0 0.0
  %348 = vmatprep.subr.mxu0 0.0
  %349 = vmatpush1.msra.mxu0 0.0
  %350 = vmatprep.subr.mxu0 0.0
  %351 = vmatpush1.msra.mxu0 0.0
  %352 = vmatprep.subr.mxu0 0.0
  %353 = vmatpush1.msra.mxu0 0.0
  %354 = vmatprep.subr.mxu0 0.0
  %355 = vmatpush1.msra.mxu0 0.0
  %356 = vmatprep.mubr.f32.mxu0 0.0
  %357 = vmatmul.mubr.f32.gmra.mrb[0].mxu0 %v287
  %v358 = vpop.f32.mrb[0].mxu0
  %v359 = vadd.f32 %v283, %v358
  %v360 = vpop.f32.mrb[0].mxu0
  %361 = vmatprep.mubr.f32.mxu0 0.0
  %362 = vmatmul.mubr.f32.gmra.mrb[0].mxu0 %v290
  %v363 = vpop.f32.mrb[0].mxu0
  %v364 = vadd.f32 %v283, %v363
  %v365 = vpop.f32.mrb[0].mxu0
  %366 = vdwg.mxu0
  %v367 = vtanh.pop %v359
  %v368 = vtanh.pop %v364
  %v370 = vlaneseq
  %v371 = vshrl.u32 %v370, 7
  %v372 = vsub.s32 0, %v371
  %v373 = vrot.slane %v49, %v372
  %v375 = vmul.f32 %v367, %v373
  %v376 = vmul.f32 %v368, %v373
  %vm377 = vcmask 80896
  %v378 = vsel %vm377, %v375, 0.0
  %379 = vadd.xlane.f32.xlu0 %v378
  %v380 = vpop.xlane.xlu0 %379
  %vm381 = vcmask 74752
  %v382 = vsel %vm381, %v376, 0.0
  %383 = vadd.xlane.f32.xlu0 %v382
  %v384 = vpop.xlane.xlu0 %383
  %v385 = vld [vmem:[#allocation2] sm:$0x1]
  %v387 = vlaneseq
  %v388 = vshrl.u32 %v387, 7
  %v389 = vsub.s32 0, %v388
  %v390 = vrot.slane %v385, %v389
  %v392 = vadd.f32 %v380, %v390
  %v393 = vadd.f32 %v384, %v390
  %vm394 = vcmask 7168
  %395 = vst.msk [vmem:[%s13] sm:$0xff] %vm394, %v392
  %vm396 = vcmask 1024
  %397 = vst.msk [vmem:[%s13 + $0x8] sm:$0x3] %vm396, %v393
  %v398 = vmul.f32 %v163, %v163
  %v399 = vmul.f32 %v164, %v164
  %v400 = vsub.f32 1.0, %v398
  %v401 = vsub.f32 1.0, %v399
  %v402 = vmul.f32 %v271, %v271
  %v403 = vmul.f32 %v272, %v272
  %v404 = vsub.f32 1.0, %v402
  %v405 = vsub.f32 1.0, %v403
  %v406 = vmul.f32 %v367, %v367
  %v407 = vmul.f32 %v368, %v368
  %v408 = vsub.f32 1.0, %v406
  %v409 = vsub.f32 1.0, %v407
  %v410 = vmul.f32 %v408, %v373
  %v411 = vmul.f32 %v409, %v373
  %v412 = vld [vmem:[%s6] sm:$0xff]
  %v413 = vld [vmem:[%s6 + $0x8] sm:$0x3]
  %v415 = vsel %vm377, %v410, 0
  %v418 = vsel %vm377, %v411, 0
  %vm420 = vcmask 1041408
  %v422 = vsel %vm420, %v413, 0
  %424 = vmatprep.subr.mxu0 0.0
  %425 = vmatpush1.msra.mxu0 %v412
  %426 = vmatprep.subr.mxu0 0.0
  %427 = vmatpush1.msra.mxu0 %v422
  %428 = vmatprep.subr.mxu0 0.0
  %429 = vmatpush1.msra.mxu0 0.0
  %430 = vmatprep.subr.mxu0 0.0
  %431 = vmatpush1.msra.mxu0 0.0
  %432 = vmatprep.subr.mxu0 0.0
  %433 = vmatpush1.msra.mxu0 0.0
  %434 = vmatprep.subr.mxu0 0.0
  %435 = vmatpush1.msra.mxu0 0.0
  %436 = vmatprep.subr.mxu0 0.0
  %437 = vmatpush1.msra.mxu0 0.0
  %438 = vmatprep.subr.mxu0 0.0
  %439 = vmatpush1.msra.mxu0 0.0
  %440 = vmatprep.subr.mxu0 0.0
  %441 = vmatpush1.msra.mxu0 0.0
  %442 = vmatprep.subr.mxu0 0.0
  %443 = vmatpush1.msra.mxu0 0.0
  %444 = vmatprep.subr.mxu0 0.0
  %445 = vmatpush1.msra.mxu0 0.0
  %446 = vmatprep.subr.mxu0 0.0
  %447 = vmatpush1.msra.mxu0 0.0
  %448 = vmatprep.subr.mxu0 0.0
  %449 = vmatpush1.msra.mxu0 0.0
  %450 = vmatprep.subr.mxu0 0.0
  %451 = vmatpush1.msra.mxu0 0.0
  %452 = vmatprep.subr.mxu0 0.0
  %453 = vmatpush1.msra.mxu0 0.0
  %454 = vmatprep.subr.mxu0 0.0
  %455 = vmatpush1.msra.mxu0 0.0
  %456 = vmatprep.subr.mxu0 0.0
  %457 = vmatpush1.msra.mxu0 0.0
  %458 = vmatprep.subr.mxu0 0.0
  %459 = vmatpush1.msra.mxu0 0.0
  %460 = vmatprep.subr.mxu0 0.0
  %461 = vmatpush1.msra.mxu0 0.0
  %462 = vmatprep.subr.mxu0 0.0
  %463 = vmatpush1.msra.mxu0 0.0
  %464 = vmatprep.subr.mxu0 0.0
  %465 = vmatpush1.msra.mxu0 0.0
  %466 = vmatprep.subr.mxu0 0.0
  %467 = vmatpush1.msra.mxu0 0.0
  %468 = vmatprep.subr.mxu0 0.0
  %469 = vmatpush1.msra.mxu0 0.0
  %470 = vmatprep.subr.mxu0 0.0
  %471 = vmatpush1.msra.mxu0 0.0
  %472 = vmatprep.subr.mxu0 0.0
  %473 = vmatpush1.msra.mxu0 0.0
  %474 = vmatprep.subr.mxu0 0.0
  %475 = vmatpush1.msra.mxu0 0.0
  %476 = vmatprep.subr.mxu0 0.0
  %477 = vmatpush1.msra.mxu0 0.0
  %478 = vmatprep.subr.mxu0 0.0
  %479 = vmatpush1.msra.mxu0 0.0
  %480 = vmatprep.subr.mxu0 0.0
  %481 = vmatpush1.msra.mxu0 0.0
  %482 = vmatprep.subr.mxu0 0.0
  %483 = vmatpush1.msra.mxu0 0.0
  %484 = vmatprep.subr.mxu0 0.0
  %485 = vmatpush1.msra.mxu0 0.0
  %486 = vmatprep.subr.mxu0 0.0
  %487 = vmatpush1.msra.mxu0 0.0
  %488 = vmatprep.mubr.f32.mxu0 0.0
  %489 = vmatmul.mubr.f32.gmra.mrb[0].mxu0 %v415
  %v490 = vpop.f32.mrb[0].mxu0
  %v491 = vadd.f32 0.0, %v490
  %v492 = vpop.f32.mrb[0].mxu0
  %493 = vmatprep.mubr.f32.mxu0 0.0
  %494 = vmatmul.mubr.f32.gmra.mrb[0].mxu0 %v418
  %v495 = vpop.f32.mrb[0].mxu0
  %v496 = vadd.f32 0.0, %v495
  %v497 = vpop.f32.mrb[0].mxu0
  %498 = vdwg.mxu0
  %v499 = vmul.f32 %v404, %v491
  %v500 = vmul.f32 %v405, %v496
  %v501 = vld [vmem:[%s5] sm:$0xff]
  %v502 = vld [vmem:[%s5 + $0x8] sm:$0xff]
  %v503 = vld [vmem:[%s5 + $0x10] sm:$0xff]
  %v504 = vld [vmem:[%s5 + $0x18] sm:$0xff]
  %v505 = vld [vmem:[%s5 + $0x20] sm:$0xff]
  %v507 = vsel %vm285, %v499, 0
  %v510 = vsel %vm285, %v500, 0
  %512 = vmatprep.subr.mxu0 0.0
  %513 = vmatpush1.msra.mxu0 %v501
  %514 = vmatprep.subr.mxu0 0.0
  %515 = vmatpush1.msra.mxu0 %v502
  %516 = vmatprep.subr.mxu0 0.0
  %517 = vmatpush1.msra.mxu0 %v503
  %518 = vmatprep.subr.mxu0 0.0
  %519 = vmatpush1.msra.mxu0 %v504
  %520 = vmatprep.subr.mxu0 0.0
  %521 = vmatpush1.msra.mxu0 %v505
  %522 = vmatprep.subr.mxu0 0.0
  %523 = vmatpush1.msra.mxu0 0.0
  %524 = vmatprep.subr.mxu0 0.0
  %525 = vmatpush1.msra.mxu0 0.0
  %526 = vmatprep.subr.mxu0 0.0
  %527 = vmatpush1.msra.mxu0 0.0
  %528 = vmatprep.subr.mxu0 0.0
  %529 = vmatpush1.msra.mxu0 0.0
  %530 = vmatprep.subr.mxu0 0.0
  %531 = vmatpush1.msra.mxu0 0.0
  %532 = vmatprep.subr.mxu0 0.0
  %533 = vmatpush1.msra.mxu0 0.0
  %534 = vmatprep.subr.mxu0 0.0
  %535 = vmatpush1.msra.mxu0 0.0
  %536 = vmatprep.subr.mxu0 0.0
  %537 = vmatpush1.msra.mxu0 0.0
  %538 = vmatprep.subr.mxu0 0.0
  %539 = vmatpush1.msra.mxu0 0.0
  %540 = vmatprep.subr.mxu0 0.0
  %541 = vmatpush1.msra.mxu0 0.0
  %542 = vmatprep.subr.mxu0 0.0
  %543 = vmatpush1.msra.mxu0 0.0
  %544 = vmatprep.subr.mxu0 0.0
  %545 = vmatpush1.msra.mxu0 0.0
  %546 = vmatprep.subr.mxu0 0.0
  %547 = vmatpush1.msra.mxu0 0.0
  %548 = vmatprep.subr.mxu0 0.0
  %549 = vmatpush1.msra.mxu0 0.0
  %550 = vmatprep.subr.mxu0 0.0
  %551 = vmatpush1.msra.mxu0 0.0
  %552 = vmatprep.subr.mxu0 0.0
  %553 = vmatpush1.msra.mxu0 0.0
  %554 = vmatprep.subr.mxu0 0.0
  %555 = vmatpush1.msra.mxu0 0.0
  %556 = vmatprep.subr.mxu0 0.0
  %557 = vmatpush1.msra.mxu0 0.0
  %558 = vmatprep.subr.mxu0 0.0
  %559 = vmatpush1.msra.mxu0 0.0
  %560 = vmatprep.subr.mxu0 0.0
  %561 = vmatpush1.msra.mxu0 0.0
  %562 = vmatprep.subr.mxu0 0.0
  %563 = vmatpush1.msra.mxu0 0.0
  %564 = vmatprep.subr.mxu0 0.0
  %565 = vmatpush1.msra.mxu0 0.0
  %566 = vmatprep.subr.mxu0 0.0
  %567 = vmatpush1.msra.mxu0 0.0
  %568 = vmatprep.subr.mxu0 0.0
  %569 = vmatpush1.msra.mxu0 0.0
  %570 = vmatprep.subr.mxu0 0.0
  %571 = vmatpush1.msra.mxu0 0.0
  %572 = vmatprep.subr.mxu0 0.0
  %573 = vmatpush1.msra.mxu0 0.0
  %574 = vmatprep.subr.mxu0 0.0
  %575 = vmatpush1.msra.mxu0 0.0
  %576 = vmatprep.mubr.f32.mxu0 0.0
  %577 = vmatmul.mubr.f32.gmra.mrb[0].mxu0 %v507
  %v578 = vpop.f32.mrb[0].mxu0
  %v579 = vadd.f32 0.0, %v578
  %v580 = vpop.f32.mrb[0].mxu0
  %581 = vmatprep.mubr.f32.mxu0 0.0
  %582 = vmatmul.mubr.f32.gmra.mrb[0].mxu0 %v510
  %v583 = vpop.f32.mrb[0].mxu0
  %v584 = vadd.f32 0.0, %v583
  %v585 = vpop.f32.mrb[0].mxu0
  %586 = vdwg.mxu0
  %v587 = vmul.f32 %v400, %v579
  %v588 = vmul.f32 %v401, %v584
  %v589 = vld [vmem:[%s4] sm:$0xff]
  %v590 = vld [vmem:[%s4 + $0x8] sm:$0xff]
  %v591 = vld [vmem:[%s4 + $0x10] sm:$0xff]
  %v592 = vld [vmem:[%s4 + $0x18] sm:$0xff]
  %v593 = vld [vmem:[%s4 + $0x20] sm:$0xff]
  %v594 = vld [vmem:[%s4 + $0x28] sm:$0xff]
  %v595 = vld [vmem:[%s4 + $0x30] sm:$0xff]
  %v596 = vld [vmem:[%s4 + $0x38] sm:$0xff]
  %v597 = vld [vmem:[%s4 + $0x40] sm:$0xff]
  %v598 = vld [vmem:[%s4 + $0x48] sm:$0xff]
  %v599 = vld [vmem:[%s4 + $0x50] sm:$0xff]
  %v600 = vld [vmem:[%s4 + $0x58] sm:$0xff]
  %v601 = vld [vmem:[%s4 + $0x60] sm:$0xff]
  %v602 = vld [vmem:[%s4 + $0x68] sm:$0xff]
  %v603 = vld [vmem:[%s4 + $0x70] sm:$0xff]
  %v604 = vld [vmem:[%s4 + $0x78] sm:$0xff]
  %v605 = vld [vmem:[%s4 + $0x80] sm:$0xff]
  %v606 = vld [vmem:[%s4 + $0x88] sm:$0xff]
  %v607 = vld [vmem:[%s4 + $0x90] sm:$0xff]
  %v608 = vld [vmem:[%s4 + $0x98] sm:$0xff]
  %v609 = vld [vmem:[%s4 + $0xa0] sm:$0xff]
  %v610 = vld [vmem:[%s4 + $0xa8] sm:$0xff]
  %v611 = vld [vmem:[%s4 + $0xb0] sm:$0xff]
  %v612 = vld [vmem:[%s4 + $0xb8] sm:$0xff]
  %v613 = vld [vmem:[%s4 + $0xc0] sm:$0xf]
  %v614 = vld [vmem:[%s4 + $0xc8] sm:$0xf]
  %v616 = vsel %vm185, %v587, 0
  %v619 = vsel %vm185, %v588, 0
  %v622 = vsel %vm192, %v613, 0
  %v625 = vsel %vm192, %v614, 0
  %627 = vmatprep.subr.mxu0 %v590
  %628 = vmatpush1.msra.mxu0 %v589
  %629 = vmatprep.subr.mxu0 %v592
  %630 = vmatpush1.msra.mxu0 %v591
  %631 = vmatprep.subr.mxu0 %v594
  %632 = vmatpush1.msra.mxu0 %v593
  %633 = vmatprep.subr.mxu0 %v596
  %634 = vmatpush1.msra.mxu0 %v595
  %635 = vmatprep.subr.mxu0 %v598
  %636 = vmatpush1.msra.mxu0 %v597
  %637 = vmatprep.subr.mxu0 %v600
  %638 = vmatpush1.msra.mxu0 %v599
  %639 = vmatprep.subr.mxu0 %v602
  %640 = vmatpush1.msra.mxu0 %v601
  %641 = vmatprep.subr.mxu0 %v604
  %642 = vmatpush1.msra.mxu0 %v603
  %643 = vmatprep.subr.mxu0 %v606
  %644 = vmatpush1.msra.mxu0 %v605
  %645 = vmatprep.subr.mxu0 %v608
  %646 = vmatpush1.msra.mxu0 %v607
  %647 = vmatprep.subr.mxu0 %v610
  %648 = vmatpush1.msra.mxu0 %v609
  %649 = vmatprep.subr.mxu0 %v612
  %650 = vmatpush1.msra.mxu0 %v611
  %651 = vmatprep.subr.mxu0 %v625
  %652 = vmatpush1.msra.mxu0 %v622
  %653 = vmatprep.subr.mxu0 0.0
  %654 = vmatpush1.msra.mxu0 0.0
  %655 = vmatprep.subr.mxu0 0.0
  %656 = vmatpush1.msra.mxu0 0.0
  %657 = vmatprep.subr.mxu0 0.0
  %658 = vmatpush1.msra.mxu0 0.0
  %659 = vmatprep.subr.mxu0 0.0
  %660 = vmatpush1.msra.mxu0 0.0
  %661 = vmatprep.subr.mxu0 0.0
  %662 = vmatpush1.msra.mxu0 0.0
  %663 = vmatprep.subr.mxu0 0.0
  %664 = vmatpush1.msra.mxu0 0.0
  %665 = vmatprep.subr.mxu0 0.0
  %666 = vmatpush1.msra.mxu0 0.0
  %667 = vmatprep.subr.mxu0 0.0
  %668 = vmatpush1.msra.mxu0 0.0
  %669 = vmatprep.subr.mxu0 0.0
  %670 = vmatpush1.msra.mxu0 0.0
  %671 = vmatprep.subr.mxu0 0.0
  %672 = vmatpush1.msra.mxu0 0.0
  %673 = vmatprep.subr.mxu0 0.0
  %674 = vmatpush1.msra.mxu0 0.0
  %675 = vmatprep.subr.mxu0 0.0
  %676 = vmatpush1.msra.mxu0 0.0
  %677 = vmatprep.subr.mxu0 0.0
  %678 = vmatpush1.msra.mxu0 0.0
  %679 = vmatprep.subr.mxu0 0.0
  %680 = vmatpush1.msra.mxu0 0.0
  %681 = vmatprep.subr.mxu0 0.0
  %682 = vmatpush1.msra.mxu0 0.0
  %683 = vmatprep.subr.mxu0 0.0
  %684 = vmatpush1.msra.mxu0 0.0
  %685 = vmatprep.subr.mxu0 0.0
  %686 = vmatpush1.msra.mxu0 0.0
  %687 = vmatprep.subr.mxu0 0.0
  %688 = vmatpush1.msra.mxu0 0.0
  %689 = vmatprep.subr.mxu0 0.0
  %690 = vmatpush1.msra.mxu0 0.0
  %691 = vmatprep.mubr.f32.mxu0 0.0
  %692 = vmatmul.mubr.f32.gmra.mrb[0].mxu0 %v616
  %v693 = vpop.f32.mrb[0].mxu0
  %v694 = vadd.f32 0.0, %v693
  %v695 = vpop.f32.mrb[0].mxu0
  %v696 = vadd.f32 0.0, %v695
  %697 = vmatprep.mubr.f32.mxu0 0.0
  %698 = vmatmul.mubr.f32.gmra.mrb[0].mxu0 %v619
  %v699 = vpop.f32.mrb[0].mxu0
  %v700 = vadd.f32 0.0, %v699
  %v701 = vpop.f32.mrb[0].mxu0
  %v702 = vadd.f32 0.0, %v701
  %703 = vdwg.mxu0
  %704 = vst [vmem:[%s12] sm:$0xff] %v694
  %705 = vst.msk [vmem:[%s12 + $0x8] sm:$0xff] %vm81, %v696
  %706 = vst [vmem:[%s12 + $0x10] sm:$0x3] %v700
  %vm707 = vcmask 517120
  %708 = vst.msk [vmem:[%s12 + $0x18] sm:$0x3] %vm707, %v702
  // Predicated region
  $region50: #{bpnet_forward.5} parent=0 // pred_check
    _
  $region51: #{bpnet_forward.5} parent=0 // pred_check_branch
    %710 = sbr.rel (0) target = $region53
  $region52: #{bpnet_forward.5} parent=0 // pred_region
    _
  $region53: #{bpnet_forward.5} parent=0 // pred_fallthru
    _
  // Predicated region
  $region54: #{bpnet_forward.5} parent=0 // pred_check
    _
  $region55: #{bpnet_forward.5} parent=0 // pred_check_branch
    %712 = sbr.rel (0) target = $region57
  $region56: #{bpnet_forward.5} parent=0 // pred_region
    _
  $region57: #{bpnet_forward.5} parent=0 // pred_fallthru
    _
  // Predicated region
  $region58: #{bpnet_forward.5} parent=0 // pred_check
    _
  $region59: #{bpnet_forward.5} parent=0 // pred_check_branch
    %714 = sbr.rel (0) target = $region61
  $region60: #{bpnet_forward.5} parent=0 // pred_region
    _
  $region61: #{bpnet_forward.5} parent=0 // pred_fallthru
    _
  // Predicated region
  $region62: #{bpnet_forward.5} parent=0 // pred_check
    _
  $region63: #{bpnet_forward.5} parent=0 // pred_check_branch
    %716 = sbr.rel (0) target = $region65
  $region64: #{bpnet_forward.5} parent=0 // pred_region
    _
  $region65: #{bpnet_forward.5} parent=0 // pred_fallthru
    _

// kernel: bpnet_forward.7
$region0: #{bpnet_forward.7}
  #allocation0 [shape = 'u32[]', space=smem, size = 0x4, offset = 0x4, fixed_abs, tag = 'smem constant byte address 0x4 - core index']
  #allocation1 [shape = 'u32[144,128]{1,0:T(1,128)}', space=vmem, size = 0x12000, scoped, tag = 'internal scratch']
  #allocation2 [shape = 'f32[15,128]{1,0:T(8,128)}', space=vmem, size = 0x2000, scoped, tag = 'scratch operand']
  %s0 = inlined_call_operand.vmem [shape: f32[2,15,768], index: 0, kind: input, shape index: {}]
  %s1 = inlined_call_operand.vmem [shape: f32[2,15,960], index: 1, kind: input, shape index: {}]
  %s2 = inlined_call_operand.vmem [shape: f32[2,1,768], index: 2, kind: input, shape index: {}]
  %s3 = inlined_call_operand.vmem [shape: f32[2,1,960], index: 3, kind: input, shape index: {}]
  %s4 = inlined_call_operand.vmem [shape: f32[2,15,1], index: 4, kind: output, shape index: {}]
  %s5 = sld [smem:[#allocation0]]
  $region131: #{bpnet_forward.7} parent=0
    _
  %s7 = ssub.s32 1, %s5
  %s8 = scalar_select 0, %s7, %s5
  $region1: #{bpnet_forward.7} parent=0
    #allocation3 [shape = 'u8[114688]{0}', space=vmem, size = 0x1c000, scoped, tag = 'input window, operand 1']
    loop: start=0, step=1, limit=8
    $region2: #{bpnet_forward.7} parent=1 // loop_pre_header
      _
    $region3: #{bpnet_forward.7} parent=1 // loop_header
      %s10 = sphi 0, %s14
      %p11 = scmp.ge.s32.totalorder %s10, 8
      %s17 = sphi 0, %s36
      %s18 = sphi 0, %s32
      %s19 = sphi 0, %s28
      %s20 = sphi 0, %s17
      %s21 = sphi 0, %s18
      %s22 = sphi 0, %s19
      %s23 = sphi 0, %s20
      %s24 = sphi 0, %s21
      %s25 = sphi 0, %s22
      %s47 = sphi 0, %s49
      %s50 = sphi 0, %s47
      %s51 = sphi 0, %s50
      %s67 = sphi 0, %s51
      %s83 = sphi 0, %s85
      %s86 = sphi 0, %s83
      %s87 = sphi 0, %s86
      %s103 = sphi 0, %s87
      %s115 = sphi 0, %s117
      %s118 = sphi 0, %s115
      %s119 = sphi 0, %s118
      %s135 = sphi 0, %s119
      %s149 = sphi 0, %s151
      %s152 = sphi 0, %s149
      %s153 = sphi 0, %s152
      %s169 = sphi 0, %s153
      %s177 = sphi 0, %s179
      %s180 = sphi 0, %s177
      %s181 = sphi 0, %s180
      %s197 = sphi 0, %s181
    $region4: #{bpnet_forward.7} parent=1 // loop_header_branch
      %13 = sbr.rel (%p11) target = $region8
    $region5: #{bpnet_forward.7} parent=1 // loop_body
      %s15 = ssub.s32 %s10, 1
      %s16 = ssub.s32 %s10, 2
      %s26 = sadd.s32 1, %s19
      %p27 = scmp.ge.s32.totalorder %s26, 3
      %s28 = scalar_select %p27, 0, %s26
      %s29 = sadd.s32 1, %s18
      %s30 = scalar_select %p27, %s29, %s18
      %p31 = scmp.ge.s32.totalorder %s30, 1
      %s32 = scalar_select %p31, 0, %s30
      %s33 = sadd.s32 1, %s17
      %s34 = scalar_select %p31, %s33, %s17
      %p35 = scmp.ge.s32.totalorder %s34, 2
      %s36 = scalar_select %p35, 0, %s34
      %p37 = scmp.lt.s32.totalorder %s19, 0
      %s38 = scalar_select %p37, %s19, 0
      %p39 = scmp.lt.s32.totalorder %s28, 0
      %s40 = scalar_select %p39, %s28, 0
      %s41 = ssub.s32 %s17, %s36
      %s42 = ssub.s32 %s18, %s32
      %s43 = sor.u32 %s41, %s42
      %s44 = ssub.s32 %s38, %s40
      %s45 = sor.u32 %s43, %s44
      %p46 = scmp.eq.s32.totalorder %s45, 0
      %s48 = sadd.s32 %s47, 1
      %s49 = scalar_select %p46, %s47, %s48
      %p52 = pneg %p46
      %p53 = scmp.eq.s32.totalorder %s10, 5
      %p54 = por %p52, %p53
      %p55 = scmp.ne.s32.totalorder %s47, %s50
      %p56 = scmp.eq.s32.totalorder %s10, 0
      %p57 = por %p55, %p56
      %p58 = scmp.ne.s32.totalorder %s47, %s50
      %p59 = scmp.eq.s32.totalorder %s15, 5
      %p60 = por %p58, %p59
      %p61 = scmp.ne.s32.totalorder %s50, %s51
      %p62 = scmp.eq.s32.totalorder %s15, 0
      %p63 = por %p61, %p62
      %p64 = scmp.ne.s32.totalorder %s50, %s51
      %p65 = scmp.eq.s32.totalorder %s16, 5
      %p66 = por %p64, %p65
      %p68 = scmp.ne.s32.totalorder %s51, %s67
      %p69 = scmp.eq.s32.totalorder %s16, 0
      %p70 = por %p68, %p69
      %s71 = ssub.s32 %s19, 1
      %p72 = scmp.gt.s32.totalorder %s71, 0
      %s73 = scalar_select %p72, %s71, 0
      %s74 = ssub.s32 %s28, 1
      %p75 = scmp.gt.s32.totalorder %s74, 0
      %s76 = scalar_select %p75, %s74, 0
      %s77 = ssub.s32 %s17, %s36
      %s78 = ssub.s32 %s18, %s32
      %s79 = sor.u32 %s77, %s78
      %s80 = ssub.s32 %s73, %s76
      %s81 = sor.u32 %s79, %s80
      %p82 = scmp.eq.s32.totalorder %s81, 0
      %s84 = sadd.s32 %s83, 1
      %s85 = scalar_select %p82, %s83, %s84
      %p88 = pneg %p82
      %p89 = scmp.eq.s32.totalorder %s10, 5
      %p90 = por %p88, %p89
      %p91 = scmp.ne.s32.totalorder %s83, %s86
      %p92 = scmp.eq.s32.totalorder %s10, 0
      %p93 = por %p91, %p92
      %p94 = scmp.ne.s32.totalorder %s83, %s86
      %p95 = scmp.eq.s32.totalorder %s15, 5
      %p96 = por %p94, %p95
      %p97 = scmp.ne.s32.totalorder %s86, %s87
      %p98 = scmp.eq.s32.totalorder %s15, 0
      %p99 = por %p97, %p98
      %p100 = scmp.ne.s32.totalorder %s86, %s87
      %p101 = scmp.eq.s32.totalorder %s16, 5
      %p102 = por %p100, %p101
      %p104 = scmp.ne.s32.totalorder %s87, %s103
      %p105 = scmp.eq.s32.totalorder %s16, 0
      %p106 = por %p104, %p105
      %p107 = scmp.lt.s32.totalorder %s19, 0
      %s108 = scalar_select %p107, %s19, 0
      %p109 = scmp.lt.s32.totalorder %s28, 0
      %s110 = scalar_select %p109, %s28, 0
      %s111 = ssub.s32 %s17, %s36
      %s112 = ssub.s32 %s108, %s110
      %s113 = sor.u32 %s111, %s112
      %p114 = scmp.eq.s32.totalorder %s113, 0
      %s116 = sadd.s32 %s115, 1
      %s117 = scalar_select %p114, %s115, %s116
      %p120 = pneg %p114
      %p121 = scmp.eq.s32.totalorder %s10, 5
      %p122 = por %p120, %p121
      %p123 = scmp.ne.s32.totalorder %s115, %s118
      %p124 = scmp.eq.s32.totalorder %s10, 0
      %p125 = por %p123, %p124
      %p126 = scmp.ne.s32.totalorder %s115, %s118
      %p127 = scmp.eq.s32.totalorder %s15, 5
      %p128 = por %p126, %p127
      %p129 = scmp.ne.s32.totalorder %s118, %s119
      %p130 = scmp.eq.s32.totalorder %s15, 0
      %p131 = por %p129, %p130
      %p132 = scmp.ne.s32.totalorder %s118, %s119
      %p133 = scmp.eq.s32.totalorder %s16, 5
      %p134 = por %p132, %p133
      %p136 = scmp.ne.s32.totalorder %s119, %s135
      %p137 = scmp.eq.s32.totalorder %s16, 0
      %p138 = por %p136, %p137
      %s139 = ssub.s32 %s19, 1
      %p140 = scmp.gt.s32.totalorder %s139, 0
      %s141 = scalar_select %p140, %s139, 0
      %s142 = ssub.s32 %s28, 1
      %p143 = scmp.gt.s32.totalorder %s142, 0
      %s144 = scalar_select %p143, %s142, 0
      %s145 = ssub.s32 %s17, %s36
      %s146 = ssub.s32 %s141, %s144
      %s147 = sor.u32 %s145, %s146
      %p148 = scmp.eq.s32.totalorder %s147, 0
      %s150 = sadd.s32 %s149, 1
      %s151 = scalar_select %p148, %s149, %s150
      %p154 = pneg %p148
      %p155 = scmp.eq.s32.totalorder %s10, 5
      %p156 = por %p154, %p155
      %p157 = scmp.ne.s32.totalorder %s149, %s152
      %p158 = scmp.eq.s32.totalorder %s10, 0
      %p159 = por %p157, %p158
      %p160 = scmp.ne.s32.totalorder %s149, %s152
      %p161 = scmp.eq.s32.totalorder %s15, 5
      %p162 = por %p160, %p161
      %p163 = scmp.ne.s32.totalorder %s152, %s153
      %p164 = scmp.eq.s32.totalorder %s15, 0
      %p165 = por %p163, %p164
      %p166 = scmp.ne.s32.totalorder %s152, %s153
      %p167 = scmp.eq.s32.totalorder %s16, 5
      %p168 = por %p166, %p167
      %p170 = scmp.ne.s32.totalorder %s153, %s169
      %p171 = scmp.eq.s32.totalorder %s16, 0
      %p172 = por %p170, %p171
      %s173 = ssub.s32 %s17, %s36
      %s174 = ssub.s32 %s18, %s32
      %s175 = sor.u32 %s173, %s174
      %p176 = scmp.eq.s32.totalorder %s175, 0
      %s178 = sadd.s32 %s177, 1
      %s179 = scalar_select %p176, %s177, %s178
      %p182 = pneg %p176
      %p183 = scmp.eq.s32.totalorder %s10, 5
      %p184 = por %p182, %p183
      %p185 = scmp.ne.s32.totalorder %s177, %s180
      %p186 = scmp.eq.s32.totalorder %s10, 0
      %p187 = por %p185, %p186
      %p188 = scmp.ne.s32.totalorder %s177, %s180
      %p189 = scmp.eq.s32.totalorder %s15, 5
      %p190 = por %p188, %p189
      %p191 = scmp.ne.s32.totalorder %s180, %s181
      %p192 = scmp.eq.s32.totalorder %s15, 0
      %p193 = por %p191, %p192
      %p194 = scmp.ne.s32.totalorder %s180, %s181
      %p195 = scmp.eq.s32.totalorder %s16, 5
      %p196 = por %p194, %p195
      %p198 = scmp.ne.s32.totalorder %s181, %s197
      %p199 = scmp.eq.s32.totalorder %s16, 0
      %p200 = por %p198, %p199
      %p201 = scmp.le.s32.totalorder 1, %s10
      %p202 = scmp.lt.s32.totalorder %s10, 7
      %p203 = pnand %p201, %p202
      %p204 = pneg %p203
      // Predicated region
      $region9: #{bpnet_forward.7} parent=5 // pred_check
        _
      $region10: #{bpnet_forward.7} parent=5 // pred_check_branch
        %206 = sbr.rel (%p203) target = $region12
      $region11: #{bpnet_forward.7} parent=5 // pred_region
        %s207 = ssub.s32 %s10, 1
      $region12: #{bpnet_forward.7} parent=5 // pred_fallthru
        _
      %p208 = scmp.lt.s32.totalorder %s10, 6
      // Predicated region
      $region13: #{bpnet_forward.7} parent=5 // pred_check
        %p209 = pneg %p208
      $region14: #{bpnet_forward.7} parent=5 // pred_check_branch
        %211 = sbr.rel (%p209) target = $region16
      $region15: #{bpnet_forward.7} parent=5 // pred_region
        // Predicated region
        $region17: #{bpnet_forward.7} parent=15 // pred_check
          %p212 = pneg %p57
        $region18: #{bpnet_forward.7} parent=15 // pred_check_branch
          %214 = sbr.rel (%p212) target = $region20
        $region19: #{bpnet_forward.7} parent=15 // pred_region
          %p215 = scmp.lt.s32.totalorder %s19, 0
          %s216 = scalar_select %p215, %s19, 0
          %s217 = smul.u32 2, %s18
          %s218 = smul.u32 6, %s216
          %p219 = scmp.lt.s32.totalorder %s17, 1
          %s220 = scalar_select %p219, %s17, 1
          %p221 = scmp.lt.s32.totalorder %s217, 1
          %s222 = scalar_select %p221, %s217, 1
          %p223 = scmp.lt.s32.totalorder %s218, 5
          %s224 = scalar_select %p223, %s218, 5
          %s225 = smul.addr %s222, 6
          %s226 = sadd.s32 %s224, %s225
          %s227 = smul.addr %s220, 12
          %s228 = sadd.s32 %s226, %s227
          %s229 = smul.addr %s228, 8
          %s230 = scalar_lea.vmem %s0, %s229
          %p231 = scmp.lt.s32.totalorder %s19, 0
          %s232 = scalar_select %p231, %s19, 0
          %s233 = smul.u32 2, %s18
          %s234 = smul.u32 6, %s232
        $region20: #{bpnet_forward.7} parent=15 // pred_fallthru
          _
        // Predicated region
        $region21: #{bpnet_forward.7} parent=15 // pred_check
          %p235 = pneg %p93
        $region22: #{bpnet_forward.7} parent=15 // pred_check_branch
          %237 = sbr.rel (%p235) target = $region24
        $region23: #{bpnet_forward.7} parent=15 // pred_region
          %s238 = sand.u32 %s83, 1
          %s239 = sand.u32 %s83, 1
          %s240 = smul.addr %s239, 112
          %s241 = scalar_lea.vmem [#allocation3], %s240
          %s242 = ssub.s32 %s19, 1
          %p243 = scmp.gt.s32.totalorder %s242, 0
          %s244 = scalar_select %p243, %s242, 0
          %s245 = smul.u32 2, %s18
          %s246 = smul.u32 7, %s244
          %s247 = ssub.s32 8, %s246
          %p248 = scmp.lt.s32.totalorder %s247, 7
          %s249 = scalar_select %p248, %s247, 7
          %s250 = smul.u32 256, %s249
          %p251 = scmp.ne.s32.totalorder 0, %s250
          %s252 = smul.addr %s245, 8
          %s253 = sadd.s32 %s246, %s252
          %s254 = smul.addr %s17, 16
          %s255 = sadd.s32 %s253, %s254
          %s256 = smul.addr %s255, 8
          %s257 = scalar_lea.vmem %s1, %s256
          %s258 = smul.u32 %s249, 8
          // Predicated region
          $region25: #{bpnet_forward.7} parent=23 // pred_check
            %p259 = pneg %p251
          $region26: #{bpnet_forward.7} parent=23 // pred_check_branch
            %261 = sbr.rel (%p259) target = $region28
          $region27: #{bpnet_forward.7} parent=23 // pred_region
            %p262 = scmp.lt.u32.totalorder %s258, 8
            %p263 = pneg %p262
            // Predicated region
            $region29: #{bpnet_forward.7} parent=27 // pred_check
              _
            $region30: #{bpnet_forward.7} parent=27 // pred_check_branch
              %265 = sbr.rel (%p262) target = $region32
            $region31: #{bpnet_forward.7} parent=27 // pred_region
              %s282 = sand.u32 %s258, 7
              %p283 = scmp.eq.s32.totalorder %s282, 0
              // Predicated region
              $region44: #{bpnet_forward.7} parent=31 // pred_check
                %p284 = pneg %p283
              $region45: #{bpnet_forward.7} parent=31 // pred_check_branch
                %286 = sbr.rel (%p284) target = $region47
              $region46: #{bpnet_forward.7} parent=31 // pred_region
                %s287 = sshrl.u32 %s258, 3
                %s288 = sshrl.u32 %s287, 5
                // While loop
                $region48: #{bpnet_forward.7} parent=46 // loop_pre_header
                  _
                $region49: #{bpnet_forward.7} parent=46 // loop_header
                  %s292 = sphi 0, %s294
                  %p293 = scmp.ge.s32.totalorder %s292, %s288
                  %s297 = sphi 0, %s430
                  %s298 = sphi %s257, %s433
                  %s299 = sphi %s241, %s434
                $region50: #{bpnet_forward.7} parent=46 // loop_header_branch
                  %296 = sbr.rel (%p293) target = $region54
                $region51: #{bpnet_forward.7} parent=46 // loop_body
                  %v300 = vld [vmem:[%s298] sm:$0xff]
                  %301 = vst [vmem:[%s299] sm:$0xff] %v300
                  %v302 = vld [vmem:[%s298 + $0x8] sm:$0xff]
                  %303 = vst [vmem:[%s299 + $0x8] sm:$0xff] %v302
                  %v304 = vld [vmem:[%s298 + $0x10] sm:$0xff]
                  %305 = vst [vmem:[%s299 + $0x10] sm:$0xff] %v304
                  %v306 = vld [vmem:[%s298 + $0x18] sm:$0xff]
                  %307 = vst [vmem:[%s299 + $0x18] sm:$0xff] %v306
                  %v308 = vld [vmem:[%s298 + $0x20] sm:$0xff]
                  %309 = vst [vmem:[%s299 + $0x20] sm:$0xff] %v308
                  %v310 = vld [vmem:[%s298 + $0x28] sm:$0xff]
                  %311 = vst [vmem:[%s299 + $0x28] sm:$0xff] %v310
                  %v312 = vld [vmem:[%s298 + $0x30] sm:$0xff]
                  %313 = vst [vmem:[%s299 + $0x30] sm:$0xff] %v312
                  %v314 = vld [vmem:[%s298 + $0x38] sm:$0xff]
                  %315 = vst [vmem:[%s299 + $0x38] sm:$0xff] %v314
                  %v316 = vld [vmem:[%s298 + $0x40] sm:$0xff]
                  %317 = vst [vmem:[%s299 + $0x40] sm:$0xff] %v316
                  %v318 = vld [vmem:[%s298 + $0x48] sm:$0xff]
                  %319 = vst [vmem:[%s299 + $0x48] sm:$0xff] %v318
                  %v320 = vld [vmem:[%s298 + $0x50] sm:$0xff]
                  %321 = vst [vmem:[%s299 + $0x50] sm:$0xff] %v320
                  %v322 = vld [vmem:[%s298 + $0x58] sm:$0xff]
                  %323 = vst [vmem:[%s299 + $0x58] sm:$0xff] %v322
                  %v324 = vld [vmem:[%s298 + $0x60] sm:$0xff]
                  %325 = vst [vmem:[%s299 + $0x60] sm:$0xff] %v324
                  %v326 = vld [vmem:[%s298 + $0x68] sm:$0xff]
                  %327 = vst [vmem:[%s299 + $0x68] sm:$0xff] %v326
                  %v328 = vld [vmem:[%s298 + $0x70] sm:$0xff]
                  %329 = vst [vmem:[%s299 + $0x70] sm:$0xff] %v328
                  %v330 = vld [vmem:[%s298 + $0x78] sm:$0xff]
                  %331 = vst [vmem:[%s299 + $0x78] sm:$0xff] %v330
                  %v332 = vld [vmem:[%s298 + $0x80] sm:$0xff]
                  %333 = vst [vmem:[%s299 + $0x80] sm:$0xff] %v332
                  %v334 = vld [vmem:[%s298 + $0x88] sm:$0xff]
                  %335 = vst [vmem:[%s299 + $0x88] sm:$0xff] %v334
                  %v336 = vld [vmem:[%s298 + $0x90] sm:$0xff]
                  %337 = vst [vmem:[%s299 + $0x90] sm:$0xff] %v336
                  %v338 = vld [vmem:[%s298 + $0x98] sm:$0xff]
                  %339 = vst [vmem:[%s299 + $0x98] sm:$0xff] %v338
                  %v340 = vld [vmem:[%s298 + $0xa0] sm:$0xff]
                  %341 = vst [vmem:[%s299 + $0xa0] sm:$0xff] %v340
                  %v342 = vld [vmem:[%s298 + $0xa8] sm:$0xff]
                  %343 = vst [vmem:[%s299 + $0xa8] sm:$0xff] %v342
                  %v344 = vld [vmem:[%s298 + $0xb0] sm:$0xff]
                  %345 = vst [vmem:[%s299 + $0xb0] sm:$0xff] %v344
                  %v346 = vld [vmem:[%s298 + $0xb8] sm:$0xff]
                  %347 = vst [vmem:[%s299 + $0xb8] sm:$0xff] %v346
                  %v348 = vld [vmem:[%s298 + $0xc0] sm:$0xff]
                  %349 = vst [vmem:[%s299 + $0xc0] sm:$0xff] %v348
                  %v350 = vld [vmem:[%s298 + $0xc8] sm:$0xff]
                  %351 = vst [vmem:[%s299 + $0xc8] sm:$0xff] %v350
                  %v352 = vld [vmem:[%s298 + $0xd0] sm:$0xff]
                  %353 = vst [vmem:[%s299 + $0xd0] sm:$0xff] %v352
                  %v354 = vld [vmem:[%s298 + $0xd8] sm:$0xff]
                  %355 = vst [vmem:[%s299 + $0xd8] sm:$0xff] %v354
                  %v356 = vld [vmem:[%s298 + $0xe0] sm:$0xff]
                  %357 = vst [vmem:[%s299 + $0xe0] sm:$0xff] %v356
                  %v358 = vld [vmem:[%s298 + $0xe8] sm:$0xff]
                  %359 = vst [vmem:[%s299 + $0xe8] sm:$0xff] %v358
                  %v360 = vld [vmem:[%s298 + $0xf0] sm:$0xff]
                  %361 = vst [vmem:[%s299 + $0xf0] sm:$0xff] %v360
                  %v362 = vld [vmem:[%s298 + $0xf8] sm:$0xff]
                  %363 = vst [vmem:[%s299 + $0xf8] sm:$0xff] %v362
                  %v364 = vld [vmem:[%s298 + $0x40] sm:$0xff]
                  %365 = vst [vmem:[%s299 + $0x38] sm:$0xff] %v364
                  %v366 = vld [vmem:[%s298 + $0x48] sm:$0xff]
                  %367 = vst [vmem:[%s299 + $0x40] sm:$0xff] %v366
                  %v368 = vld [vmem:[%s298 + $0x50] sm:$0xff]
                  %369 = vst [vmem:[%s299 + $0x48] sm:$0xff] %v368
                  %v370 = vld [vmem:[%s298 + $0x58] sm:$0xff]
                  %371 = vst [vmem:[%s299 + $0x50] sm:$0xff] %v370
                  %v372 = vld [vmem:[%s298 + $0x60] sm:$0xff]
                  %373 = vst [vmem:[%s299 + $0x58] sm:$0xff] %v372
                  %v374 = vld [vmem:[%s298 + $0x68] sm:$0xff]
                  %375 = vst [vmem:[%s299 + $0x60] sm:$0xff] %v374
                  %v376 = vld [vmem:[%s298 + $0x70] sm:$0xff]
                  %377 = vst [vmem:[%s299 + $0x68] sm:$0xff] %v376
                  %v378 = vld [vmem:[%s298 + $0x78] sm:$0xff]
                  %379 = vst [vmem:[%s299 + $0x70] sm:$0xff] %v378
                  %v380 = vld [vmem:[%s298 + $0x80] sm:$0xff]
                  %381 = vst [vmem:[%s299 + $0x78] sm:$0xff] %v380
                  %v382 = vld [vmem:[%s298 + $0x88] sm:$0xff]
                  %383 = vst [vmem:[%s299 + $0x80] sm:$0xff] %v382
                  %v384 = vld [vmem:[%s298 + $0x90] sm:$0xff]
                  %385 = vst [vmem:[%s299 + $0x88] sm:$0xff] %v384
                  %v386 = vld [vmem:[%s298 + $0x98] sm:$0xff]
                  %387 = vst [vmem:[%s299 + $0x90] sm:$0xff] %v386
                  %v388 = vld [vmem:[%s298 + $0xa0] sm:$0xff]
                  %389 = vst [vmem:[%s299 + $0x98] sm:$0xff] %v388
                  %v390 = vld [vmem:[%s298 + $0xa8] sm:$0xff]
                  %391 = vst [vmem:[%s299 + $0xa0] sm:$0xff] %v390
                  %v392 = vld [vmem:[%s298 + $0xb0] sm:$0xff]
                  %393 = vst [vmem:[%s299 + $0xa8] sm:$0xff] %v392
                  %v394 = vld [vmem:[%s298 + $0xb8] sm:$0xff]
                  %395 = vst [vmem:[%s299 + $0xb0] sm:$0xff] %v394
                  %v396 = vld [vmem:[%s298 + $0xc0] sm:$0xff]
                  %397 = vst [vmem:[%s299 + $0xb8] sm:$0xff] %v396
                  %v398 = vld [vmem:[%s298 + $0xc8] sm:$0xff]
                  %399 = vst [vmem:[%s299 + $0xc0] sm:$0xff] %v398
                  %v400 = vld [vmem:[%s298 + $0xd0] sm:$0xff]
                  %401 = vst [vmem:[%s299 + $0xc8] sm:$0xff] %v400
                  %v402 = vld [vmem:[%s298 + $0xd8] sm:$0xff]
                  %403 = vst [vmem:[%s299 + $0xd0] sm:$0xff] %v402
                  %v404 = vld [vmem:[%s298 + $0xe0] sm:$0xff]
                  %405 = vst [vmem:[%s299 + $0xd8] sm:$0xff] %v404
                  %v406 = vld [vmem:[%s298 + $0xe8] sm:$0xff]
                  %407 = vst [vmem:[%s299 + $0xe0] sm:$0xff] %v406
                  %v408 = vld [vmem:[%s298 + $0xf0] sm:$0xff]
                  %409 = vst [vmem:[%s299 + $0xe8] sm:$0xff] %v408
                  %v410 = vld [vmem:[%s298 + $0xf8] sm:$0xff]
                  %411 = vst [vmem:[%s299 + $0xf0] sm:$0xff] %v410
                  %v412 = vld [vmem:[%s298 + $0x100] sm:$0xff]
                  %413 = vst [vmem:[%s299 + $0xf8] sm:$0xff] %v412
                  %v414 = vld [vmem:[%s298 + $0x108] sm:$0xff]
                  %415 = vst [vmem:[%s299 + $0x100] sm:$0xff] %v414
                  %v416 = vld [vmem:[%s298 + $0x110] sm:$0xff]
                  %417 = vst [vmem:[%s299 + $0x108] sm:$0xff] %v416
                  %v418 = vld [vmem:[%s298 + $0x118] sm:$0xff]
                  %419 = vst [vmem:[%s299 + $0x110] sm:$0xff] %v418
                  %v420 = vld [vmem:[%s298 + $0x120] sm:$0xff]
                  %421 = vst [vmem:[%s299 + $0x118] sm:$0xff] %v420
                  %v422 = vld [vmem:[%s298 + $0x128] sm:$0xff]
                  %423 = vst [vmem:[%s299 + $0x120] sm:$0xff] %v422
                  %v424 = vld [vmem:[%s298 + $0x130] sm:$0xff]
                  %425 = vst [vmem:[%s299 + $0x128] sm:$0xff] %v424
                  %v426 = vld [vmem:[%s298 + $0x138] sm:$0xff]
                  %427 = vst [vmem:[%s299 + $0x130] sm:$0xff] %v426
                  %s428 = sadd.s32 1, %s297
                  %p429 = scmp.ge.s32.totalorder %s428, %s288
                  %s430 = scalar_select %p429, 0, %s428
                  %s431 = smul.u32 %s430, 256
                  %s432 = smul.u32 %s430, 256
                  %s433 = scalar_lea.vmem %s257, %s431
                  %s434 = scalar_lea.vmem %s241, %s432 [#allocation3]
                $region52: #{bpnet_forward.7} parent=46 // loop_footer
                  %s294 = sadd.s32 %s292, 1
                $region53: #{bpnet_forward.7} parent=46 // loop_footer_branch
                  %291 = sbr.rel target = $region49
                $region54: #{bpnet_forward.7} parent=46 // loop_exit
                  _
                %s435 = sshrl.u32 %s287, 5
                %s436 = sand.u32 %s287, 31
                %s437 = smul.u32 %s435, 32
                %s438 = smul.u32 128, %s437
                %s439 = sshra.s32 %s438, 4
                %s440 = scalar_lea.vmem %s257, %s439
                %s441 = smul.u32 128, %s437
                %s442 = sshra.s32 %s441, 4
                %s443 = scalar_lea.vmem %s241, %s442 [#allocation3]
                // While loop
                $region55: #{bpnet_forward.7} parent=46 // loop_pre_header
                  _
                $region56: #{bpnet_forward.7} parent=46 // loop_header
                  %s447 = sphi 0, %s449
                  %p448 = scmp.ge.s32.totalorder %s447, %s436
                  %s452 = sphi 0, %s461
                  %s453 = sphi %s440, %s464
                  %s454 = sphi %s443, %s465
                $region57: #{bpnet_forward.7} parent=46 // loop_header_branch
                  %451 = sbr.rel (%p448) target = $region61
                $region58: #{bpnet_forward.7} parent=46 // loop_body
                  %v455 = vld [vmem:[%s453] sm:$0xff]
                  %456 = vst [vmem:[%s454] sm:$0xff] %v455
                  %v457 = vld [vmem:[%s453 + $0x40] sm:$0xff]
                  %458 = vst [vmem:[%s454 + $0x38] sm:$0xff] %v457
                  %s459 = sadd.s32 1, %s452
                  %p460 = scmp.ge.s32.totalorder %s459, %s436
                  %s461 = scalar_select %p460, 0, %s459
                  %s462 = smul.u32 %s461, 8
                  %s463 = smul.u32 %s461, 8
                  %s464 = scalar_lea.vmem %s440, %s462
                  %s465 = scalar_lea.vmem %s443, %s463 [#allocation3]
                $region59: #{bpnet_forward.7} parent=46 // loop_footer
                  %s449 = sadd.s32 %s447, 1
                $region60: #{bpnet_forward.7} parent=46 // loop_footer_branch
                  %446 = sbr.rel target = $region56
                $region61: #{bpnet_forward.7} parent=46 // loop_exit
                  _
              $region47: #{bpnet_forward.7} parent=31 // pred_fallthru
                _
              %p466 = pneg %p283
              // Predicated region
              $region62: #{bpnet_forward.7} parent=31 // pred_check
                _
              $region63: #{bpnet_forward.7} parent=31 // pred_check_branch
                %468 = sbr.rel (%p283) target = $region65
              $region64: #{bpnet_forward.7} parent=31 // pred_region
                %s469 = sand.u32 %s258, 7
                %s470 = ssub.s32 %s258, %s469
                %s471 = scalar_lea.vmem %s257, %s470
                %s472 = ssub.s32 %s258, %s469
                %s473 = scalar_lea.vmem %s241, %s472 [#allocation3]
                %s474 = sshrl.u32 %s258, 3
                %s475 = sshrl.u32 %s474, 5
                // While loop
                $region66: #{bpnet_forward.7} parent=64 // loop_pre_header
                  _
                $region67: #{bpnet_forward.7} parent=64 // loop_header
                  %s479 = sphi 0, %s481
                  %p480 = scmp.ge.s32.totalorder %s479, %s475
                  %s484 = sphi 0, %s617
                  %s485 = sphi %s257, %s620
                  %s486 = sphi %s241, %s621
                $region68: #{bpnet_forward.7} parent=64 // loop_header_branch
                  %483 = sbr.rel (%p480) target = $region72
                $region69: #{bpnet_forward.7} parent=64 // loop_body
                  %v487 = vld [vmem:[%s485] sm:$0xff]
                  %488 = vst [vmem:[%s486] sm:$0xff] %v487
                  %v489 = vld [vmem:[%s485 + $0x8] sm:$0xff]
                  %490 = vst [vmem:[%s486 + $0x8] sm:$0xff] %v489
                  %v491 = vld [vmem:[%s485 + $0x10] sm:$0xff]
                  %492 = vst [vmem:[%s486 + $0x10] sm:$0xff] %v491
                  %v493 = vld [vmem:[%s485 + $0x18] sm:$0xff]
                  %494 = vst [vmem:[%s486 + $0x18] sm:$0xff] %v493
                  %v495 = vld [vmem:[%s485 + $0x20] sm:$0xff]
                  %496 = vst [vmem:[%s486 + $0x20] sm:$0xff] %v495
                  %v497 = vld [vmem:[%s485 + $0x28] sm:$0xff]
                  %498 = vst [vmem:[%s486 + $0x28] sm:$0xff] %v497
                  %v499 = vld [vmem:[%s485 + $0x30] sm:$0xff]
                  %500 = vst [vmem:[%s486 + $0x30] sm:$0xff] %v499
                  %v501 = vld [vmem:[%s485 + $0x38] sm:$0xff]
                  %502 = vst [vmem:[%s486 + $0x38] sm:$0xff] %v501
                  %v503 = vld [vmem:[%s485 + $0x40] sm:$0xff]
                  %504 = vst [vmem:[%s486 + $0x40] sm:$0xff] %v503
                  %v505 = vld [vmem:[%s485 + $0x48] sm:$0xff]
                  %506 = vst [vmem:[%s486 + $0x48] sm:$0xff] %v505
                  %v507 = vld [vmem:[%s485 + $0x50] sm:$0xff]
                  %508 = vst [vmem:[%s486 + $0x50] sm:$0xff] %v507
                  %v509 = vld [vmem:[%s485 + $0x58] sm:$0xff]
                  %510 = vst [vmem:[%s486 + $0x58] sm:$0xff] %v509
                  %v511 = vld [vmem:[%s485 + $0x60] sm:$0xff]
                  %512 = vst [vmem:[%s486 + $0x60] sm:$0xff] %v511
                  %v513 = vld [vmem:[%s485 + $0x68] sm:$0xff]
                  %514 = vst [vmem:[%s486 + $0x68] sm:$0xff] %v513
                  %v515 = vld [vmem:[%s485 + $0x70] sm:$0xff]
                  %516 = vst [vmem:[%s486 + $0x70] sm:$0xff] %v515
                  %v517 = vld [vmem:[%s485 + $0x78] sm:$0xff]
                  %518 = vst [vmem:[%s486 + $0x78] sm:$0xff] %v517
                  %v519 = vld [vmem:[%s485 + $0x80] sm:$0xff]
                  %520 = vst [vmem:[%s486 + $0x80] sm:$0xff] %v519
                  %v521 = vld [vmem:[%s485 + $0x88] sm:$0xff]
                  %522 = vst [vmem:[%s486 + $0x88] sm:$0xff] %v521
                  %v523 = vld [vmem:[%s485 + $0x90] sm:$0xff]
                  %524 = vst [vmem:[%s486 + $0x90] sm:$0xff] %v523
                  %v525 = vld [vmem:[%s485 + $0x98] sm:$0xff]
                  %526 = vst [vmem:[%s486 + $0x98] sm:$0xff] %v525
                  %v527 = vld [vmem:[%s485 + $0xa0] sm:$0xff]
                  %528 = vst [vmem:[%s486 + $0xa0] sm:$0xff] %v527
                  %v529 = vld [vmem:[%s485 + $0xa8] sm:$0xff]
                  %530 = vst [vmem:[%s486 + $0xa8] sm:$0xff] %v529
                  %v531 = vld [vmem:[%s485 + $0xb0] sm:$0xff]
                  %532 = vst [vmem:[%s486 + $0xb0] sm:$0xff] %v531
                  %v533 = vld [vmem:[%s485 + $0xb8] sm:$0xff]
                  %534 = vst [vmem:[%s486 + $0xb8] sm:$0xff] %v533
                  %v535 = vld [vmem:[%s485 + $0xc0] sm:$0xff]
                  %536 = vst [vmem:[%s486 + $0xc0] sm:$0xff] %v535
                  %v537 = vld [vmem:[%s485 + $0xc8] sm:$0xff]
                  %538 = vst [vmem:[%s486 + $0xc8] sm:$0xff] %v537
                  %v539 = vld [vmem:[%s485 + $0xd0] sm:$0xff]
                  %540 = vst [vmem:[%s486 + $0xd0] sm:$0xff] %v539
                  %v541 = vld [vmem:[%s485 + $0xd8] sm:$0xff]
                  %542 = vst [vmem:[%s486 + $0xd8] sm:$0xff] %v541
                  %v543 = vld [vmem:[%s485 + $0xe0] sm:$0xff]
                  %544 = vst [vmem:[%s486 + $0xe0] sm:$0xff] %v543
                  %v545 = vld [vmem:[%s485 + $0xe8] sm:$0xff]
                  %546 = vst [vmem:[%s486 + $0xe8] sm:$0xff] %v545
                  %v547 = vld [vmem:[%s485 + $0xf0] sm:$0xff]
                  %548 = vst [vmem:[%s486 + $0xf0] sm:$0xff] %v547
                  %v549 = vld [vmem:[%s485 + $0xf8] sm:$0xff]
                  %550 = vst [vmem:[%s486 + $0xf8] sm:$0xff] %v549
                  %v551 = vld [vmem:[%s485 + $0x40] sm:$0xff]
                  %552 = vst [vmem:[%s486 + $0x38] sm:$0xff] %v551
                  %v553 = vld [vmem:[%s485 + $0x48] sm:$0xff]
                  %554 = vst [vmem:[%s486 + $0x40] sm:$0xff] %v553
                  %v555 = vld [vmem:[%s485 + $0x50] sm:$0xff]
                  %556 = vst [vmem:[%s486 + $0x48] sm:$0xff] %v555
                  %v557 = vld [vmem:[%s485 + $0x58] sm:$0xff]
                  %558 = vst [vmem:[%s486 + $0x50] sm:$0xff] %v557
                  %v559 = vld [vmem:[%s485 + $0x60] sm:$0xff]
                  %560 = vst [vmem:[%s486 + $0x58] sm:$0xff] %v559
                  %v561 = vld [vmem:[%s485 + $0x68] sm:$0xff]
                  %562 = vst [vmem:[%s486 + $0x60] sm:$0xff] %v561
                  %v563 = vld [vmem:[%s485 + $0x70] sm:$0xff]
                  %564 = vst [vmem:[%s486 + $0x68] sm:$0xff] %v563
                  %v565 = vld [vmem:[%s485 + $0x78] sm:$0xff]
                  %566 = vst [vmem:[%s486 + $0x70] sm:$0xff] %v565
                  %v567 = vld [vmem:[%s485 + $0x80] sm:$0xff]
                  %568 = vst [vmem:[%s486 + $0x78] sm:$0xff] %v567
                  %v569 = vld [vmem:[%s485 + $0x88] sm:$0xff]
                  %570 = vst [vmem:[%s486 + $0x80] sm:$0xff] %v569
                  %v571 = vld [vmem:[%s485 + $0x90] sm:$0xff]
                  %572 = vst [vmem:[%s486 + $0x88] sm:$0xff] %v571
                  %v573 = vld [vmem:[%s485 + $0x98] sm:$0xff]
                  %574 = vst [vmem:[%s486 + $0x90] sm:$0xff] %v573
                  %v575 = vld [vmem:[%s485 + $0xa0] sm:$0xff]
                  %576 = vst [vmem:[%s486 + $0x98] sm:$0xff] %v575
                  %v577 = vld [vmem:[%s485 + $0xa8] sm:$0xff]
                  %578 = vst [vmem:[%s486 + $0xa0] sm:$0xff] %v577
                  %v579 = vld [vmem:[%s485 + $0xb0] sm:$0xff]
                  %580 = vst [vmem:[%s486 + $0xa8] sm:$0xff] %v579
                  %v581 = vld [vmem:[%s485 + $0xb8] sm:$0xff]
                  %582 = vst [vmem:[%s486 + $0xb0] sm:$0xff] %v581
                  %v583 = vld [vmem:[%s485 + $0xc0] sm:$0xff]
                  %584 = vst [vmem:[%s486 + $0xb8] sm:$0xff] %v583
                  %v585 = vld [vmem:[%s485 + $0xc8] sm:$0xff]
                  %586 = vst [vmem:[%s486 + $0xc0] sm:$0xff] %v585
                  %v587 = vld [vmem:[%s485 + $0xd0] sm:$0xff]
                  %588 = vst [vmem:[%s486 + $0xc8] sm:$0xff] %v587
                  %v589 = vld [vmem:[%s485 + $0xd8] sm:$0xff]
                  %590 = vst [vmem:[%s486 + $0xd0] sm:$0xff] %v589
                  %v591 = vld [vmem:[%s485 + $0xe0] sm:$0xff]
                  %592 = vst [vmem:[%s486 + $0xd8] sm:$0xff] %v591
                  %v593 = vld [vmem:[%s485 + $0xe8] sm:$0xff]
                  %594 = vst [vmem:[%s486 + $0xe0] sm:$0xff] %v593
                  %v595 = vld [vmem:[%s485 + $0xf0] sm:$0xff]
                  %596 = vst [vmem:[%s486 + $0xe8] sm:$0xff] %v595
                  %v597 = vld [vmem:[%s485 + $0xf8] sm:$0xff]
                  %598 = vst [vmem:[%s486 + $0xf0] sm:$0xff] %v597
                  %v599 = vld [vmem:[%s485 + $0x100] sm:$0xff]
                  %600 = vst [vmem:[%s486 + $0xf8] sm:$0xff] %v599
                  %v601 = vld [vmem:[%s485 + $0x108] sm:$0xff]
                  %602 = vst [vmem:[%s486 + $0x100] sm:$0xff] %v601
                  %v603 = vld [vmem:[%s485 + $0x110] sm:$0xff]
                  %604 = vst [vmem:[%s486 + $0x108] sm:$0xff] %v603
                  %v605 = vld [vmem:[%s485 + $0x118] sm:$0xff]
                  %606 = vst [vmem:[%s486 + $0x110] sm:$0xff] %v605
                  %v607 = vld [vmem:[%s485 + $0x120] sm:$0xff]
                  %608 = vst [vmem:[%s486 + $0x118] sm:$0xff] %v607
                  %v609 = vld [vmem:[%s485 + $0x128] sm:$0xff]
                  %610 = vst [vmem:[%s486 + $0x120] sm:$0xff] %v609
                  %v611 = vld [vmem:[%s485 + $0x130] sm:$0xff]
                  %612 = vst [vmem:[%s486 + $0x128] sm:$0xff] %v611
                  %v613 = vld [vmem:[%s485 + $0x138] sm:$0xff]
                  %614 = vst [vmem:[%s486 + $0x130] sm:$0xff] %v613
                  %s615 = sadd.s32 1, %s484
                  %p616 = scmp.ge.s32.totalorder %s615, %s475
                  %s617 = scalar_select %p616, 0, %s615
                  %s618 = smul.u32 %s617, 256
                  %s619 = smul.u32 %s617, 256
                  %s620 = scalar_lea.vmem %s257, %s618
                  %s621 = scalar_lea.vmem %s241, %s619 [#allocation3]
                $region70: #{bpnet_forward.7} parent=64 // loop_footer
                  %s481 = sadd.s32 %s479, 1
                $region71: #{bpnet_forward.7} parent=64 // loop_footer_branch
                  %478 = sbr.rel target = $region67
                $region72: #{bpnet_forward.7} parent=64 // loop_exit
                  _
                %s622 = sshrl.u32 %s474, 5
                %s623 = sand.u32 %s474, 31
                %s624 = smul.u32 %s622, 32
                %s625 = smul.u32 128, %s624
                %s626 = sshra.s32 %s625, 4
                %s627 = scalar_lea.vmem %s257, %s626
                %s628 = smul.u32 128, %s624
                %s629 = sshra.s32 %s628, 4
                %s630 = scalar_lea.vmem %s241, %s629 [#allocation3]
                // While loop
                $region73: #{bpnet_forward.7} parent=64 // loop_pre_header
                  _
                $region74: #{bpnet_forward.7} parent=64 // loop_header
                  %s634 = sphi 0, %s636
                  %p635 = scmp.ge.s32.totalorder %s634, %s623
                  %s639 = sphi 0, %s648
                  %s640 = sphi %s627, %s651
                  %s641 = sphi %s630, %s652
                $region75: #{bpnet_forward.7} parent=64 // loop_header_branch
                  %638 = sbr.rel (%p635) target = $region79
                $region76: #{bpnet_forward.7} parent=64 // loop_body
                  %v642 = vld [vmem:[%s640] sm:$0xff]
                  %643 = vst [vmem:[%s641] sm:$0xff] %v642
                  %v644 = vld [vmem:[%s640 + $0x40] sm:$0xff]
                  %645 = vst [vmem:[%s641 + $0x38] sm:$0xff] %v644
                  %s646 = sadd.s32 1, %s639
                  %p647 = scmp.ge.s32.totalorder %s646, %s623
                  %s648 = scalar_select %p647, 0, %s646
                  %s649 = smul.u32 %s648, 8
                  %s650 = smul.u32 %s648, 8
                  %s651 = scalar_lea.vmem %s627, %s649
                  %s652 = scalar_lea.vmem %s630, %s650 [#allocation3]
                $region77: #{bpnet_forward.7} parent=64 // loop_footer
                  %s636 = sadd.s32 %s634, 1
                $region78: #{bpnet_forward.7} parent=64 // loop_footer_branch
                  %633 = sbr.rel target = $region74
                $region79: #{bpnet_forward.7} parent=64 // loop_exit
                  _
                %s653 = sshllo.u32 0, %s469
                loop: start=0, step=1, limit=1
                $region80: #{bpnet_forward.7} parent=64 // loop_pre_header
                  _
                $region81: #{bpnet_forward.7} parent=64 // loop_header
                  %s655 = sphi 0, %s659
                  %p656 = scmp.ge.s32.totalorder %s655, 1
                  %s660 = sphi %s471, %s471
                  %s661 = sphi %s473, %s473
                $region82: #{bpnet_forward.7} parent=64 // loop_header_branch
                  %658 = sbr.rel (%p656) target = $region86
                $region83: #{bpnet_forward.7} parent=64 // loop_body
                  %v662 = vld [vmem:[%s660] sm:%s653]
                  %663 = vst [vmem:[%s661] sm:%s653] %v662
                  %v664 = vld [vmem:[%s660 + $0x40] sm:%s653]
                  %665 = vst [vmem:[%s661 + $0x38] sm:%s653] %v664
                $region84: #{bpnet_forward.7} parent=64 // loop_footer
                  %s659 = sadd.s32 1, %s655
                $region85: #{bpnet_forward.7} parent=64 // loop_footer_branch
                  %654 = sbr.rel target = $region81
                $region86: #{bpnet_forward.7} parent=64 // loop_exit
                  _
              $region65: #{bpnet_forward.7} parent=31 // pred_fallthru
                _
            $region32: #{bpnet_forward.7} parent=27 // pred_fallthru
              _
            // Predicated region
            $region33: #{bpnet_forward.7} parent=27 // pred_check
              %p266 = pneg %p262
            $region34: #{bpnet_forward.7} parent=27 // pred_check_branch
              %268 = sbr.rel (%p266) target = $region36
            $region35: #{bpnet_forward.7} parent=27 // pred_region
              %s269 = sshllo.u32 0, %s258
              loop: start=0, step=1, limit=1
              $region37: #{bpnet_forward.7} parent=35 // loop_pre_header
                _
              $region38: #{bpnet_forward.7} parent=35 // loop_header
                %s271 = sphi 0, %s275
                %p272 = scmp.ge.s32.totalorder %s271, 1
                %s276 = sphi %s257, %s257
                %s277 = sphi %s241, %s241
              $region39: #{bpnet_forward.7} parent=35 // loop_header_branch
                %274 = sbr.rel (%p272) target = $region43
              $region40: #{bpnet_forward.7} parent=35 // loop_body
                %v278 = vld [vmem:[%s276] sm:%s269]
                %279 = vst [vmem:[%s277] sm:%s269] %v278
                %v280 = vld [vmem:[%s276 + $0x40] sm:%s269]
                %281 = vst [vmem:[%s277 + $0x38] sm:%s269] %v280
              $region41: #{bpnet_forward.7} parent=35 // loop_footer
                %s275 = sadd.s32 1, %s271
              $region42: #{bpnet_forward.7} parent=35 // loop_footer_branch
                %270 = sbr.rel target = $region38
              $region43: #{bpnet_forward.7} parent=35 // loop_exit
                _
            $region36: #{bpnet_forward.7} parent=27 // pred_fallthru
              _
          $region28: #{bpnet_forward.7} parent=23 // pred_fallthru
            _
          %666 = vnop
        $region24: #{bpnet_forward.7} parent=15 // pred_fallthru
          _
        // Predicated region
        $region87: #{bpnet_forward.7} parent=15 // pred_check
          %p667 = pneg %p125
        $region88: #{bpnet_forward.7} parent=15 // pred_check_branch
          %669 = sbr.rel (%p667) target = $region90
        $region89: #{bpnet_forward.7} parent=15 // pred_region
          %p670 = scmp.lt.s32.totalorder %s19, 0
          %s671 = scalar_select %p670, %s19, 0
          %s672 = smul.u32 6, %s671
          %p673 = scmp.lt.s32.totalorder %s17, 1
          %s674 = scalar_select %p673, %s17, 1
          %p675 = scmp.lt.s32.totalorder %s672, 5
          %s676 = scalar_select %p675, %s672, 5
          %s677 = smul.addr %s674, 6
          %s678 = sadd.s32 %s676, %s677
          %s679 = scalar_lea.vmem %s2, %s678
          %p680 = scmp.lt.s32.totalorder %s19, 0
          %s681 = scalar_select %p680, %s19, 0
          %s682 = smul.u32 6, %s681
        $region90: #{bpnet_forward.7} parent=15 // pred_fallthru
          _
        // Predicated region
        $region91: #{bpnet_forward.7} parent=15 // pred_check
          %p683 = pneg %p159
        $region92: #{bpnet_forward.7} parent=15 // pred_check_branch
          %685 = sbr.rel (%p683) target = $region94
        $region93: #{bpnet_forward.7} parent=15 // pred_region
          %s686 = ssub.s32 %s19, 1
          %p687 = scmp.gt.s32.totalorder %s686, 0
          %s688 = scalar_select %p687, %s686, 0
          %s689 = smul.u32 7, %s688
          %s690 = ssub.s32 8, %s689
          %p691 = scmp.lt.s32.totalorder %s690, 7
          %s692 = scalar_select %p691, %s690, 7
          %s693 = smul.u32 16, %s692
          %p694 = scmp.lt.s32.totalorder %s17, 1
          %s695 = scalar_select %p694, %s17, 1
          %p696 = scmp.lt.s32.totalorder %s689, 7
          %s697 = scalar_select %p696, %s689, 7
          %s698 = smul.addr %s695, 8
          %s699 = sadd.s32 %s697, %s698
          %s700 = scalar_lea.vmem %s3, %s699
          %s701 = ssub.s32 %s19, 1
          %p702 = scmp.gt.s32.totalorder %s701, 0
          %s703 = scalar_select %p702, %s701, 0
          %s704 = smul.u32 7, %s703
          %s705 = ssub.s32 8, %s704
          %p706 = scmp.lt.s32.totalorder %s705, 7
          %s707 = scalar_select %p706, %s705, 7
          %s708 = smul.u32 16, %s707
        $region94: #{bpnet_forward.7} parent=15 // pred_fallthru
          _
      $region16: #{bpnet_forward.7} parent=5 // pred_fallthru
        _
      %p709 = scmp.le.s32.totalorder 1, %s10
      %p710 = scmp.lt.s32.totalorder %s10, 7
      %p711 = pnand %p709, %p710
      %p712 = pneg %p711
      // Predicated region
      $region95: #{bpnet_forward.7} parent=5 // pred_check
        _
      $region96: #{bpnet_forward.7} parent=5 // pred_check_branch
        %714 = sbr.rel (%p711) target = $region98
      $region97: #{bpnet_forward.7} parent=5 // pred_region
        %s715 = ssub.s32 %s10, 1
        %s716 = sand.u32 %s86, 1
        %s717 = sand.u32 %s86, 1
        %s718 = smul.addr %s717, 112
        %s719 = scalar_lea.vmem [#allocation3], %s718
        // Predicated region
        $region99: #{bpnet_forward.7} parent=97 // pred_check
          %p720 = pneg %p99
        $region100: #{bpnet_forward.7} parent=97 // pred_check_branch
          %722 = sbr.rel (%p720) target = $region102
        $region101: #{bpnet_forward.7} parent=97 // pred_region
          _
        $region102: #{bpnet_forward.7} parent=97 // pred_fallthru
          _
        %p723 = scmp.lt.s32.totalorder %s22, 0
        %s724 = scalar_select %p723, %s22, 0
        %s725 = smul.u32 2, %s21
        %s726 = smul.u32 6, %s724
        %p727 = scmp.lt.s32.totalorder %s20, 1
        %s728 = scalar_select %p727, %s20, 1
        %p729 = scmp.lt.s32.totalorder %s725, 1
        %s730 = scalar_select %p729, %s725, 1
        %p731 = scmp.lt.s32.totalorder %s726, 5
        %s732 = scalar_select %p731, %s726, 5
        %s733 = smul.addr %s730, 6
        %s734 = sadd.s32 %s732, %s733
        %s735 = smul.addr %s728, 12
        %s736 = sadd.s32 %s734, %s735
        %s737 = smul.addr %s736, 8
        %s738 = scalar_lea.vmem %s0, %s737
        %p739 = pneg %p63
        %p740 = pneg %p60
        %s741 = sand.u32 %s86, 1
        %s742 = sand.u32 %s86, 1
        %s743 = smul.addr %s742, 112
        %s744 = scalar_lea.vmem [#allocation3], %s743
        %p745 = pneg %p99
        %p746 = pneg %p96
        %p747 = scmp.lt.s32.totalorder %s22, 0
        %s748 = scalar_select %p747, %s22, 0
        %s749 = smul.u32 6, %s748
        %p750 = scmp.lt.s32.totalorder %s20, 1
        %s751 = scalar_select %p750, %s20, 1
        %p752 = scmp.lt.s32.totalorder %s749, 5
        %s753 = scalar_select %p752, %s749, 5
        %s754 = smul.addr %s751, 6
        %s755 = sadd.s32 %s753, %s754
        %s756 = scalar_lea.vmem %s2, %s755
        %p757 = pneg %p131
        %p758 = pneg %p128
        %s759 = ssub.s32 %s22, 1
        %p760 = scmp.gt.s32.totalorder %s759, 0
        %s761 = scalar_select %p760, %s759, 0
        %s762 = smul.u32 7, %s761
        %s763 = ssub.s32 8, %s762
        %p764 = scmp.lt.s32.totalorder %s763, 7
        %s765 = scalar_select %p764, %s763, 7
        %s766 = smul.u32 16, %s765
        %p767 = scmp.lt.s32.totalorder %s20, 1
        %s768 = scalar_select %p767, %s20, 1
        %p769 = scmp.lt.s32.totalorder %s762, 7
        %s770 = scalar_select %p769, %s762, 7
        %s771 = smul.addr %s768, 8
        %s772 = sadd.s32 %s770, %s771
        %s773 = scalar_lea.vmem %s3, %s772
        %p774 = pneg %p165
        %p775 = pneg %p162
        %p776 = pneg %p193
        %p777 = pneg %p190
        %s778 = smul.u32 2, %s21
        %p779 = scmp.lt.s32.totalorder %s20, 1
        %s780 = scalar_select %p779, %s20, 1
        %p781 = scmp.lt.s32.totalorder %s778, 1
        %s782 = scalar_select %p781, %s778, 1
        %s783 = smul.addr %s780, 2
        %s784 = sadd.s32 %s782, %s783
        %s785 = smul.addr %s784, 8
        %s786 = scalar_lea.vmem %s4, %s785
        %p787 = scmp.lt.s32.totalorder %s22, 0
        %s788 = scalar_select %p787, %s22, 0
        %s789 = smul.u32 2, %s21
        %s790 = smul.u32 6, %s788
        %p791 = scmp.lt.s32.totalorder %s20, 1
        %s792 = scalar_select %p791, %s20, 1
        %p793 = scmp.lt.s32.totalorder %s789, 1
        %s794 = scalar_select %p793, %s789, 1
        %p795 = scmp.lt.s32.totalorder %s790, 5
        %s796 = scalar_select %p795, %s790, 5
        %s797 = smul.addr %s794, 6
        %s798 = sadd.s32 %s796, %s797
        %s799 = smul.addr %s792, 12
        %s800 = sadd.s32 %s798, %s799
        %s801 = smul.addr %s800, 8
        %s802 = scalar_lea.vmem %s0, %s801
        %p803 = scmp.lt.s32.totalorder %s22, 0
        %s804 = scalar_select %p803, %s22, 0
        %s805 = smul.u32 2, %s21
        %s806 = smul.u32 6, %s804
        %s807 = ssub.s32 %s22, 1
        %p808 = scmp.gt.s32.totalorder %s807, 0
        %s809 = scalar_select %p808, %s807, 0
        %s810 = smul.u32 2, %s21
        %s811 = smul.u32 7, %s809
        %s812 = ssub.s32 8, %s811
        %p813 = scmp.lt.s32.totalorder %s812, 7
        %s814 = scalar_select %p813, %s812, 7
        %s815 = smul.u32 256, %s814
        %p816 = scmp.lt.s32.totalorder %s22, 0
        %s817 = scalar_select %p816, %s22, 0
        %s818 = smul.u32 6, %s817
        %p819 = scmp.lt.s32.totalorder %s20, 1
        %s820 = scalar_select %p819, %s20, 1
        %p821 = scmp.lt.s32.totalorder %s818, 5
        %s822 = scalar_select %p821, %s818, 5
        %s823 = smul.addr %s820, 6
        %s824 = sadd.s32 %s822, %s823
        %s825 = scalar_lea.vmem %s2, %s824
        %p826 = scmp.lt.s32.totalorder %s22, 0
        %s827 = scalar_select %p826, %s22, 0
        %s828 = smul.u32 6, %s827
        %s829 = ssub.s32 %s22, 1
        %p830 = scmp.gt.s32.totalorder %s829, 0
        %s831 = scalar_select %p830, %s829, 0
        %s832 = smul.u32 7, %s831
        %s833 = ssub.s32 8, %s832
        %p834 = scmp.lt.s32.totalorder %s833, 7
        %s835 = scalar_select %p834, %s833, 7
        %s836 = smul.u32 16, %s835
        %p837 = scmp.lt.s32.totalorder %s20, 1
        %s838 = scalar_select %p837, %s20, 1
        %p839 = scmp.lt.s32.totalorder %s832, 7
        %s840 = scalar_select %p839, %s832, 7
        %s841 = smul.addr %s838, 8
        %s842 = sadd.s32 %s840, %s841
        %s843 = scalar_lea.vmem %s3, %s842
        %s844 = ssub.s32 %s22, 1
        %p845 = scmp.gt.s32.totalorder %s844, 0
        %s846 = scalar_select %p845, %s844, 0
        %s847 = smul.u32 7, %s846
        %s848 = ssub.s32 8, %s847
        %p849 = scmp.lt.s32.totalorder %s848, 7
        %s850 = scalar_select %p849, %s848, 7
        %s851 = smul.u32 16, %s850
        %s852 = smul.u32 2, %s21
        %p853 = scmp.lt.s32.totalorder %s20, 1
        %s854 = scalar_select %p853, %s20, 1
        %p855 = scmp.lt.s32.totalorder %s852, 1
        %s856 = scalar_select %p855, %s852, 1
        %s857 = smul.addr %s854, 2
        %s858 = sadd.s32 %s856, %s857
        %s859 = smul.addr %s858, 8
        %s860 = scalar_lea.vmem %s4, %s859
        %s861 = smul.u32 2, %s21
        %p862 = scmp.eq.s32.totalorder %s22, 0
        // Predicated region
        $region103: #{bpnet_forward.7} parent=97 // pred_check
          %p863 = pneg %p862
        $region104: #{bpnet_forward.7} parent=97 // pred_check_branch
          %865 = sbr.rel (%p863) target = $region106
        $region105: #{bpnet_forward.7} parent=97 // pred_region
          %866 = vst [vmem:[#allocation2] sm:$0xff] 0.0
          %867 = vst [vmem:[#allocation2 + $0x8] sm:$0x7f] 0.0
        $region106: #{bpnet_forward.7} parent=97 // pred_fallthru
          _
        %p868 = scmp.lt.s32.totalorder %s22, 1
        // Predicated region
        $region107: #{bpnet_forward.7} parent=97 // pred_check
          %p869 = pneg %p868
        $region108: #{bpnet_forward.7} parent=97 // pred_check_branch
          %871 = sbr.rel (%p869) target = $region110
        $region109: #{bpnet_forward.7} parent=97 // pred_region
          %v872 = vld [vmem:[%s802] sm:$0xff]
          %v873 = vld [vmem:[%s802 + $0x30] sm:$0x7f]
          %v874 = vld [vmem:[%s825] sm:$0x1]
          %v876 = vlaneseq
          %v877 = vshrl.u32 %v876, 7
          %v878 = vsub.s32 0, %v877
          %v879 = vrot.slane %v874, %v878
          %v881 = vmul.f32 %v872, %v879
          %v882 = vmul.f32 %v873, %v879
          %v883 = vld [vmem:[#allocation2] sm:$0xff]
          %v884 = vld [vmem:[#allocation2 + $0x8] sm:$0x7f]
          %v885 = vadd.f32 %v883, %v881
          %v886 = vadd.f32 %v884, %v882
          %887 = vst [vmem:[#allocation2] sm:$0xff] %v885
          %888 = vst [vmem:[#allocation2 + $0x8] sm:$0x7f] %v886
          %v889 = vld [vmem:[%s802 + $0x8] sm:$0xff]
          %v890 = vld [vmem:[%s802 + $0x38] sm:$0x7f]
          %v891 = vld [vmem:[%s825 + $0x1] sm:$0x1]
          %v893 = vlaneseq
          %v894 = vshrl.u32 %v893, 7
          %v895 = vsub.s32 0, %v894
          %v896 = vrot.slane %v891, %v895
          %v898 = vmul.f32 %v889, %v896
          %v899 = vmul.f32 %v890, %v896
          %v900 = vld [vmem:[#allocation2] sm:$0xff]
          %v901 = vld [vmem:[#allocation2 + $0x8] sm:$0x7f]
          %v902 = vadd.f32 %v900, %v898
          %v903 = vadd.f32 %v901, %v899
          %904 = vst [vmem:[#allocation2] sm:$0xff] %v902
          %905 = vst [vmem:[#allocation2 + $0x8] sm:$0x7f] %v903
          %v906 = vld [vmem:[%s802 + $0x10] sm:$0xff]
          %v907 = vld [vmem:[%s802 + $0x40] sm:$0x7f]
          %v908 = vld [vmem:[%s825 + $0x2] sm:$0x1]
          %v910 = vlaneseq
          %v911 = vshrl.u32 %v910, 7
          %v912 = vsub.s32 0, %v911
          %v913 = vrot.slane %v908, %v912
          %v915 = vmul.f32 %v906, %v913
          %v916 = vmul.f32 %v907, %v913
          %v917 = vld [vmem:[#allocation2] sm:$0xff]
          %v918 = vld [vmem:[#allocation2 + $0x8] sm:$0x7f]
          %v919 = vadd.f32 %v917, %v915
          %v920 = vadd.f32 %v918, %v916
          %921 = vst [vmem:[#allocation2] sm:$0xff] %v919
          %922 = vst [vmem:[#allocation2 + $0x8] sm:$0x7f] %v920
          %v923 = vld [vmem:[%s802 + $0x18] sm:$0xff]
          %v924 = vld [vmem:[%s802 + $0x48] sm:$0x7f]
          %v925 = vld [vmem:[%s825 + $0x3] sm:$0x1]
          %v927 = vlaneseq
          %v928 = vshrl.u32 %v927, 7
          %v929 = vsub.s32 0, %v928
          %v930 = vrot.slane %v925, %v929
          %v932 = vmul.f32 %v923, %v930
          %v933 = vmul.f32 %v924, %v930
          %v934 = vld [vmem:[#allocation2] sm:$0xff]
          %v935 = vld [vmem:[#allocation2 + $0x8] sm:$0x7f]
          %v936 = vadd.f32 %v934, %v932
          %v937 = vadd.f32 %v935, %v933
          %938 = vst [vmem:[#allocation2] sm:$0xff] %v936
          %939 = vst [vmem:[#allocation2 + $0x8] sm:$0x7f] %v937
          %v940 = vld [vmem:[%s802 + $0x20] sm:$0xff]
          %v941 = vld [vmem:[%s802 + $0x50] sm:$0x7f]
          %v942 = vld [vmem:[%s825 + $0x4] sm:$0x1]
          %v944 = vlaneseq
          %v945 = vshrl.u32 %v944, 7
          %v946 = vsub.s32 0, %v945
          %v947 = vrot.slane %v942, %v946
          %v949 = vmul.f32 %v940, %v947
          %v950 = vmul.f32 %v941, %v947
          %v951 = vld [vmem:[#allocation2] sm:$0xff]
          %v952 = vld [vmem:[#allocation2 + $0x8] sm:$0x7f]
          %v953 = vadd.f32 %v951, %v949
          %v954 = vadd.f32 %v952, %v950
          %955 = vst [vmem:[#allocation2] sm:$0xff] %v953
          %956 = vst [vmem:[#allocation2 + $0x8] sm:$0x7f] %v954
          %v957 = vld [vmem:[%s802 + $0x28] sm:$0xff]
          %v958 = vld [vmem:[%s802 + $0x58] sm:$0x7f]
          %v959 = vld [vmem:[%s825 + $0x5] sm:$0x1]
          %v961 = vlaneseq
          %v962 = vshrl.u32 %v961, 7
          %v963 = vsub.s32 0, %v962
          %v964 = vrot.slane %v959, %v963
          %v966 = vmul.f32 %v957, %v964
          %v967 = vmul.f32 %v958, %v964
          %v968 = vld [vmem:[#allocation2] sm:$0xff]
          %v969 = vld [vmem:[#allocation2 + $0x8] sm:$0x7f]
          %v970 = vadd.f32 %v968, %v966
          %v971 = vadd.f32 %v969, %v967
          %972 = vst [vmem:[#allocation2] sm:$0xff] %v970
          %973 = vst [vmem:[#allocation2 + $0x8] sm:$0x7f] %v971
        $region110: #{bpnet_forward.7} parent=97 // pred_fallthru
          _
        %p974 = scmp.ge.s32.totalorder %s22, 1
        // Predicated region
        $region111: #{bpnet_forward.7} parent=97 // pred_check
          %p975 = pneg %p974
        $region112: #{bpnet_forward.7} parent=97 // pred_check_branch
          %977 = sbr.rel (%p975) target = $region114
        $region113: #{bpnet_forward.7} parent=97 // pred_region
          %s978 = ssub.s32 %s22, 1
          %s979 = smul.u32 %s978, 896
          %v980 = vlaneseq
          %v981 = vand.u32 %v980, 127
          %v982 = vld [vmem:[%s719] sm:$0xff]
          %v983 = vld [vmem:[%s719 + $0x38] sm:$0x7f]
          %v984 = vld [vmem:[%s843] sm:$0x1]
          %v986 = vlaneseq
          %v987 = vshrl.u32 %v986, 7
          %v988 = vsub.s32 0, %v987
          %v989 = vrot.slane %v984, %v988
          %v991 = vmul.f32 %v982, %v989
          %v992 = vmul.f32 %v983, %v989
          %v993 = vstv %s979
          %v994 = vadd.s32 %v993, %v981
          %vm995 = vcmp.lt.s32.totalorder %v994, 960
          %v996 = vsel %vm995, 1, 0
          %vm997 = vcmp.eq.s32.totalorder %v996, 1
          %v998 = vsel %vm997, %v991, 0.0
          %v999 = vsel %vm997, %v992, 0.0
          %v1000 = vld [vmem:[#allocation2] sm:$0xff]
          %v1001 = vld [vmem:[#allocation2 + $0x8] sm:$0x7f]
          %v1002 = vadd.f32 %v1000, %v998
          %v1003 = vadd.f32 %v1001, %v999
          %1004 = vst [vmem:[#allocation2] sm:$0xff] %v1002
          %1005 = vst [vmem:[#allocation2 + $0x8] sm:$0x7f] %v1003
          %v1006 = vld [vmem:[%s719 + $0x8] sm:$0xff]
          %v1007 = vld [vmem:[%s719 + $0x40] sm:$0x7f]
          %v1008 = vld [vmem:[%s843 + $0x1] sm:$0x1]
          %v1010 = vlaneseq
          %v1011 = vshrl.u32 %v1010, 7
          %v1012 = vsub.s32 0, %v1011
          %v1013 = vrot.slane %v1008, %v1012
          %v1015 = vmul.f32 %v1006, %v1013
          %v1016 = vmul.f32 %v1007, %v1013
          %s1017 = sadd.s32 %s979, 128
          %v1018 = vstv %s1017
          %v1019 = vadd.s32 %v1018, %v981
          %vm1020 = vcmp.lt.s32.totalorder %v1019, 960
          %v1021 = vsel %vm1020, 1, 0
          %vm1022 = vcmp.eq.s32.totalorder %v1021, 1
          %v1023 = vsel %vm1022, %v1015, 0.0
          %v1024 = vsel %vm1022, %v1016, 0.0
          %v1025 = vld [vmem:[#allocation2] sm:$0xff]
          %v1026 = vld [vmem:[#allocation2 + $0x8] sm:$0x7f]
          %v1027 = vadd.f32 %v1025, %v1023
          %v1028 = vadd.f32 %v1026, %v1024
          %1029 = vst [vmem:[#allocation2] sm:$0xff] %v1027
          %1030 = vst [vmem:[#allocation2 + $0x8] sm:$0x7f] %v1028
          %v1031 = vld [vmem:[%s719 + $0x10] sm:$0xff]
          %v1032 = vld [vmem:[%s719 + $0x48] sm:$0x7f]
          %v1033 = vld [vmem:[%s843 + $0x2] sm:$0x1]
          %v1035 = vlaneseq
          %v1036 = vshrl.u32 %v1035, 7
          %v1037 = vsub.s32 0, %v1036
          %v1038 = vrot.slane %v1033, %v1037
          %v1040 = vmul.f32 %v1031, %v1038
          %v1041 = vmul.f32 %v1032, %v1038
          %s1042 = sadd.s32 %s979, 256
          %v1043 = vstv %s1042
          %v1044 = vadd.s32 %v1043, %v981
          %vm1045 = vcmp.lt.s32.totalorder %v1044, 960
          %v1046 = vsel %vm1045, 1, 0
          %vm1047 = vcmp.eq.s32.totalorder %v1046, 1
          %v1048 = vsel %vm1047, %v1040, 0.0
          %v1049 = vsel %vm1047, %v1041, 0.0
          %v1050 = vld [vmem:[#allocation2] sm:$0xff]
          %v1051 = vld [vmem:[#allocation2 + $0x8] sm:$0x7f]
          %v1052 = vadd.f32 %v1050, %v1048
          %v1053 = vadd.f32 %v1051, %v1049
          %1054 = vst [vmem:[#allocation2] sm:$0xff] %v1052
          %1055 = vst [vmem:[#allocation2 + $0x8] sm:$0x7f] %v1053
          %v1056 = vld [vmem:[%s719 + $0x18] sm:$0xff]
          %v1057 = vld [vmem:[%s719 + $0x50] sm:$0x7f]
          %v1058 = vld [vmem:[%s843 + $0x3] sm:$0x1]
          %v1060 = vlaneseq
          %v1061 = vshrl.u32 %v1060, 7
          %v1062 = vsub.s32 0, %v1061
          %v1063 = vrot.slane %v1058, %v1062
          %v1065 = vmul.f32 %v1056, %v1063
          %v1066 = vmul.f32 %v1057, %v1063
          %s1067 = sadd.s32 %s979, 384
          %v1068 = vstv %s1067
          %v1069 = vadd.s32 %v1068, %v981
          %vm1070 = vcmp.lt.s32.totalorder %v1069, 960
          %v1071 = vsel %vm1070, 1, 0
          %vm1072 = vcmp.eq.s32.totalorder %v1071, 1
          %v1073 = vsel %vm1072, %v1065, 0.0
          %v1074 = vsel %vm1072, %v1066, 0.0
          %v1075 = vld [vmem:[#allocation2] sm:$0xff]
          %v1076 = vld [vmem:[#allocation2 + $0x8] sm:$0x7f]
          %v1077 = vadd.f32 %v1075, %v1073
          %v1078 = vadd.f32 %v1076, %v1074
          %1079 = vst [vmem:[#allocation2] sm:$0xff] %v1077
          %1080 = vst [vmem:[#allocation2 + $0x8] sm:$0x7f] %v1078
          %v1081 = vld [vmem:[%s719 + $0x20] sm:$0xff]
          %v1082 = vld [vmem:[%s719 + $0x58] sm:$0x7f]
          %v1083 = vld [vmem:[%s843 + $0x4] sm:$0x1]
          %v1085 = vlaneseq
          %v1086 = vshrl.u32 %v1085, 7
          %v1087 = vsub.s32 0, %v1086
          %v1088 = vrot.slane %v1083, %v1087
          %v1090 = vmul.f32 %v1081, %v1088
          %v1091 = vmul.f32 %v1082, %v1088
          %s1092 = sadd.s32 %s979, 512
          %v1093 = vstv %s1092
          %v1094 = vadd.s32 %v1093, %v981
          %vm1095 = vcmp.lt.s32.totalorder %v1094, 960
          %v1096 = vsel %vm1095, 1, 0
          %vm1097 = vcmp.eq.s32.totalorder %v1096, 1
          %v1098 = vsel %vm1097, %v1090, 0.0
          %v1099 = vsel %vm1097, %v1091, 0.0
          %v1100 = vld [vmem:[#allocation2] sm:$0xff]
          %v1101 = vld [vmem:[#allocation2 + $0x8] sm:$0x7f]
          %v1102 = vadd.f32 %v1100, %v1098
          %v1103 = vadd.f32 %v1101, %v1099
          %1104 = vst [vmem:[#allocation2] sm:$0xff] %v1102
          %1105 = vst [vmem:[#allocation2 + $0x8] sm:$0x7f] %v1103
          %v1106 = vld [vmem:[%s719 + $0x28] sm:$0xff]
          %v1107 = vld [vmem:[%s719 + $0x60] sm:$0x7f]
          %v1108 = vld [vmem:[%s843 + $0x5] sm:$0x1]
          %v1110 = vlaneseq
          %v1111 = vshrl.u32 %v1110, 7
          %v1112 = vsub.s32 0, %v1111
          %v1113 = vrot.slane %v1108, %v1112
          %v1115 = vmul.f32 %v1106, %v1113
          %v1116 = vmul.f32 %v1107, %v1113
          %s1117 = sadd.s32 %s979, 640
          %v1118 = vstv %s1117
          %v1119 = vadd.s32 %v1118, %v981
          %vm1120 = vcmp.lt.s32.totalorder %v1119, 960
          %v1121 = vsel %vm1120, 1, 0
          %vm1122 = vcmp.eq.s32.totalorder %v1121, 1
          %v1123 = vsel %vm1122, %v1115, 0.0
          %v1124 = vsel %vm1122, %v1116, 0.0
          %v1125 = vld [vmem:[#allocation2] sm:$0xff]
          %v1126 = vld [vmem:[#allocation2 + $0x8] sm:$0x7f]
          %v1127 = vadd.f32 %v1125, %v1123
          %v1128 = vadd.f32 %v1126, %v1124
          %1129 = vst [vmem:[#allocation2] sm:$0xff] %v1127
          %1130 = vst [vmem:[#allocation2 + $0x8] sm:$0x7f] %v1128
          %v1131 = vld [vmem:[%s719 + $0x30] sm:$0xff]
          %v1132 = vld [vmem:[%s719 + $0x68] sm:$0x7f]
          %v1133 = vld [vmem:[%s843 + $0x6] sm:$0x1]
          %v1135 = vlaneseq
          %v1136 = vshrl.u32 %v1135, 7
          %v1137 = vsub.s32 0, %v1136
          %v1138 = vrot.slane %v1133, %v1137
          %v1140 = vmul.f32 %v1131, %v1138
          %v1141 = vmul.f32 %v1132, %v1138
          %s1142 = sadd.s32 %s979, 768
          %v1143 = vstv %s1142
          %v1144 = vadd.s32 %v1143, %v981
          %vm1145 = vcmp.lt.s32.totalorder %v1144, 960
          %v1146 = vsel %vm1145, 1, 0
          %vm1147 = vcmp.eq.s32.totalorder %v1146, 1
          %v1148 = vsel %vm1147, %v1140, 0.0
          %v1149 = vsel %vm1147, %v1141, 0.0
          %v1150 = vld [vmem:[#allocation2] sm:$0xff]
          %v1151 = vld [vmem:[#allocation2 + $0x8] sm:$0x7f]
          %v1152 = vadd.f32 %v1150, %v1148
          %v1153 = vadd.f32 %v1151, %v1149
          %1154 = vst [vmem:[#allocation2] sm:$0xff] %v1152
          %1155 = vst [vmem:[#allocation2 + $0x8] sm:$0x7f] %v1153
        $region114: #{bpnet_forward.7} parent=97 // pred_fallthru
          _
        %p1156 = scmp.eq.s32.totalorder %s22, 2
        // Predicated region
        $region115: #{bpnet_forward.7} parent=97 // pred_check
          %p1157 = pneg %p1156
        $region116: #{bpnet_forward.7} parent=97 // pred_check_branch
          %1159 = sbr.rel (%p1157) target = $region118
        $region117: #{bpnet_forward.7} parent=97 // pred_region
          %v1160 = vld [vmem:[#allocation2] sm:$0xff]
          %v1161 = vld [vmem:[#allocation2 + $0x8] sm:$0x7f]
          %1162 = vadd.xlane.f32.xlu0 %v1160
          %v1163 = vpop.xlane.xlu0 %1162
          %vm1164 = vcmask 1046528
          %v1165 = vsel %vm1164, %v1161, 0.0
          %1166 = vadd.xlane.f32.xlu0 %v1165
          %v1167 = vpop.xlane.xlu0 %1166
          %vm1168 = vcmask 7168
          %1169 = vst.msk [vmem:[%s860] sm:$0xff] %vm1168, %v1163
          %vm1170 = vcmask 6144
          %1171 = vst.msk [vmem:[%s860 + $0x8] sm:$0x7f] %vm1170, %v1167
        $region118: #{bpnet_forward.7} parent=97 // pred_fallthru
          _
        %s1172 = smul.u32 2, %s21
        %p1173 = scmp.lt.s32.totalorder %s20, 1
        %s1174 = scalar_select %p1173, %s20, 1
        %p1175 = scmp.lt.s32.totalorder %s1172, 1
        %s1176 = scalar_select %p1175, %s1172, 1
        %s1177 = smul.addr %s1174, 2
        %s1178 = sadd.s32 %s1176, %s1177
        %s1179 = smul.addr %s1178, 8
        %s1180 = scalar_lea.vmem %s4, %s1179
        // Predicated region
        $region119: #{bpnet_forward.7} parent=97 // pred_check
          %p1181 = pneg %p190
        $region120: #{bpnet_forward.7} parent=97 // pred_check_branch
          %1183 = sbr.rel (%p1181) target = $region122
        $region121: #{bpnet_forward.7} parent=97 // pred_region
          %s1184 = smul.u32 2, %s21
        $region122: #{bpnet_forward.7} parent=97 // pred_fallthru
          _
      $region98: #{bpnet_forward.7} parent=5 // pred_fallthru
        _
      %p1185 = scmp.le.s32.totalorder 2, %s10
      // Predicated region
      $region123: #{bpnet_forward.7} parent=5 // pred_check
        %p1186 = pneg %p1185
      $region124: #{bpnet_forward.7} parent=5 // pred_check_branch
        %1188 = sbr.rel (%p1186) target = $region126
      $region125: #{bpnet_forward.7} parent=5 // pred_region
        %s1189 = ssub.s32 %s10, 2
        // Predicated region
        $region127: #{bpnet_forward.7} parent=125 // pred_check
          %p1190 = pneg %p196
        $region128: #{bpnet_forward.7} parent=125 // pred_check_branch
          %1192 = sbr.rel (%p1190) target = $region130
        $region129: #{bpnet_forward.7} parent=125 // pred_region
          %s1193 = smul.u32 2, %s24
          %p1194 = scmp.lt.s32.totalorder %s23, 1
          %s1195 = scalar_select %p1194, %s23, 1
          %p1196 = scmp.lt.s32.totalorder %s1193, 1
          %s1197 = scalar_select %p1196, %s1193, 1
          %s1198 = smul.addr %s1195, 2
          %s1199 = sadd.s32 %s1197, %s1198
          %s1200 = smul.addr %s1199, 8
          %s1201 = scalar_lea.vmem %s4, %s1200
        $region130: #{bpnet_forward.7} parent=125 // pred_fallthru
          _
      $region126: #{bpnet_forward.7} parent=5 // pred_fallthru
        _
    $region6: #{bpnet_forward.7} parent=1 // loop_footer
      %s14 = sadd.s32 1, %s10
    $region7: #{bpnet_forward.7} parent=1 // loop_footer_branch
      %9 = sbr.rel target = $region3
    $region8: #{bpnet_forward.7} parent=1 // loop_exit
      _

// kernel: squeeze.2
$region0: #{squeeze.2}
  %s0 = inlined_call_operand.vmem [shape: f32[2,12], index: 0, kind: input, shape index: {}]
  %s1 = inlined_call_operand.vmem [shape: f32[2,4,3], index: 1, kind: output, shape index: {}]
  $region1: #{squeeze.2} parent=0
    #allocation0 [shape = 'u8[8192]{0}', space=vmem, size = 0x2000, scoped, tag = 'scoped mem for output reshape']
    #allocation1 [shape = 'u8[4096]{0}', space=vmem, size = 0x1000, scoped, tag = 'scoped mem for input reshape']
    %s3 = sshllo.u32 0, 2
    %v4 = vld [vmem:[%s0] sm:%s3]
    %5 = vst [vmem:[#allocation1] sm:%s3] %v4
    %v6 = vld [vmem:[#allocation1] sm:$0x3]
    %vm7 = vcmask 23552
    %8 = vst.msk [vmem:[#allocation0] ss:$8 sm:$0x3] %vm7, %v6
    %v9 = vld [vmem:[#allocation1] sm:$0x3]
    %10 = vrot.lane.b32.xlu0 %v9, 125
    %v11 = vpop.permute.xlu0 %10
    %vm12 = vcmask 23552
    %s13 = scalar_lea.vmem [#allocation0], 1
    %14 = vst.msk [vmem:[%s13] ss:$8 sm:$0x3] %vm12, %v11
    %v15 = vld [vmem:[#allocation1] sm:$0x3]
    %16 = vrot.lane.b32.xlu0 %v15, 122
    %v17 = vpop.permute.xlu0 %16
    %vm18 = vcmask 23552
    %s19 = scalar_lea.vmem [#allocation0], 2
    %20 = vst.msk [vmem:[%s19] ss:$8 sm:$0x3] %vm18, %v17
    %v21 = vld [vmem:[#allocation1] sm:$0x3]
    %22 = vrot.lane.b32.xlu0 %v21, 119
    %v23 = vpop.permute.xlu0 %22
    %vm24 = vcmask 23552
    %s25 = scalar_lea.vmem [#allocation0], 3
    %26 = vst.msk [vmem:[%s25] ss:$8 sm:$0x3] %vm24, %v23
    %s28 = sshllo.u32 0, 4
    %v30 = vld [vmem:[#allocation0] sm:%s28]
    %s31 = sshllo.u32 0, 4
    %32 = vst [vmem:[%s1] sm:%s31] %v30
    %s33 = scalar_lea.vmem [#allocation0], 8
    %v34 = vld [vmem:[%s33] sm:%s28]
    %s35 = sshllo.u32 0, 4
    %s36 = scalar_lea.vmem %s1, 4
    %37 = vst [vmem:[%s36] sm:%s35] %v34

// kernel: bpnet_forward.6
$region0: #{bpnet_forward.6}
  #allocation0 [shape = 'u32[]', space=smem, size = 0x4, offset = 0x4, fixed_abs, tag = 'smem constant byte address 0x4 - core index']
  #allocation1 [shape = 'u32[144,128]{1,0:T(1,128)}', space=vmem, size = 0x12000, scoped, tag = 'internal scratch']
  #allocation2 [shape = 'f32[12,128]{1,0:T(8,128)}', space=vmem, size = 0x2000, scoped, tag = 'scratch operand']
  %s0 = inlined_call_operand.vmem [shape: f32[2,12,768], index: 0, kind: input, shape index: {}]
  %s1 = inlined_call_operand.vmem [shape: f32[2,12,960], index: 1, kind: input, shape index: {}]
  %s2 = inlined_call_operand.vmem [shape: f32[2,1,768], index: 2, kind: input, shape index: {}]
  %s3 = inlined_call_operand.vmem [shape: f32[2,1,960], index: 3, kind: input, shape index: {}]
  %s4 = inlined_call_operand.vmem [shape: f32[2,12,1], index: 4, kind: output, shape index: {}]
  %s5 = sld [smem:[#allocation0]]
  $region131: #{bpnet_forward.6} parent=0
    _
  %s7 = ssub.s32 1, %s5
  %s8 = scalar_select 0, %s7, %s5
  $region1: #{bpnet_forward.6} parent=0
    #allocation3 [shape = 'u8[114688]{0}', space=vmem, size = 0x1c000, scoped, tag = 'input window, operand 1']
    loop: start=0, step=1, limit=8
    $region2: #{bpnet_forward.6} parent=1 // loop_pre_header
      _
    $region3: #{bpnet_forward.6} parent=1 // loop_header
      %s10 = sphi 0, %s14
      %p11 = scmp.ge.s32.totalorder %s10, 8
      %s17 = sphi 0, %s36
      %s18 = sphi 0, %s32
      %s19 = sphi 0, %s28
      %s20 = sphi 0, %s17
      %s21 = sphi 0, %s18
      %s22 = sphi 0, %s19
      %s23 = sphi 0, %s20
      %s24 = sphi 0, %s21
      %s25 = sphi 0, %s22
      %s47 = sphi 0, %s49
      %s50 = sphi 0, %s47
      %s51 = sphi 0, %s50
      %s67 = sphi 0, %s51
      %s83 = sphi 0, %s85
      %s86 = sphi 0, %s83
      %s87 = sphi 0, %s86
      %s103 = sphi 0, %s87
      %s115 = sphi 0, %s117
      %s118 = sphi 0, %s115
      %s119 = sphi 0, %s118
      %s135 = sphi 0, %s119
      %s149 = sphi 0, %s151
      %s152 = sphi 0, %s149
      %s153 = sphi 0, %s152
      %s169 = sphi 0, %s153
      %s177 = sphi 0, %s179
      %s180 = sphi 0, %s177
      %s181 = sphi 0, %s180
      %s197 = sphi 0, %s181
    $region4: #{bpnet_forward.6} parent=1 // loop_header_branch
      %13 = sbr.rel (%p11) target = $region8
    $region5: #{bpnet_forward.6} parent=1 // loop_body
      %s15 = ssub.s32 %s10, 1
      %s16 = ssub.s32 %s10, 2
      %s26 = sadd.s32 1, %s19
      %p27 = scmp.ge.s32.totalorder %s26, 3
      %s28 = scalar_select %p27, 0, %s26
      %s29 = sadd.s32 1, %s18
      %s30 = scalar_select %p27, %s29, %s18
      %p31 = scmp.ge.s32.totalorder %s30, 1
      %s32 = scalar_select %p31, 0, %s30
      %s33 = sadd.s32 1, %s17
      %s34 = scalar_select %p31, %s33, %s17
      %p35 = scmp.ge.s32.totalorder %s34, 2
      %s36 = scalar_select %p35, 0, %s34
      %p37 = scmp.lt.s32.totalorder %s19, 0
      %s38 = scalar_select %p37, %s19, 0
      %p39 = scmp.lt.s32.totalorder %s28, 0
      %s40 = scalar_select %p39, %s28, 0
      %s41 = ssub.s32 %s17, %s36
      %s42 = ssub.s32 %s18, %s32
      %s43 = sor.u32 %s41, %s42
      %s44 = ssub.s32 %s38, %s40
      %s45 = sor.u32 %s43, %s44
      %p46 = scmp.eq.s32.totalorder %s45, 0
      %s48 = sadd.s32 %s47, 1
      %s49 = scalar_select %p46, %s47, %s48
      %p52 = pneg %p46
      %p53 = scmp.eq.s32.totalorder %s10, 5
      %p54 = por %p52, %p53
      %p55 = scmp.ne.s32.totalorder %s47, %s50
      %p56 = scmp.eq.s32.totalorder %s10, 0
      %p57 = por %p55, %p56
      %p58 = scmp.ne.s32.totalorder %s47, %s50
      %p59 = scmp.eq.s32.totalorder %s15, 5
      %p60 = por %p58, %p59
      %p61 = scmp.ne.s32.totalorder %s50, %s51
      %p62 = scmp.eq.s32.totalorder %s15, 0
      %p63 = por %p61, %p62
      %p64 = scmp.ne.s32.totalorder %s50, %s51
      %p65 = scmp.eq.s32.totalorder %s16, 5
      %p66 = por %p64, %p65
      %p68 = scmp.ne.s32.totalorder %s51, %s67
      %p69 = scmp.eq.s32.totalorder %s16, 0
      %p70 = por %p68, %p69
      %s71 = ssub.s32 %s19, 1
      %p72 = scmp.gt.s32.totalorder %s71, 0
      %s73 = scalar_select %p72, %s71, 0
      %s74 = ssub.s32 %s28, 1
      %p75 = scmp.gt.s32.totalorder %s74, 0
      %s76 = scalar_select %p75, %s74, 0
      %s77 = ssub.s32 %s17, %s36
      %s78 = ssub.s32 %s18, %s32
      %s79 = sor.u32 %s77, %s78
      %s80 = ssub.s32 %s73, %s76
      %s81 = sor.u32 %s79, %s80
      %p82 = scmp.eq.s32.totalorder %s81, 0
      %s84 = sadd.s32 %s83, 1
      %s85 = scalar_select %p82, %s83, %s84
      %p88 = pneg %p82
      %p89 = scmp.eq.s32.totalorder %s10, 5
      %p90 = por %p88, %p89
      %p91 = scmp.ne.s32.totalorder %s83, %s86
      %p92 = scmp.eq.s32.totalorder %s10, 0
      %p93 = por %p91, %p92
      %p94 = scmp.ne.s32.totalorder %s83, %s86
      %p95 = scmp.eq.s32.totalorder %s15, 5
      %p96 = por %p94, %p95
      %p97 = scmp.ne.s32.totalorder %s86, %s87
      %p98 = scmp.eq.s32.totalorder %s15, 0
      %p99 = por %p97, %p98
      %p100 = scmp.ne.s32.totalorder %s86, %s87
      %p101 = scmp.eq.s32.totalorder %s16, 5
      %p102 = por %p100, %p101
      %p104 = scmp.ne.s32.totalorder %s87, %s103
      %p105 = scmp.eq.s32.totalorder %s16, 0
      %p106 = por %p104, %p105
      %p107 = scmp.lt.s32.totalorder %s19, 0
      %s108 = scalar_select %p107, %s19, 0
      %p109 = scmp.lt.s32.totalorder %s28, 0
      %s110 = scalar_select %p109, %s28, 0
      %s111 = ssub.s32 %s17, %s36
      %s112 = ssub.s32 %s108, %s110
      %s113 = sor.u32 %s111, %s112
      %p114 = scmp.eq.s32.totalorder %s113, 0
      %s116 = sadd.s32 %s115, 1
      %s117 = scalar_select %p114, %s115, %s116
      %p120 = pneg %p114
      %p121 = scmp.eq.s32.totalorder %s10, 5
      %p122 = por %p120, %p121
      %p123 = scmp.ne.s32.totalorder %s115, %s118
      %p124 = scmp.eq.s32.totalorder %s10, 0
      %p125 = por %p123, %p124
      %p126 = scmp.ne.s32.totalorder %s115, %s118
      %p127 = scmp.eq.s32.totalorder %s15, 5
      %p128 = por %p126, %p127
      %p129 = scmp.ne.s32.totalorder %s118, %s119
      %p130 = scmp.eq.s32.totalorder %s15, 0
      %p131 = por %p129, %p130
      %p132 = scmp.ne.s32.totalorder %s118, %s119
      %p133 = scmp.eq.s32.totalorder %s16, 5
      %p134 = por %p132, %p133
      %p136 = scmp.ne.s32.totalorder %s119, %s135
      %p137 = scmp.eq.s32.totalorder %s16, 0
      %p138 = por %p136, %p137
      %s139 = ssub.s32 %s19, 1
      %p140 = scmp.gt.s32.totalorder %s139, 0
      %s141 = scalar_select %p140, %s139, 0
      %s142 = ssub.s32 %s28, 1
      %p143 = scmp.gt.s32.totalorder %s142, 0
      %s144 = scalar_select %p143, %s142, 0
      %s145 = ssub.s32 %s17, %s36
      %s146 = ssub.s32 %s141, %s144
      %s147 = sor.u32 %s145, %s146
      %p148 = scmp.eq.s32.totalorder %s147, 0
      %s150 = sadd.s32 %s149, 1
      %s151 = scalar_select %p148, %s149, %s150
      %p154 = pneg %p148
      %p155 = scmp.eq.s32.totalorder %s10, 5
      %p156 = por %p154, %p155
      %p157 = scmp.ne.s32.totalorder %s149, %s152
      %p158 = scmp.eq.s32.totalorder %s10, 0
      %p159 = por %p157, %p158
      %p160 = scmp.ne.s32.totalorder %s149, %s152
      %p161 = scmp.eq.s32.totalorder %s15, 5
      %p162 = por %p160, %p161
      %p163 = scmp.ne.s32.totalorder %s152, %s153
      %p164 = scmp.eq.s32.totalorder %s15, 0
      %p165 = por %p163, %p164
      %p166 = scmp.ne.s32.totalorder %s152, %s153
      %p167 = scmp.eq.s32.totalorder %s16, 5
      %p168 = por %p166, %p167
      %p170 = scmp.ne.s32.totalorder %s153, %s169
      %p171 = scmp.eq.s32.totalorder %s16, 0
      %p172 = por %p170, %p171
      %s173 = ssub.s32 %s17, %s36
      %s174 = ssub.s32 %s18, %s32
      %s175 = sor.u32 %s173, %s174
      %p176 = scmp.eq.s32.totalorder %s175, 0
      %s178 = sadd.s32 %s177, 1
      %s179 = scalar_select %p176, %s177, %s178
      %p182 = pneg %p176
      %p183 = scmp.eq.s32.totalorder %s10, 5
      %p184 = por %p182, %p183
      %p185 = scmp.ne.s32.totalorder %s177, %s180
      %p186 = scmp.eq.s32.totalorder %s10, 0
      %p187 = por %p185, %p186
      %p188 = scmp.ne.s32.totalorder %s177, %s180
      %p189 = scmp.eq.s32.totalorder %s15, 5
      %p190 = por %p188, %p189
      %p191 = scmp.ne.s32.totalorder %s180, %s181
      %p192 = scmp.eq.s32.totalorder %s15, 0
      %p193 = por %p191, %p192
      %p194 = scmp.ne.s32.totalorder %s180, %s181
      %p195 = scmp.eq.s32.totalorder %s16, 5
      %p196 = por %p194, %p195
      %p198 = scmp.ne.s32.totalorder %s181, %s197
      %p199 = scmp.eq.s32.totalorder %s16, 0
      %p200 = por %p198, %p199
      %p201 = scmp.le.s32.totalorder 1, %s10
      %p202 = scmp.lt.s32.totalorder %s10, 7
      %p203 = pnand %p201, %p202
      %p204 = pneg %p203
      // Predicated region
      $region9: #{bpnet_forward.6} parent=5 // pred_check
        _
      $region10: #{bpnet_forward.6} parent=5 // pred_check_branch
        %206 = sbr.rel (%p203) target = $region12
      $region11: #{bpnet_forward.6} parent=5 // pred_region
        %s207 = ssub.s32 %s10, 1
      $region12: #{bpnet_forward.6} parent=5 // pred_fallthru
        _
      %p208 = scmp.lt.s32.totalorder %s10, 6
      // Predicated region
      $region13: #{bpnet_forward.6} parent=5 // pred_check
        %p209 = pneg %p208
      $region14: #{bpnet_forward.6} parent=5 // pred_check_branch
        %211 = sbr.rel (%p209) target = $region16
      $region15: #{bpnet_forward.6} parent=5 // pred_region
        // Predicated region
        $region17: #{bpnet_forward.6} parent=15 // pred_check
          %p212 = pneg %p57
        $region18: #{bpnet_forward.6} parent=15 // pred_check_branch
          %214 = sbr.rel (%p212) target = $region20
        $region19: #{bpnet_forward.6} parent=15 // pred_region
          %p215 = scmp.lt.s32.totalorder %s19, 0
          %s216 = scalar_select %p215, %s19, 0
          %s217 = smul.u32 2, %s18
          %s218 = smul.u32 6, %s216
          %p219 = scmp.lt.s32.totalorder %s17, 1
          %s220 = scalar_select %p219, %s17, 1
          %p221 = scmp.lt.s32.totalorder %s217, 1
          %s222 = scalar_select %p221, %s217, 1
          %p223 = scmp.lt.s32.totalorder %s218, 5
          %s224 = scalar_select %p223, %s218, 5
          %s225 = smul.addr %s222, 6
          %s226 = sadd.s32 %s224, %s225
          %s227 = smul.addr %s220, 12
          %s228 = sadd.s32 %s226, %s227
          %s229 = smul.addr %s228, 8
          %s230 = scalar_lea.vmem %s0, %s229
          %p231 = scmp.lt.s32.totalorder %s19, 0
          %s232 = scalar_select %p231, %s19, 0
          %s233 = smul.u32 2, %s18
          %s234 = smul.u32 6, %s232
        $region20: #{bpnet_forward.6} parent=15 // pred_fallthru
          _
        // Predicated region
        $region21: #{bpnet_forward.6} parent=15 // pred_check
          %p235 = pneg %p93
        $region22: #{bpnet_forward.6} parent=15 // pred_check_branch
          %237 = sbr.rel (%p235) target = $region24
        $region23: #{bpnet_forward.6} parent=15 // pred_region
          %s238 = sand.u32 %s83, 1
          %s239 = sand.u32 %s83, 1
          %s240 = smul.addr %s239, 112
          %s241 = scalar_lea.vmem [#allocation3], %s240
          %s242 = ssub.s32 %s19, 1
          %p243 = scmp.gt.s32.totalorder %s242, 0
          %s244 = scalar_select %p243, %s242, 0
          %s245 = smul.u32 2, %s18
          %s246 = smul.u32 7, %s244
          %s247 = ssub.s32 8, %s246
          %p248 = scmp.lt.s32.totalorder %s247, 7
          %s249 = scalar_select %p248, %s247, 7
          %s250 = smul.u32 256, %s249
          %p251 = scmp.ne.s32.totalorder 0, %s250
          %s252 = smul.addr %s245, 8
          %s253 = sadd.s32 %s246, %s252
          %s254 = smul.addr %s17, 16
          %s255 = sadd.s32 %s253, %s254
          %s256 = smul.addr %s255, 8
          %s257 = scalar_lea.vmem %s1, %s256
          %s258 = smul.u32 %s249, 8
          // Predicated region
          $region25: #{bpnet_forward.6} parent=23 // pred_check
            %p259 = pneg %p251
          $region26: #{bpnet_forward.6} parent=23 // pred_check_branch
            %261 = sbr.rel (%p259) target = $region28
          $region27: #{bpnet_forward.6} parent=23 // pred_region
            %p262 = scmp.lt.u32.totalorder %s258, 8
            %p263 = pneg %p262
            // Predicated region
            $region29: #{bpnet_forward.6} parent=27 // pred_check
              _
            $region30: #{bpnet_forward.6} parent=27 // pred_check_branch
              %265 = sbr.rel (%p262) target = $region32
            $region31: #{bpnet_forward.6} parent=27 // pred_region
              %s282 = sand.u32 %s258, 7
              %p283 = scmp.eq.s32.totalorder %s282, 0
              // Predicated region
              $region44: #{bpnet_forward.6} parent=31 // pred_check
                %p284 = pneg %p283
              $region45: #{bpnet_forward.6} parent=31 // pred_check_branch
                %286 = sbr.rel (%p284) target = $region47
              $region46: #{bpnet_forward.6} parent=31 // pred_region
                %s287 = sshrl.u32 %s258, 3
                %s288 = sshrl.u32 %s287, 5
                // While loop
                $region48: #{bpnet_forward.6} parent=46 // loop_pre_header
                  _
                $region49: #{bpnet_forward.6} parent=46 // loop_header
                  %s292 = sphi 0, %s294
                  %p293 = scmp.ge.s32.totalorder %s292, %s288
                  %s297 = sphi 0, %s430
                  %s298 = sphi %s257, %s433
                  %s299 = sphi %s241, %s434
                $region50: #{bpnet_forward.6} parent=46 // loop_header_branch
                  %296 = sbr.rel (%p293) target = $region54
                $region51: #{bpnet_forward.6} parent=46 // loop_body
                  %v300 = vld [vmem:[%s298] sm:$0xff]
                  %301 = vst [vmem:[%s299] sm:$0xff] %v300
                  %v302 = vld [vmem:[%s298 + $0x8] sm:$0xff]
                  %303 = vst [vmem:[%s299 + $0x8] sm:$0xff] %v302
                  %v304 = vld [vmem:[%s298 + $0x10] sm:$0xff]
                  %305 = vst [vmem:[%s299 + $0x10] sm:$0xff] %v304
                  %v306 = vld [vmem:[%s298 + $0x18] sm:$0xff]
                  %307 = vst [vmem:[%s299 + $0x18] sm:$0xff] %v306
                  %v308 = vld [vmem:[%s298 + $0x20] sm:$0xff]
                  %309 = vst [vmem:[%s299 + $0x20] sm:$0xff] %v308
                  %v310 = vld [vmem:[%s298 + $0x28] sm:$0xff]
                  %311 = vst [vmem:[%s299 + $0x28] sm:$0xff] %v310
                  %v312 = vld [vmem:[%s298 + $0x30] sm:$0xff]
                  %313 = vst [vmem:[%s299 + $0x30] sm:$0xff] %v312
                  %v314 = vld [vmem:[%s298 + $0x38] sm:$0xff]
                  %315 = vst [vmem:[%s299 + $0x38] sm:$0xff] %v314
                  %v316 = vld [vmem:[%s298 + $0x40] sm:$0xff]
                  %317 = vst [vmem:[%s299 + $0x40] sm:$0xff] %v316
                  %v318 = vld [vmem:[%s298 + $0x48] sm:$0xff]
                  %319 = vst [vmem:[%s299 + $0x48] sm:$0xff] %v318
                  %v320 = vld [vmem:[%s298 + $0x50] sm:$0xff]
                  %321 = vst [vmem:[%s299 + $0x50] sm:$0xff] %v320
                  %v322 = vld [vmem:[%s298 + $0x58] sm:$0xff]
                  %323 = vst [vmem:[%s299 + $0x58] sm:$0xff] %v322
                  %v324 = vld [vmem:[%s298 + $0x60] sm:$0xff]
                  %325 = vst [vmem:[%s299 + $0x60] sm:$0xff] %v324
                  %v326 = vld [vmem:[%s298 + $0x68] sm:$0xff]
                  %327 = vst [vmem:[%s299 + $0x68] sm:$0xff] %v326
                  %v328 = vld [vmem:[%s298 + $0x70] sm:$0xff]
                  %329 = vst [vmem:[%s299 + $0x70] sm:$0xff] %v328
                  %v330 = vld [vmem:[%s298 + $0x78] sm:$0xff]
                  %331 = vst [vmem:[%s299 + $0x78] sm:$0xff] %v330
                  %v332 = vld [vmem:[%s298 + $0x80] sm:$0xff]
                  %333 = vst [vmem:[%s299 + $0x80] sm:$0xff] %v332
                  %v334 = vld [vmem:[%s298 + $0x88] sm:$0xff]
                  %335 = vst [vmem:[%s299 + $0x88] sm:$0xff] %v334
                  %v336 = vld [vmem:[%s298 + $0x90] sm:$0xff]
                  %337 = vst [vmem:[%s299 + $0x90] sm:$0xff] %v336
                  %v338 = vld [vmem:[%s298 + $0x98] sm:$0xff]
                  %339 = vst [vmem:[%s299 + $0x98] sm:$0xff] %v338
                  %v340 = vld [vmem:[%s298 + $0xa0] sm:$0xff]
                  %341 = vst [vmem:[%s299 + $0xa0] sm:$0xff] %v340
                  %v342 = vld [vmem:[%s298 + $0xa8] sm:$0xff]
                  %343 = vst [vmem:[%s299 + $0xa8] sm:$0xff] %v342
                  %v344 = vld [vmem:[%s298 + $0xb0] sm:$0xff]
                  %345 = vst [vmem:[%s299 + $0xb0] sm:$0xff] %v344
                  %v346 = vld [vmem:[%s298 + $0xb8] sm:$0xff]
                  %347 = vst [vmem:[%s299 + $0xb8] sm:$0xff] %v346
                  %v348 = vld [vmem:[%s298 + $0xc0] sm:$0xff]
                  %349 = vst [vmem:[%s299 + $0xc0] sm:$0xff] %v348
                  %v350 = vld [vmem:[%s298 + $0xc8] sm:$0xff]
                  %351 = vst [vmem:[%s299 + $0xc8] sm:$0xff] %v350
                  %v352 = vld [vmem:[%s298 + $0xd0] sm:$0xff]
                  %353 = vst [vmem:[%s299 + $0xd0] sm:$0xff] %v352
                  %v354 = vld [vmem:[%s298 + $0xd8] sm:$0xff]
                  %355 = vst [vmem:[%s299 + $0xd8] sm:$0xff] %v354
                  %v356 = vld [vmem:[%s298 + $0xe0] sm:$0xff]
                  %357 = vst [vmem:[%s299 + $0xe0] sm:$0xff] %v356
                  %v358 = vld [vmem:[%s298 + $0xe8] sm:$0xff]
                  %359 = vst [vmem:[%s299 + $0xe8] sm:$0xff] %v358
                  %v360 = vld [vmem:[%s298 + $0xf0] sm:$0xff]
                  %361 = vst [vmem:[%s299 + $0xf0] sm:$0xff] %v360
                  %v362 = vld [vmem:[%s298 + $0xf8] sm:$0xff]
                  %363 = vst [vmem:[%s299 + $0xf8] sm:$0xff] %v362
                  %v364 = vld [vmem:[%s298 + $0x40] sm:$0xff]
                  %365 = vst [vmem:[%s299 + $0x38] sm:$0xff] %v364
                  %v366 = vld [vmem:[%s298 + $0x48] sm:$0xff]
                  %367 = vst [vmem:[%s299 + $0x40] sm:$0xff] %v366
                  %v368 = vld [vmem:[%s298 + $0x50] sm:$0xff]
                  %369 = vst [vmem:[%s299 + $0x48] sm:$0xff] %v368
                  %v370 = vld [vmem:[%s298 + $0x58] sm:$0xff]
                  %371 = vst [vmem:[%s299 + $0x50] sm:$0xff] %v370
                  %v372 = vld [vmem:[%s298 + $0x60] sm:$0xff]
                  %373 = vst [vmem:[%s299 + $0x58] sm:$0xff] %v372
                  %v374 = vld [vmem:[%s298 + $0x68] sm:$0xff]
                  %375 = vst [vmem:[%s299 + $0x60] sm:$0xff] %v374
                  %v376 = vld [vmem:[%s298 + $0x70] sm:$0xff]
                  %377 = vst [vmem:[%s299 + $0x68] sm:$0xff] %v376
                  %v378 = vld [vmem:[%s298 + $0x78] sm:$0xff]
                  %379 = vst [vmem:[%s299 + $0x70] sm:$0xff] %v378
                  %v380 = vld [vmem:[%s298 + $0x80] sm:$0xff]
                  %381 = vst [vmem:[%s299 + $0x78] sm:$0xff] %v380
                  %v382 = vld [vmem:[%s298 + $0x88] sm:$0xff]
                  %383 = vst [vmem:[%s299 + $0x80] sm:$0xff] %v382
                  %v384 = vld [vmem:[%s298 + $0x90] sm:$0xff]
                  %385 = vst [vmem:[%s299 + $0x88] sm:$0xff] %v384
                  %v386 = vld [vmem:[%s298 + $0x98] sm:$0xff]
                  %387 = vst [vmem:[%s299 + $0x90] sm:$0xff] %v386
                  %v388 = vld [vmem:[%s298 + $0xa0] sm:$0xff]
                  %389 = vst [vmem:[%s299 + $0x98] sm:$0xff] %v388
                  %v390 = vld [vmem:[%s298 + $0xa8] sm:$0xff]
                  %391 = vst [vmem:[%s299 + $0xa0] sm:$0xff] %v390
                  %v392 = vld [vmem:[%s298 + $0xb0] sm:$0xff]
                  %393 = vst [vmem:[%s299 + $0xa8] sm:$0xff] %v392
                  %v394 = vld [vmem:[%s298 + $0xb8] sm:$0xff]
                  %395 = vst [vmem:[%s299 + $0xb0] sm:$0xff] %v394
                  %v396 = vld [vmem:[%s298 + $0xc0] sm:$0xff]
                  %397 = vst [vmem:[%s299 + $0xb8] sm:$0xff] %v396
                  %v398 = vld [vmem:[%s298 + $0xc8] sm:$0xff]
                  %399 = vst [vmem:[%s299 + $0xc0] sm:$0xff] %v398
                  %v400 = vld [vmem:[%s298 + $0xd0] sm:$0xff]
                  %401 = vst [vmem:[%s299 + $0xc8] sm:$0xff] %v400
                  %v402 = vld [vmem:[%s298 + $0xd8] sm:$0xff]
                  %403 = vst [vmem:[%s299 + $0xd0] sm:$0xff] %v402
                  %v404 = vld [vmem:[%s298 + $0xe0] sm:$0xff]
                  %405 = vst [vmem:[%s299 + $0xd8] sm:$0xff] %v404
                  %v406 = vld [vmem:[%s298 + $0xe8] sm:$0xff]
                  %407 = vst [vmem:[%s299 + $0xe0] sm:$0xff] %v406
                  %v408 = vld [vmem:[%s298 + $0xf0] sm:$0xff]
                  %409 = vst [vmem:[%s299 + $0xe8] sm:$0xff] %v408
                  %v410 = vld [vmem:[%s298 + $0xf8] sm:$0xff]
                  %411 = vst [vmem:[%s299 + $0xf0] sm:$0xff] %v410
                  %v412 = vld [vmem:[%s298 + $0x100] sm:$0xff]
                  %413 = vst [vmem:[%s299 + $0xf8] sm:$0xff] %v412
                  %v414 = vld [vmem:[%s298 + $0x108] sm:$0xff]
                  %415 = vst [vmem:[%s299 + $0x100] sm:$0xff] %v414
                  %v416 = vld [vmem:[%s298 + $0x110] sm:$0xff]
                  %417 = vst [vmem:[%s299 + $0x108] sm:$0xff] %v416
                  %v418 = vld [vmem:[%s298 + $0x118] sm:$0xff]
                  %419 = vst [vmem:[%s299 + $0x110] sm:$0xff] %v418
                  %v420 = vld [vmem:[%s298 + $0x120] sm:$0xff]
                  %421 = vst [vmem:[%s299 + $0x118] sm:$0xff] %v420
                  %v422 = vld [vmem:[%s298 + $0x128] sm:$0xff]
                  %423 = vst [vmem:[%s299 + $0x120] sm:$0xff] %v422
                  %v424 = vld [vmem:[%s298 + $0x130] sm:$0xff]
                  %425 = vst [vmem:[%s299 + $0x128] sm:$0xff] %v424
                  %v426 = vld [vmem:[%s298 + $0x138] sm:$0xff]
                  %427 = vst [vmem:[%s299 + $0x130] sm:$0xff] %v426
                  %s428 = sadd.s32 1, %s297
                  %p429 = scmp.ge.s32.totalorder %s428, %s288
                  %s430 = scalar_select %p429, 0, %s428
                  %s431 = smul.u32 %s430, 256
                  %s432 = smul.u32 %s430, 256
                  %s433 = scalar_lea.vmem %s257, %s431
                  %s434 = scalar_lea.vmem %s241, %s432 [#allocation3]
                $region52: #{bpnet_forward.6} parent=46 // loop_footer
                  %s294 = sadd.s32 %s292, 1
                $region53: #{bpnet_forward.6} parent=46 // loop_footer_branch
                  %291 = sbr.rel target = $region49
                $region54: #{bpnet_forward.6} parent=46 // loop_exit
                  _
                %s435 = sshrl.u32 %s287, 5
                %s436 = sand.u32 %s287, 31
                %s437 = smul.u32 %s435, 32
                %s438 = smul.u32 128, %s437
                %s439 = sshra.s32 %s438, 4
                %s440 = scalar_lea.vmem %s257, %s439
                %s441 = smul.u32 128, %s437
                %s442 = sshra.s32 %s441, 4
                %s443 = scalar_lea.vmem %s241, %s442 [#allocation3]
                // While loop
                $region55: #{bpnet_forward.6} parent=46 // loop_pre_header
                  _
                $region56: #{bpnet_forward.6} parent=46 // loop_header
                  %s447 = sphi 0, %s449
                  %p448 = scmp.ge.s32.totalorder %s447, %s436
                  %s452 = sphi 0, %s461
                  %s453 = sphi %s440, %s464
                  %s454 = sphi %s443, %s465
                $region57: #{bpnet_forward.6} parent=46 // loop_header_branch
                  %451 = sbr.rel (%p448) target = $region61
                $region58: #{bpnet_forward.6} parent=46 // loop_body
                  %v455 = vld [vmem:[%s453] sm:$0xff]
                  %456 = vst [vmem:[%s454] sm:$0xff] %v455
                  %v457 = vld [vmem:[%s453 + $0x40] sm:$0xff]
                  %458 = vst [vmem:[%s454 + $0x38] sm:$0xff] %v457
                  %s459 = sadd.s32 1, %s452
                  %p460 = scmp.ge.s32.totalorder %s459, %s436
                  %s461 = scalar_select %p460, 0, %s459
                  %s462 = smul.u32 %s461, 8
                  %s463 = smul.u32 %s461, 8
                  %s464 = scalar_lea.vmem %s440, %s462
                  %s465 = scalar_lea.vmem %s443, %s463 [#allocation3]
                $region59: #{bpnet_forward.6} parent=46 // loop_footer
                  %s449 = sadd.s32 %s447, 1
                $region60: #{bpnet_forward.6} parent=46 // loop_footer_branch
                  %446 = sbr.rel target = $region56
                $region61: #{bpnet_forward.6} parent=46 // loop_exit
                  _
              $region47: #{bpnet_forward.6} parent=31 // pred_fallthru
                _
              %p466 = pneg %p283
              // Predicated region
              $region62: #{bpnet_forward.6} parent=31 // pred_check
                _
              $region63: #{bpnet_forward.6} parent=31 // pred_check_branch
                %468 = sbr.rel (%p283) target = $region65
              $region64: #{bpnet_forward.6} parent=31 // pred_region
                %s469 = sand.u32 %s258, 7
                %s470 = ssub.s32 %s258, %s469
                %s471 = scalar_lea.vmem %s257, %s470
                %s472 = ssub.s32 %s258, %s469
                %s473 = scalar_lea.vmem %s241, %s472 [#allocation3]
                %s474 = sshrl.u32 %s258, 3
                %s475 = sshrl.u32 %s474, 5
                // While loop
                $region66: #{bpnet_forward.6} parent=64 // loop_pre_header
                  _
                $region67: #{bpnet_forward.6} parent=64 // loop_header
                  %s479 = sphi 0, %s481
                  %p480 = scmp.ge.s32.totalorder %s479, %s475
                  %s484 = sphi 0, %s617
                  %s485 = sphi %s257, %s620
                  %s486 = sphi %s241, %s621
                $region68: #{bpnet_forward.6} parent=64 // loop_header_branch
                  %483 = sbr.rel (%p480) target = $region72
                $region69: #{bpnet_forward.6} parent=64 // loop_body
                  %v487 = vld [vmem:[%s485] sm:$0xff]
                  %488 = vst [vmem:[%s486] sm:$0xff] %v487
                  %v489 = vld [vmem:[%s485 + $0x8] sm:$0xff]
                  %490 = vst [vmem:[%s486 + $0x8] sm:$0xff] %v489
                  %v491 = vld [vmem:[%s485 + $0x10] sm:$0xff]
                  %492 = vst [vmem:[%s486 + $0x10] sm:$0xff] %v491
                  %v493 = vld [vmem:[%s485 + $0x18] sm:$0xff]
                  %494 = vst [vmem:[%s486 + $0x18] sm:$0xff] %v493
                  %v495 = vld [vmem:[%s485 + $0x20] sm:$0xff]
                  %496 = vst [vmem:[%s486 + $0x20] sm:$0xff] %v495
                  %v497 = vld [vmem:[%s485 + $0x28] sm:$0xff]
                  %498 = vst [vmem:[%s486 + $0x28] sm:$0xff] %v497
                  %v499 = vld [vmem:[%s485 + $0x30] sm:$0xff]
                  %500 = vst [vmem:[%s486 + $0x30] sm:$0xff] %v499
                  %v501 = vld [vmem:[%s485 + $0x38] sm:$0xff]
                  %502 = vst [vmem:[%s486 + $0x38] sm:$0xff] %v501
                  %v503 = vld [vmem:[%s485 + $0x40] sm:$0xff]
                  %504 = vst [vmem:[%s486 + $0x40] sm:$0xff] %v503
                  %v505 = vld [vmem:[%s485 + $0x48] sm:$0xff]
                  %506 = vst [vmem:[%s486 + $0x48] sm:$0xff] %v505
                  %v507 = vld [vmem:[%s485 + $0x50] sm:$0xff]
                  %508 = vst [vmem:[%s486 + $0x50] sm:$0xff] %v507
                  %v509 = vld [vmem:[%s485 + $0x58] sm:$0xff]
                  %510 = vst [vmem:[%s486 + $0x58] sm:$0xff] %v509
                  %v511 = vld [vmem:[%s485 + $0x60] sm:$0xff]
                  %512 = vst [vmem:[%s486 + $0x60] sm:$0xff] %v511
                  %v513 = vld [vmem:[%s485 + $0x68] sm:$0xff]
                  %514 = vst [vmem:[%s486 + $0x68] sm:$0xff] %v513
                  %v515 = vld [vmem:[%s485 + $0x70] sm:$0xff]
                  %516 = vst [vmem:[%s486 + $0x70] sm:$0xff] %v515
                  %v517 = vld [vmem:[%s485 + $0x78] sm:$0xff]
                  %518 = vst [vmem:[%s486 + $0x78] sm:$0xff] %v517
                  %v519 = vld [vmem:[%s485 + $0x80] sm:$0xff]
                  %520 = vst [vmem:[%s486 + $0x80] sm:$0xff] %v519
                  %v521 = vld [vmem:[%s485 + $0x88] sm:$0xff]
                  %522 = vst [vmem:[%s486 + $0x88] sm:$0xff] %v521
                  %v523 = vld [vmem:[%s485 + $0x90] sm:$0xff]
                  %524 = vst [vmem:[%s486 + $0x90] sm:$0xff] %v523
                  %v525 = vld [vmem:[%s485 + $0x98] sm:$0xff]
                  %526 = vst [vmem:[%s486 + $0x98] sm:$0xff] %v525
                  %v527 = vld [vmem:[%s485 + $0xa0] sm:$0xff]
                  %528 = vst [vmem:[%s486 + $0xa0] sm:$0xff] %v527
                  %v529 = vld [vmem:[%s485 + $0xa8] sm:$0xff]
                  %530 = vst [vmem:[%s486 + $0xa8] sm:$0xff] %v529
                  %v531 = vld [vmem:[%s485 + $0xb0] sm:$0xff]
                  %532 = vst [vmem:[%s486 + $0xb0] sm:$0xff] %v531
                  %v533 = vld [vmem:[%s485 + $0xb8] sm:$0xff]
                  %534 = vst [vmem:[%s486 + $0xb8] sm:$0xff] %v533
                  %v535 = vld [vmem:[%s485 + $0xc0] sm:$0xff]
                  %536 = vst [vmem:[%s486 + $0xc0] sm:$0xff] %v535
                  %v537 = vld [vmem:[%s485 + $0xc8] sm:$0xff]
                  %538 = vst [vmem:[%s486 + $0xc8] sm:$0xff] %v537
                  %v539 = vld [vmem:[%s485 + $0xd0] sm:$0xff]
                  %540 = vst [vmem:[%s486 + $0xd0] sm:$0xff] %v539
                  %v541 = vld [vmem:[%s485 + $0xd8] sm:$0xff]
                  %542 = vst [vmem:[%s486 + $0xd8] sm:$0xff] %v541
                  %v543 = vld [vmem:[%s485 + $0xe0] sm:$0xff]
                  %544 = vst [vmem:[%s486 + $0xe0] sm:$0xff] %v543
                  %v545 = vld [vmem:[%s485 + $0xe8] sm:$0xff]
                  %546 = vst [vmem:[%s486 + $0xe8] sm:$0xff] %v545
                  %v547 = vld [vmem:[%s485 + $0xf0] sm:$0xff]
                  %548 = vst [vmem:[%s486 + $0xf0] sm:$0xff] %v547
                  %v549 = vld [vmem:[%s485 + $0xf8] sm:$0xff]
                  %550 = vst [vmem:[%s486 + $0xf8] sm:$0xff] %v549
                  %v551 = vld [vmem:[%s485 + $0x40] sm:$0xff]
                  %552 = vst [vmem:[%s486 + $0x38] sm:$0xff] %v551
                  %v553 = vld [vmem:[%s485 + $0x48] sm:$0xff]
                  %554 = vst [vmem:[%s486 + $0x40] sm:$0xff] %v553
                  %v555 = vld [vmem:[%s485 + $0x50] sm:$0xff]
                  %556 = vst [vmem:[%s486 + $0x48] sm:$0xff] %v555
                  %v557 = vld [vmem:[%s485 + $0x58] sm:$0xff]
                  %558 = vst [vmem:[%s486 + $0x50] sm:$0xff] %v557
                  %v559 = vld [vmem:[%s485 + $0x60] sm:$0xff]
                  %560 = vst [vmem:[%s486 + $0x58] sm:$0xff] %v559
                  %v561 = vld [vmem:[%s485 + $0x68] sm:$0xff]
                  %562 = vst [vmem:[%s486 + $0x60] sm:$0xff] %v561
                  %v563 = vld [vmem:[%s485 + $0x70] sm:$0xff]
                  %564 = vst [vmem:[%s486 + $0x68] sm:$0xff] %v563
                  %v565 = vld [vmem:[%s485 + $0x78] sm:$0xff]
                  %566 = vst [vmem:[%s486 + $0x70] sm:$0xff] %v565
                  %v567 = vld [vmem:[%s485 + $0x80] sm:$0xff]
                  %568 = vst [vmem:[%s486 + $0x78] sm:$0xff] %v567
                  %v569 = vld [vmem:[%s485 + $0x88] sm:$0xff]
                  %570 = vst [vmem:[%s486 + $0x80] sm:$0xff] %v569
                  %v571 = vld [vmem:[%s485 + $0x90] sm:$0xff]
                  %572 = vst [vmem:[%s486 + $0x88] sm:$0xff] %v571
                  %v573 = vld [vmem:[%s485 + $0x98] sm:$0xff]
                  %574 = vst [vmem:[%s486 + $0x90] sm:$0xff] %v573
                  %v575 = vld [vmem:[%s485 + $0xa0] sm:$0xff]
                  %576 = vst [vmem:[%s486 + $0x98] sm:$0xff] %v575
                  %v577 = vld [vmem:[%s485 + $0xa8] sm:$0xff]
                  %578 = vst [vmem:[%s486 + $0xa0] sm:$0xff] %v577
                  %v579 = vld [vmem:[%s485 + $0xb0] sm:$0xff]
                  %580 = vst [vmem:[%s486 + $0xa8] sm:$0xff] %v579
                  %v581 = vld [vmem:[%s485 + $0xb8] sm:$0xff]
                  %582 = vst [vmem:[%s486 + $0xb0] sm:$0xff] %v581
                  %v583 = vld [vmem:[%s485 + $0xc0] sm:$0xff]
                  %584 = vst [vmem:[%s486 + $0xb8] sm:$0xff] %v583
                  %v585 = vld [vmem:[%s485 + $0xc8] sm:$0xff]
                  %586 = vst [vmem:[%s486 + $0xc0] sm:$0xff] %v585
                  %v587 = vld [vmem:[%s485 + $0xd0] sm:$0xff]
                  %588 = vst [vmem:[%s486 + $0xc8] sm:$0xff] %v587
                  %v589 = vld [vmem:[%s485 + $0xd8] sm:$0xff]
                  %590 = vst [vmem:[%s486 + $0xd0] sm:$0xff] %v589
                  %v591 = vld [vmem:[%s485 + $0xe0] sm:$0xff]
                  %592 = vst [vmem:[%s486 + $0xd8] sm:$0xff] %v591
                  %v593 = vld [vmem:[%s485 + $0xe8] sm:$0xff]
                  %594 = vst [vmem:[%s486 + $0xe0] sm:$0xff] %v593
                  %v595 = vld [vmem:[%s485 + $0xf0] sm:$0xff]
                  %596 = vst [vmem:[%s486 + $0xe8] sm:$0xff] %v595
                  %v597 = vld [vmem:[%s485 + $0xf8] sm:$0xff]
                  %598 = vst [vmem:[%s486 + $0xf0] sm:$0xff] %v597
                  %v599 = vld [vmem:[%s485 + $0x100] sm:$0xff]
                  %600 = vst [vmem:[%s486 + $0xf8] sm:$0xff] %v599
                  %v601 = vld [vmem:[%s485 + $0x108] sm:$0xff]
                  %602 = vst [vmem:[%s486 + $0x100] sm:$0xff] %v601
                  %v603 = vld [vmem:[%s485 + $0x110] sm:$0xff]
                  %604 = vst [vmem:[%s486 + $0x108] sm:$0xff] %v603
                  %v605 = vld [vmem:[%s485 + $0x118] sm:$0xff]
                  %606 = vst [vmem:[%s486 + $0x110] sm:$0xff] %v605
                  %v607 = vld [vmem:[%s485 + $0x120] sm:$0xff]
                  %608 = vst [vmem:[%s486 + $0x118] sm:$0xff] %v607
                  %v609 = vld [vmem:[%s485 + $0x128] sm:$0xff]
                  %610 = vst [vmem:[%s486 + $0x120] sm:$0xff] %v609
                  %v611 = vld [vmem:[%s485 + $0x130] sm:$0xff]
                  %612 = vst [vmem:[%s486 + $0x128] sm:$0xff] %v611
                  %v613 = vld [vmem:[%s485 + $0x138] sm:$0xff]
                  %614 = vst [vmem:[%s486 + $0x130] sm:$0xff] %v613
                  %s615 = sadd.s32 1, %s484
                  %p616 = scmp.ge.s32.totalorder %s615, %s475
                  %s617 = scalar_select %p616, 0, %s615
                  %s618 = smul.u32 %s617, 256
                  %s619 = smul.u32 %s617, 256
                  %s620 = scalar_lea.vmem %s257, %s618
                  %s621 = scalar_lea.vmem %s241, %s619 [#allocation3]
                $region70: #{bpnet_forward.6} parent=64 // loop_footer
                  %s481 = sadd.s32 %s479, 1
                $region71: #{bpnet_forward.6} parent=64 // loop_footer_branch
                  %478 = sbr.rel target = $region67
                $region72: #{bpnet_forward.6} parent=64 // loop_exit
                  _
                %s622 = sshrl.u32 %s474, 5
                %s623 = sand.u32 %s474, 31
                %s624 = smul.u32 %s622, 32
                %s625 = smul.u32 128, %s624
                %s626 = sshra.s32 %s625, 4
                %s627 = scalar_lea.vmem %s257, %s626
                %s628 = smul.u32 128, %s624
                %s629 = sshra.s32 %s628, 4
                %s630 = scalar_lea.vmem %s241, %s629 [#allocation3]
                // While loop
                $region73: #{bpnet_forward.6} parent=64 // loop_pre_header
                  _
                $region74: #{bpnet_forward.6} parent=64 // loop_header
                  %s634 = sphi 0, %s636
                  %p635 = scmp.ge.s32.totalorder %s634, %s623
                  %s639 = sphi 0, %s648
                  %s640 = sphi %s627, %s651
                  %s641 = sphi %s630, %s652
                $region75: #{bpnet_forward.6} parent=64 // loop_header_branch
                  %638 = sbr.rel (%p635) target = $region79
                $region76: #{bpnet_forward.6} parent=64 // loop_body
                  %v642 = vld [vmem:[%s640] sm:$0xff]
                  %643 = vst [vmem:[%s641] sm:$0xff] %v642
                  %v644 = vld [vmem:[%s640 + $0x40] sm:$0xff]
                  %645 = vst [vmem:[%s641 + $0x38] sm:$0xff] %v644
                  %s646 = sadd.s32 1, %s639
                  %p647 = scmp.ge.s32.totalorder %s646, %s623
                  %s648 = scalar_select %p647, 0, %s646
                  %s649 = smul.u32 %s648, 8
                  %s650 = smul.u32 %s648, 8
                  %s651 = scalar_lea.vmem %s627, %s649
                  %s652 = scalar_lea.vmem %s630, %s650 [#allocation3]
                $region77: #{bpnet_forward.6} parent=64 // loop_footer
                  %s636 = sadd.s32 %s634, 1
                $region78: #{bpnet_forward.6} parent=64 // loop_footer_branch
                  %633 = sbr.rel target = $region74
                $region79: #{bpnet_forward.6} parent=64 // loop_exit
                  _
                %s653 = sshllo.u32 0, %s469
                loop: start=0, step=1, limit=1
                $region80: #{bpnet_forward.6} parent=64 // loop_pre_header
                  _
                $region81: #{bpnet_forward.6} parent=64 // loop_header
                  %s655 = sphi 0, %s659
                  %p656 = scmp.ge.s32.totalorder %s655, 1
                  %s660 = sphi %s471, %s471
                  %s661 = sphi %s473, %s473
                $region82: #{bpnet_forward.6} parent=64 // loop_header_branch
                  %658 = sbr.rel (%p656) target = $region86
                $region83: #{bpnet_forward.6} parent=64 // loop_body
                  %v662 = vld [vmem:[%s660] sm:%s653]
                  %663 = vst [vmem:[%s661] sm:%s653] %v662
                  %v664 = vld [vmem:[%s660 + $0x40] sm:%s653]
                  %665 = vst [vmem:[%s661 + $0x38] sm:%s653] %v664
                $region84: #{bpnet_forward.6} parent=64 // loop_footer
                  %s659 = sadd.s32 1, %s655
                $region85: #{bpnet_forward.6} parent=64 // loop_footer_branch
                  %654 = sbr.rel target = $region81
                $region86: #{bpnet_forward.6} parent=64 // loop_exit
                  _
              $region65: #{bpnet_forward.6} parent=31 // pred_fallthru
                _
            $region32: #{bpnet_forward.6} parent=27 // pred_fallthru
              _
            // Predicated region
            $region33: #{bpnet_forward.6} parent=27 // pred_check
              %p266 = pneg %p262
            $region34: #{bpnet_forward.6} parent=27 // pred_check_branch
              %268 = sbr.rel (%p266) target = $region36
            $region35: #{bpnet_forward.6} parent=27 // pred_region
              %s269 = sshllo.u32 0, %s258
              loop: start=0, step=1, limit=1
              $region37: #{bpnet_forward.6} parent=35 // loop_pre_header
                _
              $region38: #{bpnet_forward.6} parent=35 // loop_header
                %s271 = sphi 0, %s275
                %p272 = scmp.ge.s32.totalorder %s271, 1
                %s276 = sphi %s257, %s257
                %s277 = sphi %s241, %s241
              $region39: #{bpnet_forward.6} parent=35 // loop_header_branch
                %274 = sbr.rel (%p272) target = $region43
              $region40: #{bpnet_forward.6} parent=35 // loop_body
                %v278 = vld [vmem:[%s276] sm:%s269]
                %279 = vst [vmem:[%s277] sm:%s269] %v278
                %v280 = vld [vmem:[%s276 + $0x40] sm:%s269]
                %281 = vst [vmem:[%s277 + $0x38] sm:%s269] %v280
              $region41: #{bpnet_forward.6} parent=35 // loop_footer
                %s275 = sadd.s32 1, %s271
              $region42: #{bpnet_forward.6} parent=35 // loop_footer_branch
                %270 = sbr.rel target = $region38
              $region43: #{bpnet_forward.6} parent=35 // loop_exit
                _
            $region36: #{bpnet_forward.6} parent=27 // pred_fallthru
              _
          $region28: #{bpnet_forward.6} parent=23 // pred_fallthru
            _
          %666 = vnop
        $region24: #{bpnet_forward.6} parent=15 // pred_fallthru
          _
        // Predicated region
        $region87: #{bpnet_forward.6} parent=15 // pred_check
          %p667 = pneg %p125
        $region88: #{bpnet_forward.6} parent=15 // pred_check_branch
          %669 = sbr.rel (%p667) target = $region90
        $region89: #{bpnet_forward.6} parent=15 // pred_region
          %p670 = scmp.lt.s32.totalorder %s19, 0
          %s671 = scalar_select %p670, %s19, 0
          %s672 = smul.u32 6, %s671
          %p673 = scmp.lt.s32.totalorder %s17, 1
          %s674 = scalar_select %p673, %s17, 1
          %p675 = scmp.lt.s32.totalorder %s672, 5
          %s676 = scalar_select %p675, %s672, 5
          %s677 = smul.addr %s674, 6
          %s678 = sadd.s32 %s676, %s677
          %s679 = scalar_lea.vmem %s2, %s678
          %p680 = scmp.lt.s32.totalorder %s19, 0
          %s681 = scalar_select %p680, %s19, 0
          %s682 = smul.u32 6, %s681
        $region90: #{bpnet_forward.6} parent=15 // pred_fallthru
          _
        // Predicated region
        $region91: #{bpnet_forward.6} parent=15 // pred_check
          %p683 = pneg %p159
        $region92: #{bpnet_forward.6} parent=15 // pred_check_branch
          %685 = sbr.rel (%p683) target = $region94
        $region93: #{bpnet_forward.6} parent=15 // pred_region
          %s686 = ssub.s32 %s19, 1
          %p687 = scmp.gt.s32.totalorder %s686, 0
          %s688 = scalar_select %p687, %s686, 0
          %s689 = smul.u32 7, %s688
          %s690 = ssub.s32 8, %s689
          %p691 = scmp.lt.s32.totalorder %s690, 7
          %s692 = scalar_select %p691, %s690, 7
          %s693 = smul.u32 16, %s692
          %p694 = scmp.lt.s32.totalorder %s17, 1
          %s695 = scalar_select %p694, %s17, 1
          %p696 = scmp.lt.s32.totalorder %s689, 7
          %s697 = scalar_select %p696, %s689, 7
          %s698 = smul.addr %s695, 8
          %s699 = sadd.s32 %s697, %s698
          %s700 = scalar_lea.vmem %s3, %s699
          %s701 = ssub.s32 %s19, 1
          %p702 = scmp.gt.s32.totalorder %s701, 0
          %s703 = scalar_select %p702, %s701, 0
          %s704 = smul.u32 7, %s703
          %s705 = ssub.s32 8, %s704
          %p706 = scmp.lt.s32.totalorder %s705, 7
          %s707 = scalar_select %p706, %s705, 7
          %s708 = smul.u32 16, %s707
        $region94: #{bpnet_forward.6} parent=15 // pred_fallthru
          _
      $region16: #{bpnet_forward.6} parent=5 // pred_fallthru
        _
      %p709 = scmp.le.s32.totalorder 1, %s10
      %p710 = scmp.lt.s32.totalorder %s10, 7
      %p711 = pnand %p709, %p710
      %p712 = pneg %p711
      // Predicated region
      $region95: #{bpnet_forward.6} parent=5 // pred_check
        _
      $region96: #{bpnet_forward.6} parent=5 // pred_check_branch
        %714 = sbr.rel (%p711) target = $region98
      $region97: #{bpnet_forward.6} parent=5 // pred_region
        %s715 = ssub.s32 %s10, 1
        %s716 = sand.u32 %s86, 1
        %s717 = sand.u32 %s86, 1
        %s718 = smul.addr %s717, 112
        %s719 = scalar_lea.vmem [#allocation3], %s718
        // Predicated region
        $region99: #{bpnet_forward.6} parent=97 // pred_check
          %p720 = pneg %p99
        $region100: #{bpnet_forward.6} parent=97 // pred_check_branch
          %722 = sbr.rel (%p720) target = $region102
        $region101: #{bpnet_forward.6} parent=97 // pred_region
          _
        $region102: #{bpnet_forward.6} parent=97 // pred_fallthru
          _
        %p723 = scmp.lt.s32.totalorder %s22, 0
        %s724 = scalar_select %p723, %s22, 0
        %s725 = smul.u32 2, %s21
        %s726 = smul.u32 6, %s724
        %p727 = scmp.lt.s32.totalorder %s20, 1
        %s728 = scalar_select %p727, %s20, 1
        %p729 = scmp.lt.s32.totalorder %s725, 1
        %s730 = scalar_select %p729, %s725, 1
        %p731 = scmp.lt.s32.totalorder %s726, 5
        %s732 = scalar_select %p731, %s726, 5
        %s733 = smul.addr %s730, 6
        %s734 = sadd.s32 %s732, %s733
        %s735 = smul.addr %s728, 12
        %s736 = sadd.s32 %s734, %s735
        %s737 = smul.addr %s736, 8
        %s738 = scalar_lea.vmem %s0, %s737
        %p739 = pneg %p63
        %p740 = pneg %p60
        %s741 = sand.u32 %s86, 1
        %s742 = sand.u32 %s86, 1
        %s743 = smul.addr %s742, 112
        %s744 = scalar_lea.vmem [#allocation3], %s743
        %p745 = pneg %p99
        %p746 = pneg %p96
        %p747 = scmp.lt.s32.totalorder %s22, 0
        %s748 = scalar_select %p747, %s22, 0
        %s749 = smul.u32 6, %s748
        %p750 = scmp.lt.s32.totalorder %s20, 1
        %s751 = scalar_select %p750, %s20, 1
        %p752 = scmp.lt.s32.totalorder %s749, 5
        %s753 = scalar_select %p752, %s749, 5
        %s754 = smul.addr %s751, 6
        %s755 = sadd.s32 %s753, %s754
        %s756 = scalar_lea.vmem %s2, %s755
        %p757 = pneg %p131
        %p758 = pneg %p128
        %s759 = ssub.s32 %s22, 1
        %p760 = scmp.gt.s32.totalorder %s759, 0
        %s761 = scalar_select %p760, %s759, 0
        %s762 = smul.u32 7, %s761
        %s763 = ssub.s32 8, %s762
        %p764 = scmp.lt.s32.totalorder %s763, 7
        %s765 = scalar_select %p764, %s763, 7
        %s766 = smul.u32 16, %s765
        %p767 = scmp.lt.s32.totalorder %s20, 1
        %s768 = scalar_select %p767, %s20, 1
        %p769 = scmp.lt.s32.totalorder %s762, 7
        %s770 = scalar_select %p769, %s762, 7
        %s771 = smul.addr %s768, 8
        %s772 = sadd.s32 %s770, %s771
        %s773 = scalar_lea.vmem %s3, %s772
        %p774 = pneg %p165
        %p775 = pneg %p162
        %p776 = pneg %p193
        %p777 = pneg %p190
        %s778 = smul.u32 2, %s21
        %p779 = scmp.lt.s32.totalorder %s20, 1
        %s780 = scalar_select %p779, %s20, 1
        %p781 = scmp.lt.s32.totalorder %s778, 1
        %s782 = scalar_select %p781, %s778, 1
        %s783 = smul.addr %s780, 2
        %s784 = sadd.s32 %s782, %s783
        %s785 = smul.addr %s784, 8
        %s786 = scalar_lea.vmem %s4, %s785
        %p787 = scmp.lt.s32.totalorder %s22, 0
        %s788 = scalar_select %p787, %s22, 0
        %s789 = smul.u32 2, %s21
        %s790 = smul.u32 6, %s788
        %p791 = scmp.lt.s32.totalorder %s20, 1
        %s792 = scalar_select %p791, %s20, 1
        %p793 = scmp.lt.s32.totalorder %s789, 1
        %s794 = scalar_select %p793, %s789, 1
        %p795 = scmp.lt.s32.totalorder %s790, 5
        %s796 = scalar_select %p795, %s790, 5
        %s797 = smul.addr %s794, 6
        %s798 = sadd.s32 %s796, %s797
        %s799 = smul.addr %s792, 12
        %s800 = sadd.s32 %s798, %s799
        %s801 = smul.addr %s800, 8
        %s802 = scalar_lea.vmem %s0, %s801
        %p803 = scmp.lt.s32.totalorder %s22, 0
        %s804 = scalar_select %p803, %s22, 0
        %s805 = smul.u32 2, %s21
        %s806 = smul.u32 6, %s804
        %s807 = ssub.s32 %s22, 1
        %p808 = scmp.gt.s32.totalorder %s807, 0
        %s809 = scalar_select %p808, %s807, 0
        %s810 = smul.u32 2, %s21
        %s811 = smul.u32 7, %s809
        %s812 = ssub.s32 8, %s811
        %p813 = scmp.lt.s32.totalorder %s812, 7
        %s814 = scalar_select %p813, %s812, 7
        %s815 = smul.u32 256, %s814
        %p816 = scmp.lt.s32.totalorder %s22, 0
        %s817 = scalar_select %p816, %s22, 0
        %s818 = smul.u32 6, %s817
        %p819 = scmp.lt.s32.totalorder %s20, 1
        %s820 = scalar_select %p819, %s20, 1
        %p821 = scmp.lt.s32.totalorder %s818, 5
        %s822 = scalar_select %p821, %s818, 5
        %s823 = smul.addr %s820, 6
        %s824 = sadd.s32 %s822, %s823
        %s825 = scalar_lea.vmem %s2, %s824
        %p826 = scmp.lt.s32.totalorder %s22, 0
        %s827 = scalar_select %p826, %s22, 0
        %s828 = smul.u32 6, %s827
        %s829 = ssub.s32 %s22, 1
        %p830 = scmp.gt.s32.totalorder %s829, 0
        %s831 = scalar_select %p830, %s829, 0
        %s832 = smul.u32 7, %s831
        %s833 = ssub.s32 8, %s832
        %p834 = scmp.lt.s32.totalorder %s833, 7
        %s835 = scalar_select %p834, %s833, 7
        %s836 = smul.u32 16, %s835
        %p837 = scmp.lt.s32.totalorder %s20, 1
        %s838 = scalar_select %p837, %s20, 1
        %p839 = scmp.lt.s32.totalorder %s832, 7
        %s840 = scalar_select %p839, %s832, 7
        %s841 = smul.addr %s838, 8
        %s842 = sadd.s32 %s840, %s841
        %s843 = scalar_lea.vmem %s3, %s842
        %s844 = ssub.s32 %s22, 1
        %p845 = scmp.gt.s32.totalorder %s844, 0
        %s846 = scalar_select %p845, %s844, 0
        %s847 = smul.u32 7, %s846
        %s848 = ssub.s32 8, %s847
        %p849 = scmp.lt.s32.totalorder %s848, 7
        %s850 = scalar_select %p849, %s848, 7
        %s851 = smul.u32 16, %s850
        %s852 = smul.u32 2, %s21
        %p853 = scmp.lt.s32.totalorder %s20, 1
        %s854 = scalar_select %p853, %s20, 1
        %p855 = scmp.lt.s32.totalorder %s852, 1
        %s856 = scalar_select %p855, %s852, 1
        %s857 = smul.addr %s854, 2
        %s858 = sadd.s32 %s856, %s857
        %s859 = smul.addr %s858, 8
        %s860 = scalar_lea.vmem %s4, %s859
        %s861 = smul.u32 2, %s21
        %p862 = scmp.eq.s32.totalorder %s22, 0
        // Predicated region
        $region103: #{bpnet_forward.6} parent=97 // pred_check
          %p863 = pneg %p862
        $region104: #{bpnet_forward.6} parent=97 // pred_check_branch
          %865 = sbr.rel (%p863) target = $region106
        $region105: #{bpnet_forward.6} parent=97 // pred_region
          %866 = vst [vmem:[#allocation2] sm:$0xff] 0.0
          %867 = vst [vmem:[#allocation2 + $0x8] sm:$0xf] 0.0
        $region106: #{bpnet_forward.6} parent=97 // pred_fallthru
          _
        %p868 = scmp.lt.s32.totalorder %s22, 1
        // Predicated region
        $region107: #{bpnet_forward.6} parent=97 // pred_check
          %p869 = pneg %p868
        $region108: #{bpnet_forward.6} parent=97 // pred_check_branch
          %871 = sbr.rel (%p869) target = $region110
        $region109: #{bpnet_forward.6} parent=97 // pred_region
          %v872 = vld [vmem:[%s802] sm:$0xff]
          %v873 = vld [vmem:[%s802 + $0x30] sm:$0xf]
          %v874 = vld [vmem:[%s825] sm:$0x1]
          %v876 = vlaneseq
          %v877 = vshrl.u32 %v876, 7
          %v878 = vsub.s32 0, %v877
          %v879 = vrot.slane %v874, %v878
          %v881 = vmul.f32 %v872, %v879
          %v882 = vmul.f32 %v873, %v879
          %v883 = vld [vmem:[#allocation2] sm:$0xff]
          %v884 = vld [vmem:[#allocation2 + $0x8] sm:$0xf]
          %v885 = vadd.f32 %v883, %v881
          %v886 = vadd.f32 %v884, %v882
          %887 = vst [vmem:[#allocation2] sm:$0xff] %v885
          %888 = vst [vmem:[#allocation2 + $0x8] sm:$0xf] %v886
          %v889 = vld [vmem:[%s802 + $0x8] sm:$0xff]
          %v890 = vld [vmem:[%s802 + $0x38] sm:$0xf]
          %v891 = vld [vmem:[%s825 + $0x1] sm:$0x1]
          %v893 = vlaneseq
          %v894 = vshrl.u32 %v893, 7
          %v895 = vsub.s32 0, %v894
          %v896 = vrot.slane %v891, %v895
          %v898 = vmul.f32 %v889, %v896
          %v899 = vmul.f32 %v890, %v896
          %v900 = vld [vmem:[#allocation2] sm:$0xff]
          %v901 = vld [vmem:[#allocation2 + $0x8] sm:$0xf]
          %v902 = vadd.f32 %v900, %v898
          %v903 = vadd.f32 %v901, %v899
          %904 = vst [vmem:[#allocation2] sm:$0xff] %v902
          %905 = vst [vmem:[#allocation2 + $0x8] sm:$0xf] %v903
          %v906 = vld [vmem:[%s802 + $0x10] sm:$0xff]
          %v907 = vld [vmem:[%s802 + $0x40] sm:$0xf]
          %v908 = vld [vmem:[%s825 + $0x2] sm:$0x1]
          %v910 = vlaneseq
          %v911 = vshrl.u32 %v910, 7
          %v912 = vsub.s32 0, %v911
          %v913 = vrot.slane %v908, %v912
          %v915 = vmul.f32 %v906, %v913
          %v916 = vmul.f32 %v907, %v913
          %v917 = vld [vmem:[#allocation2] sm:$0xff]
          %v918 = vld [vmem:[#allocation2 + $0x8] sm:$0xf]
          %v919 = vadd.f32 %v917, %v915
          %v920 = vadd.f32 %v918, %v916
          %921 = vst [vmem:[#allocation2] sm:$0xff] %v919
          %922 = vst [vmem:[#allocation2 + $0x8] sm:$0xf] %v920
          %v923 = vld [vmem:[%s802 + $0x18] sm:$0xff]
          %v924 = vld [vmem:[%s802 + $0x48] sm:$0xf]
          %v925 = vld [vmem:[%s825 + $0x3] sm:$0x1]
          %v927 = vlaneseq
          %v928 = vshrl.u32 %v927, 7
          %v929 = vsub.s32 0, %v928
          %v930 = vrot.slane %v925, %v929
          %v932 = vmul.f32 %v923, %v930
          %v933 = vmul.f32 %v924, %v930
          %v934 = vld [vmem:[#allocation2] sm:$0xff]
          %v935 = vld [vmem:[#allocation2 + $0x8] sm:$0xf]
          %v936 = vadd.f32 %v934, %v932
          %v937 = vadd.f32 %v935, %v933
          %938 = vst [vmem:[#allocation2] sm:$0xff] %v936
          %939 = vst [vmem:[#allocation2 + $0x8] sm:$0xf] %v937
          %v940 = vld [vmem:[%s802 + $0x20] sm:$0xff]
          %v941 = vld [vmem:[%s802 + $0x50] sm:$0xf]
          %v942 = vld [vmem:[%s825 + $0x4] sm:$0x1]
          %v944 = vlaneseq
          %v945 = vshrl.u32 %v944, 7
          %v946 = vsub.s32 0, %v945
          %v947 = vrot.slane %v942, %v946
          %v949 = vmul.f32 %v940, %v947
          %v950 = vmul.f32 %v941, %v947
          %v951 = vld [vmem:[#allocation2] sm:$0xff]
          %v952 = vld [vmem:[#allocation2 + $0x8] sm:$0xf]
          %v953 = vadd.f32 %v951, %v949
          %v954 = vadd.f32 %v952, %v950
          %955 = vst [vmem:[#allocation2] sm:$0xff] %v953
          %956 = vst [vmem:[#allocation2 + $0x8] sm:$0xf] %v954
          %v957 = vld [vmem:[%s802 + $0x28] sm:$0xff]
          %v958 = vld [vmem:[%s802 + $0x58] sm:$0xf]
          %v959 = vld [vmem:[%s825 + $0x5] sm:$0x1]
          %v961 = vlaneseq
          %v962 = vshrl.u32 %v961, 7
          %v963 = vsub.s32 0, %v962
          %v964 = vrot.slane %v959, %v963
          %v966 = vmul.f32 %v957, %v964
          %v967 = vmul.f32 %v958, %v964
          %v968 = vld [vmem:[#allocation2] sm:$0xff]
          %v969 = vld [vmem:[#allocation2 + $0x8] sm:$0xf]
          %v970 = vadd.f32 %v968, %v966
          %v971 = vadd.f32 %v969, %v967
          %972 = vst [vmem:[#allocation2] sm:$0xff] %v970
          %973 = vst [vmem:[#allocation2 + $0x8] sm:$0xf] %v971
        $region110: #{bpnet_forward.6} parent=97 // pred_fallthru
          _
        %p974 = scmp.ge.s32.totalorder %s22, 1
        // Predicated region
        $region111: #{bpnet_forward.6} parent=97 // pred_check
          %p975 = pneg %p974
        $region112: #{bpnet_forward.6} parent=97 // pred_check_branch
          %977 = sbr.rel (%p975) target = $region114
        $region113: #{bpnet_forward.6} parent=97 // pred_region
          %s978 = ssub.s32 %s22, 1
          %s979 = smul.u32 %s978, 896
          %v980 = vlaneseq
          %v981 = vand.u32 %v980, 127
          %v982 = vld [vmem:[%s719] sm:$0xff]
          %v983 = vld [vmem:[%s719 + $0x38] sm:$0xf]
          %v984 = vld [vmem:[%s843] sm:$0x1]
          %v986 = vlaneseq
          %v987 = vshrl.u32 %v986, 7
          %v988 = vsub.s32 0, %v987
          %v989 = vrot.slane %v984, %v988
          %v991 = vmul.f32 %v982, %v989
          %v992 = vmul.f32 %v983, %v989
          %v993 = vstv %s979
          %v994 = vadd.s32 %v993, %v981
          %vm995 = vcmp.lt.s32.totalorder %v994, 960
          %v996 = vsel %vm995, 1, 0
          %vm997 = vcmp.eq.s32.totalorder %v996, 1
          %v998 = vsel %vm997, %v991, 0.0
          %v999 = vsel %vm997, %v992, 0.0
          %v1000 = vld [vmem:[#allocation2] sm:$0xff]
          %v1001 = vld [vmem:[#allocation2 + $0x8] sm:$0xf]
          %v1002 = vadd.f32 %v1000, %v998
          %v1003 = vadd.f32 %v1001, %v999
          %1004 = vst [vmem:[#allocation2] sm:$0xff] %v1002
          %1005 = vst [vmem:[#allocation2 + $0x8] sm:$0xf] %v1003
          %v1006 = vld [vmem:[%s719 + $0x8] sm:$0xff]
          %v1007 = vld [vmem:[%s719 + $0x40] sm:$0xf]
          %v1008 = vld [vmem:[%s843 + $0x1] sm:$0x1]
          %v1010 = vlaneseq
          %v1011 = vshrl.u32 %v1010, 7
          %v1012 = vsub.s32 0, %v1011
          %v1013 = vrot.slane %v1008, %v1012
          %v1015 = vmul.f32 %v1006, %v1013
          %v1016 = vmul.f32 %v1007, %v1013
          %s1017 = sadd.s32 %s979, 128
          %v1018 = vstv %s1017
          %v1019 = vadd.s32 %v1018, %v981
          %vm1020 = vcmp.lt.s32.totalorder %v1019, 960
          %v1021 = vsel %vm1020, 1, 0
          %vm1022 = vcmp.eq.s32.totalorder %v1021, 1
          %v1023 = vsel %vm1022, %v1015, 0.0
          %v1024 = vsel %vm1022, %v1016, 0.0
          %v1025 = vld [vmem:[#allocation2] sm:$0xff]
          %v1026 = vld [vmem:[#allocation2 + $0x8] sm:$0xf]
          %v1027 = vadd.f32 %v1025, %v1023
          %v1028 = vadd.f32 %v1026, %v1024
          %1029 = vst [vmem:[#allocation2] sm:$0xff] %v1027
          %1030 = vst [vmem:[#allocation2 + $0x8] sm:$0xf] %v1028
          %v1031 = vld [vmem:[%s719 + $0x10] sm:$0xff]
          %v1032 = vld [vmem:[%s719 + $0x48] sm:$0xf]
          %v1033 = vld [vmem:[%s843 + $0x2] sm:$0x1]
          %v1035 = vlaneseq
          %v1036 = vshrl.u32 %v1035, 7
          %v1037 = vsub.s32 0, %v1036
          %v1038 = vrot.slane %v1033, %v1037
          %v1040 = vmul.f32 %v1031, %v1038
          %v1041 = vmul.f32 %v1032, %v1038
          %s1042 = sadd.s32 %s979, 256
          %v1043 = vstv %s1042
          %v1044 = vadd.s32 %v1043, %v981
          %vm1045 = vcmp.lt.s32.totalorder %v1044, 960
          %v1046 = vsel %vm1045, 1, 0
          %vm1047 = vcmp.eq.s32.totalorder %v1046, 1
          %v1048 = vsel %vm1047, %v1040, 0.0
          %v1049 = vsel %vm1047, %v1041, 0.0
          %v1050 = vld [vmem:[#allocation2] sm:$0xff]
          %v1051 = vld [vmem:[#allocation2 + $0x8] sm:$0xf]
          %v1052 = vadd.f32 %v1050, %v1048
          %v1053 = vadd.f32 %v1051, %v1049
          %1054 = vst [vmem:[#allocation2] sm:$0xff] %v1052
          %1055 = vst [vmem:[#allocation2 + $0x8] sm:$0xf] %v1053
          %v1056 = vld [vmem:[%s719 + $0x18] sm:$0xff]
          %v1057 = vld [vmem:[%s719 + $0x50] sm:$0xf]
          %v1058 = vld [vmem:[%s843 + $0x3] sm:$0x1]
          %v1060 = vlaneseq
          %v1061 = vshrl.u32 %v1060, 7
          %v1062 = vsub.s32 0, %v1061
          %v1063 = vrot.slane %v1058, %v1062
          %v1065 = vmul.f32 %v1056, %v1063
          %v1066 = vmul.f32 %v1057, %v1063
          %s1067 = sadd.s32 %s979, 384
          %v1068 = vstv %s1067
          %v1069 = vadd.s32 %v1068, %v981
          %vm1070 = vcmp.lt.s32.totalorder %v1069, 960
          %v1071 = vsel %vm1070, 1, 0
          %vm1072 = vcmp.eq.s32.totalorder %v1071, 1
          %v1073 = vsel %vm1072, %v1065, 0.0
          %v1074 = vsel %vm1072, %v1066, 0.0
          %v1075 = vld [vmem:[#allocation2] sm:$0xff]
          %v1076 = vld [vmem:[#allocation2 + $0x8] sm:$0xf]
          %v1077 = vadd.f32 %v1075, %v1073
          %v1078 = vadd.f32 %v1076, %v1074
          %1079 = vst [vmem:[#allocation2] sm:$0xff] %v1077
          %1080 = vst [vmem:[#allocation2 + $0x8] sm:$0xf] %v1078
          %v1081 = vld [vmem:[%s719 + $0x20] sm:$0xff]
          %v1082 = vld [vmem:[%s719 + $0x58] sm:$0xf]
          %v1083 = vld [vmem:[%s843 + $0x4] sm:$0x1]
          %v1085 = vlaneseq
          %v1086 = vshrl.u32 %v1085, 7
          %v1087 = vsub.s32 0, %v1086
          %v1088 = vrot.slane %v1083, %v1087
          %v1090 = vmul.f32 %v1081, %v1088
          %v1091 = vmul.f32 %v1082, %v1088
          %s1092 = sadd.s32 %s979, 512
          %v1093 = vstv %s1092
          %v1094 = vadd.s32 %v1093, %v981
          %vm1095 = vcmp.lt.s32.totalorder %v1094, 960
          %v1096 = vsel %vm1095, 1, 0
          %vm1097 = vcmp.eq.s32.totalorder %v1096, 1
          %v1098 = vsel %vm1097, %v1090, 0.0
          %v1099 = vsel %vm1097, %v1091, 0.0
          %v1100 = vld [vmem:[#allocation2] sm:$0xff]
          %v1101 = vld [vmem:[#allocation2 + $0x8] sm:$0xf]
          %v1102 = vadd.f32 %v1100, %v1098
          %v1103 = vadd.f32 %v1101, %v1099
          %1104 = vst [vmem:[#allocation2] sm:$0xff] %v1102
          %1105 = vst [vmem:[#allocation2 + $0x8] sm:$0xf] %v1103
          %v1106 = vld [vmem:[%s719 + $0x28] sm:$0xff]
          %v1107 = vld [vmem:[%s719 + $0x60] sm:$0xf]
          %v1108 = vld [vmem:[%s843 + $0x5] sm:$0x1]
          %v1110 = vlaneseq
          %v1111 = vshrl.u32 %v1110, 7
          %v1112 = vsub.s32 0, %v1111
          %v1113 = vrot.slane %v1108, %v1112
          %v1115 = vmul.f32 %v1106, %v1113
          %v1116 = vmul.f32 %v1107, %v1113
          %s1117 = sadd.s32 %s979, 640
          %v1118 = vstv %s1117
          %v1119 = vadd.s32 %v1118, %v981
          %vm1120 = vcmp.lt.s32.totalorder %v1119, 960
          %v1121 = vsel %vm1120, 1, 0
          %vm1122 = vcmp.eq.s32.totalorder %v1121, 1
          %v1123 = vsel %vm1122, %v1115, 0.0
          %v1124 = vsel %vm1122, %v1116, 0.0
          %v1125 = vld [vmem:[#allocation2] sm:$0xff]
          %v1126 = vld [vmem:[#allocation2 + $0x8] sm:$0xf]
          %v1127 = vadd.f32 %v1125, %v1123
          %v1128 = vadd.f32 %v1126, %v1124
          %1129 = vst [vmem:[#allocation2] sm:$0xff] %v1127
          %1130 = vst [vmem:[#allocation2 + $0x8] sm:$0xf] %v1128
          %v1131 = vld [vmem:[%s719 + $0x30] sm:$0xff]
          %v1132 = vld [vmem:[%s719 + $0x68] sm:$0xf]
          %v1133 = vld [vmem:[%s843 + $0x6] sm:$0x1]
          %v1135 = vlaneseq
          %v1136 = vshrl.u32 %v1135, 7
          %v1137 = vsub.s32 0, %v1136
          %v1138 = vrot.slane %v1133, %v1137
          %v1140 = vmul.f32 %v1131, %v1138
          %v1141 = vmul.f32 %v1132, %v1138
          %s1142 = sadd.s32 %s979, 768
          %v1143 = vstv %s1142
          %v1144 = vadd.s32 %v1143, %v981
          %vm1145 = vcmp.lt.s32.totalorder %v1144, 960
          %v1146 = vsel %vm1145, 1, 0
          %vm1147 = vcmp.eq.s32.totalorder %v1146, 1
          %v1148 = vsel %vm1147, %v1140, 0.0
          %v1149 = vsel %vm1147, %v1141, 0.0
          %v1150 = vld [vmem:[#allocation2] sm:$0xff]
          %v1151 = vld [vmem:[#allocation2 + $0x8] sm:$0xf]
          %v1152 = vadd.f32 %v1150, %v1148
          %v1153 = vadd.f32 %v1151, %v1149
          %1154 = vst [vmem:[#allocation2] sm:$0xff] %v1152
          %1155 = vst [vmem:[#allocation2 + $0x8] sm:$0xf] %v1153
        $region114: #{bpnet_forward.6} parent=97 // pred_fallthru
          _
        %p1156 = scmp.eq.s32.totalorder %s22, 2
        // Predicated region
        $region115: #{bpnet_forward.6} parent=97 // pred_check
          %p1157 = pneg %p1156
        $region116: #{bpnet_forward.6} parent=97 // pred_check_branch
          %1159 = sbr.rel (%p1157) target = $region118
        $region117: #{bpnet_forward.6} parent=97 // pred_region
          %v1160 = vld [vmem:[#allocation2] sm:$0xff]
          %v1161 = vld [vmem:[#allocation2 + $0x8] sm:$0xf]
          %1162 = vadd.xlane.f32.xlu0 %v1160
          %v1163 = vpop.xlane.xlu0 %1162
          %vm1164 = vcmask 1043456
          %v1165 = vsel %vm1164, %v1161, 0.0
          %1166 = vadd.xlane.f32.xlu0 %v1165
          %v1167 = vpop.xlane.xlu0 %1166
          %vm1168 = vcmask 7168
          %1169 = vst.msk [vmem:[%s860] sm:$0xff] %vm1168, %v1163
          %vm1170 = vcmask 3072
          %1171 = vst.msk [vmem:[%s860 + $0x8] sm:$0xf] %vm1170, %v1167
        $region118: #{bpnet_forward.6} parent=97 // pred_fallthru
          _
        %s1172 = smul.u32 2, %s21
        %p1173 = scmp.lt.s32.totalorder %s20, 1
        %s1174 = scalar_select %p1173, %s20, 1
        %p1175 = scmp.lt.s32.totalorder %s1172, 1
        %s1176 = scalar_select %p1175, %s1172, 1
        %s1177 = smul.addr %s1174, 2
        %s1178 = sadd.s32 %s1176, %s1177
        %s1179 = smul.addr %s1178, 8
        %s1180 = scalar_lea.vmem %s4, %s1179
        // Predicated region
        $region119: #{bpnet_forward.6} parent=97 // pred_check
          %p1181 = pneg %p190
        $region120: #{bpnet_forward.6} parent=97 // pred_check_branch
          %1183 = sbr.rel (%p1181) target = $region122
        $region121: #{bpnet_forward.6} parent=97 // pred_region
          %s1184 = smul.u32 2, %s21
        $region122: #{bpnet_forward.6} parent=97 // pred_fallthru
          _
      $region98: #{bpnet_forward.6} parent=5 // pred_fallthru
        _
      %p1185 = scmp.le.s32.totalorder 2, %s10
      // Predicated region
      $region123: #{bpnet_forward.6} parent=5 // pred_check
        %p1186 = pneg %p1185
      $region124: #{bpnet_forward.6} parent=5 // pred_check_branch
        %1188 = sbr.rel (%p1186) target = $region126
      $region125: #{bpnet_forward.6} parent=5 // pred_region
        %s1189 = ssub.s32 %s10, 2
        // Predicated region
        $region127: #{bpnet_forward.6} parent=125 // pred_check
          %p1190 = pneg %p196
        $region128: #{bpnet_forward.6} parent=125 // pred_check_branch
          %1192 = sbr.rel (%p1190) target = $region130
        $region129: #{bpnet_forward.6} parent=125 // pred_region
          %s1193 = smul.u32 2, %s24
          %p1194 = scmp.lt.s32.totalorder %s23, 1
          %s1195 = scalar_select %p1194, %s23, 1
          %p1196 = scmp.lt.s32.totalorder %s1193, 1
          %s1197 = scalar_select %p1196, %s1193, 1
          %s1198 = smul.addr %s1195, 2
          %s1199 = sadd.s32 %s1197, %s1198
          %s1200 = smul.addr %s1199, 8
          %s1201 = scalar_lea.vmem %s4, %s1200
        $region130: #{bpnet_forward.6} parent=125 // pred_fallthru
          _
      $region126: #{bpnet_forward.6} parent=5 // pred_fallthru
        _
    $region6: #{bpnet_forward.6} parent=1 // loop_footer
      %s14 = sadd.s32 1, %s10
    $region7: #{bpnet_forward.6} parent=1 // loop_footer_branch
      %9 = sbr.rel target = $region3
    $region8: #{bpnet_forward.6} parent=1 // loop_exit
      _

</llo_original>
